<compile_context>
chip_gen: v7x
topology: tpu7x:2x2x1
jax: 0.10.0
libtpu: 0.0.40
codegen_flags: <defaults>
</compile_context>

<pallas_src>
import functools

import jax
import jax.numpy as jnp
import numpy as np
from jax.experimental import pallas as pl
from jax.experimental.pallas import tpu as pltpu


def _pick_tile(n, candidates):
    """Largest candidate that evenly divides n, else the full extent."""
    for c in candidates:
        if n % c == 0:
            return c
    return n


def _pick_time_chunk(T, Bb, G, bytes_per_elem=4, budget=6 << 20):
    """Largest time chunk whose double-buffered gates_x block fits the budget."""
    for tc in (128, 64, 32, 16, 8):
        if T % tc == 0 and 2 * Bb * tc * G * bytes_per_elem <= budget:
            return tc
    return T


def _reorder_gates(w):
    """Permute PyTorch LSTM gate order (i, f, g, o) -> (i, f, o, g) along dim 0."""
    H = w.shape[0] // 4
    return jnp.concatenate([w[: 2 * H], w[3 * H:], w[2 * H: 3 * H]], axis=0)


# ---------------------------------------------------------------------------
# Phase 1: batched input projection  gates_x = X @ W_ih^T + (b_ih + b_hh)
# ---------------------------------------------------------------------------
def _input_proj_kernel(x_ref, wih_ref, b_ref, gx_ref):
    gx_ref[...] = (
        jnp.dot(x_ref[...], wih_ref[...], preferred_element_type=jnp.float32)
        + b_ref[...]
    )


# ---------------------------------------------------------------------------
# Phase 2: LSTM recurrence over time chunks + fused (padded) classifier
# ---------------------------------------------------------------------------
def _lstm_recurrence_kernel(gx_ref, whh_ref, wcls_ref, bcls_ref, out_ref,
                            h_scr, c_scr, *, hidden, t_chunk):
    tc = pl.program_id(1)
    H = hidden

    @pl.when(tc == 0)
    def _init():
        h_scr[...] = jnp.zeros_like(h_scr)
        c_scr[...] = jnp.zeros_like(c_scr)

    h = h_scr[...]                       # (Bb, H) f32 state
    c = c_scr[...]
    whh = whh_ref[...]                   # (H, 4H) bf16, resident across chunks

    # Static unrolled loop over the time chunk (Tc is a compile-time constant),
    # keeping h/c in vregs; only the hh matmul remains on the serial chain.
    for j in range(t_chunk):
        gates = gx_ref[:, j, :] + jnp.dot(
            h.astype(whh.dtype), whh, preferred_element_type=jnp.float32)
        # Gate order is (i, f, o, g): one contiguous sigmoid slab + one tanh.
        sig = jax.nn.sigmoid(gates[:, 0:3 * H])
        i_g = sig[:, 0:H]
        f_g = sig[:, H:2 * H]
        o_g = sig[:, 2 * H:3 * H]
        g_g = jnp.tanh(gates[:, 3 * H:4 * H])
        c = f_g * c + i_g * g_g
        h = o_g * jnp.tanh(c)

    h_scr[...] = h
    c_scr[...] = c

    @pl.when(tc == pl.num_programs(1) - 1)
    def _finalize():
        # h_n[-1] -> dropout (identity, eval mode) -> classifier (lane-padded)
        out_ref[0] = (
            jnp.dot(h, wcls_ref[...], preferred_element_type=jnp.float32)
            + bcls_ref[...]
        )


@functools.partial(jax.jit, static_argnames=("matmul_dtype", "batch_block"))
def lstm_classifier_forward(sequence_output, w_ih, w_hh, b_ih, b_hh,
                            w_cls, b_cls, *, matmul_dtype=jnp.bfloat16,
                            batch_block=None):
    """sequence_output: (B, T, 768) float32. Returns logits (B, num_labels)."""
    B, T, D = sequence_output.shape
    H = w_hh.shape[1]
    G = 4 * H
    num_labels = w_cls.shape[0]
    Lp = max(128, ((num_labels + 127) // 128) * 128)   # lane-dense output pad

    # Weight prep (transposing / permuting the small weights only, never the
    # activation).  Gate order becomes (i, f, o, g).
    wihT = jnp.transpose(_reorder_gates(w_ih)).astype(matmul_dtype)   # (D, 4H)
    whhT = jnp.transpose(_reorder_gates(w_hh)).astype(matmul_dtype)   # (H, 4H)
    bias = _reorder_gates(b_ih + b_hh).astype(jnp.float32).reshape(1, G)
    wclsT = jnp.zeros((H, Lp), jnp.float32).at[:, :num_labels].set(
        jnp.transpose(w_cls).astype(jnp.float32))                     # (H, Lp)
    bclsP = jnp.zeros((1, Lp), jnp.float32).at[:, :num_labels].set(
        b_cls.astype(jnp.float32).reshape(1, num_labels))             # (1, Lp)

    # ---- Phase 1: one big (B*T, D) x (D, 4H) matmul ----
    BT = B * T
    x_flat = sequence_output.reshape(BT, D).astype(matmul_dtype)
    tm = _pick_tile(BT, (512, 256, 128, 64, 32, 16, 8))
    gates_x = pl.pallas_call(
        _input_proj_kernel,
        out_shape=jax.ShapeDtypeStruct((BT, G), jnp.float32),
        grid_spec=pltpu.PrefetchScalarGridSpec(
            num_scalar_prefetch=0,
            grid=(BT // tm,),
            in_specs=[
                pl.BlockSpec((tm, D), lambda r: (r, 0)),
                pl.BlockSpec((D, G), lambda r: (0, 0)),
                pl.BlockSpec((1, G), lambda r: (0, 0)),
            ],
            out_specs=pl.BlockSpec((tm, G), lambda r: (r, 0)),
        ),
        compiler_params=pltpu.CompilerParams(
            dimension_semantics=("parallel",)),
    )(x_flat, wihT, bias)
    gates_x = gates_x.reshape(B, T, G)          # batch-first, free reshape

    # ---- Phase 2: recurrence over time chunks, batch axis parallel ----
    Bb = B if batch_block is None else batch_block
    assert B % Bb == 0, "batch_block must divide B"
    nb = B // Bb
    Tc = _pick_time_chunk(T, Bb, G)
    nt = T // Tc

    kernel = functools.partial(_lstm_recurrence_kernel, hidden=H, t_chunk=Tc)
    out = pl.pallas_call(
        kernel,
        out_shape=jax.ShapeDtypeStruct((nb, Bb, Lp), jnp.float32),
        grid_spec=pltpu.PrefetchScalarGridSpec(
            num_scalar_prefetch=0,
            grid=(nb, nt),
            in_specs=[
                pl.BlockSpec((Bb, Tc, G), lambda bi, tc: (bi, tc, 0)),  # gates_x
                pl.BlockSpec((H, G), lambda bi, tc: (0, 0)),            # W_hh^T
                pl.BlockSpec((H, Lp), lambda bi, tc: (0, 0)),           # W_cls^T
                pl.BlockSpec((1, Lp), lambda bi, tc: (0, 0)),           # b_cls
            ],
            out_specs=pl.BlockSpec((1, Bb, Lp), lambda bi, tc: (bi, 0, 0)),
            scratch_shapes=[
                pltpu.VMEM((Bb, H), jnp.float32),   # h state
                pltpu.VMEM((Bb, H), jnp.float32),   # c state
            ],
        ),
        compiler_params=pltpu.CompilerParams(
            dimension_semantics=("parallel", "arbitrary")),
    )(gates_x, whhT, wclsT, bclsP)

    return out.reshape(B, Lp)[:, :num_labels]


def reference_forward(sequence_output, w_ih, w_hh, b_ih, b_hh, w_cls, b_cls,
                      matmul_dtype=jnp.float32):
    """Pure-JAX reference mirroring torch.nn.LSTM + Linear (eval mode).

    Uses the original PyTorch (i, f, g, o) gate order, so it also validates the
    wrapper-side gate permutation.  With matmul_dtype=float32 this is the exact
    PyTorch-equivalent math; with bfloat16 it mirrors the kernel's bf16-operand
    / f32-accumulate numerics.
    """
    B, T, D = sequence_output.shape
    H = w_hh.shape[1]
    wihT = jnp.transpose(w_ih).astype(matmul_dtype)
    whhT = jnp.transpose(w_hh).astype(matmul_dtype)
    bias = (b_ih + b_hh).reshape(1, 4 * H)
    gx = (jnp.dot(sequence_output.reshape(B * T, D).astype(matmul_dtype), wihT,
                  preferred_element_type=jnp.float32).reshape(B, T, 4 * H)
          + bias)

    def step(carry, g_x):
        h, c = carry
        gates = g_x + jnp.dot(h.astype(matmul_dtype), whhT,
                              preferred_element_type=jnp.float32)
        i = jax.nn.sigmoid(gates[:, 0:H])
        f = jax.nn.sigmoid(gates[:, H:2 * H])
        g = jnp.tanh(gates[:, 2 * H:3 * H])
        o = jax.nn.sigmoid(gates[:, 3 * H:4 * H])
        c = f * c + i * g
        h = o * jnp.tanh(c)
        return (h, c), None

    h0 = jnp.zeros((B, H), jnp.float32)
    c0 = jnp.zeros((B, H), jnp.float32)
    (h_n, _), _ = jax.lax.scan(step, (h0, c0), jnp.transpose(gx, (1, 0, 2)))
    return h_n @ w_cls.T + b_cls


if __name__ == "__main__":
    # input_size=768 and hidden_size=256 are fixed by the module; batch/seq/
    # num_labels kept small.
    B, T, D, H, num_labels = 2, 8, 768, 256, 4

    key = jax.random.PRNGKey(0)
    ks = jax.random.split(key, 7)
    scale = 1.0 / np.sqrt(H)          # PyTorch LSTM / Linear default init range

    sequence_output = jax.random.normal(ks[0], (B, T, D), jnp.float32)
    w_ih = jax.random.uniform(ks[1], (4 * H, D), jnp.float32, -scale, scale)
    w_hh = jax.random.uniform(ks[2], (4 * H, H), jnp.float32, -scale, scale)
    b_ih = jax.random.uniform(ks[3], (4 * H,), jnp.float32, -scale, scale)
    b_hh = jax.random.uniform(ks[4], (4 * H,), jnp.float32, -scale, scale)
    w_cls = jax.random.uniform(ks[5], (num_labels, H), jnp.float32, -scale, scale)
    b_cls = jax.random.uniform(ks[6], (num_labels,), jnp.float32, -scale, scale)

    logits = lstm_classifier_forward(sequence_output, w_ih, w_hh, b_ih, b_hh,
                                     w_cls, b_cls)
    logits = jax.block_until_ready(logits)

    # Numerics-matched reference (same bf16 operands / f32 accumulation).
    ref_bf16 = reference_forward(sequence_output, w_ih, w_hh, b_ih, b_hh,
                                 w_cls, b_cls, matmul_dtype=jnp.bfloat16)
    np.testing.assert_allclose(np.asarray(logits), np.asarray(ref_bf16),
                               rtol=5e-3, atol=5e-3)

    # Full-f32 PyTorch-equivalent reference (loose tol covers bf16 rounding).
    ref_f32 = reference_forward(sequence_output, w_ih, w_hh, b_ih, b_hh,
                                w_cls, b_cls, matmul_dtype=jnp.float32)
    np.testing.assert_allclose(np.asarray(logits), np.asarray(ref_f32),
                               rtol=1e-1, atol=1e-1)

    # Exercise the batch-tiled path (v7x: 2 TensorCores each take a batch shard).
    logits_bb1 = lstm_classifier_forward(sequence_output, w_ih, w_hh, b_ih,
                                         b_hh, w_cls, b_cls, batch_block=1)
    logits_bb1 = jax.block_until_ready(logits_bb1)
    np.testing.assert_allclose(np.asarray(logits_bb1), np.asarray(ref_bf16),
                               rtol=5e-3, atol=5e-3)

    print("KERNEL_OK")
</pallas_src>

<mosaic_0001>
module attributes {stable_mosaic.version = 11 : i64} {
  func.func @_input_proj_kernel(%arg0: i32, %arg1: memref<16x768xbf16, #tpu.memory_space<vmem>>, %arg2: memref<768x1024xbf16, #tpu.memory_space<vmem>>, %arg3: memref<1x1024xf32, #tpu.memory_space<vmem>>, %arg4: memref<16x1024xf32, #tpu.memory_space<vmem>>) attributes {dimension_semantics = [#tpu.dimension_semantics<parallel>], iteration_bounds = array<i64: 1>, scalar_prefetch = 0 : i64, scratch_operands = 0 : i64, tpu.core_type = #tpu.core_type<tc>, window_params = [{transform_indices = @transform_0, window_bounds = array<i64: 16, 768>}, {pipeline_mode = #tpu.pipeline_mode<synchronous>, transform_indices = @transform_1, window_bounds = array<i64: 768, 1024>}, {pipeline_mode = #tpu.pipeline_mode<synchronous>, transform_indices = @transform_2, window_bounds = array<i64: 1, 1024>}, {transform_indices = @transform_3, window_bounds = array<i64: 16, 1024>}]} {
    %c0 = arith.constant 0 : index
    %c0_0 = arith.constant 0 : index
    %0 = vector.load %arg1[%c0, %c0_0] : memref<16x768xbf16, #tpu.memory_space<vmem>>, vector<16x768xbf16>
    %c0_1 = arith.constant 0 : index
    %c0_2 = arith.constant 0 : index
    %1 = vector.load %arg2[%c0_1, %c0_2] : memref<768x1024xbf16, #tpu.memory_space<vmem>>, vector<768x1024xbf16>
    %cst = arith.constant dense<0.000000e+00> : vector<16x1024xf32>
    %2 = tpu.matmul %0, %1, %cst {dimension_numbers = #tpu.dot_dimension_numbers<[1], [0], [0], [1], [0, 0, 1, 1], [], []>} : vector<16x768xbf16>, vector<768x1024xbf16>, vector<16x1024xf32> -> vector<16x1024xf32>
    %c0_3 = arith.constant 0 : index
    %c0_4 = arith.constant 0 : index
    %3 = vector.load %arg3[%c0_3, %c0_4] : memref<1x1024xf32, #tpu.memory_space<vmem>>, vector<1x1024xf32>
    %4 = vector.broadcast %3 : vector<1x1024xf32> to vector<16x1024xf32>
    %5 = arith.addf %2, %4 : vector<16x1024xf32>
    %c0_5 = arith.constant 0 : index
    %c0_6 = arith.constant 0 : index
    %6 = vector.load %arg4[%c0_5, %c0_6] : memref<16x1024xf32, #tpu.memory_space<vmem>>, vector<16x1024xf32>
    tpu.vector_store %arg4[%c0_5, %c0_6], %5 {strides = array<i32>} : memref<16x1024xf32, #tpu.memory_space<vmem>>, vector<16x1024xf32>,
    return
  }
  func.func @transform_0(%arg0: i32) -> (i32, i32) {
    %c0_i32 = arith.constant 0 : i32
    %c0_i32_0 = arith.constant 0 : i32
    return %arg0, %c0_i32 : i32, i32
  }
  func.func @transform_1(%arg0: i32) -> (i32, i32) {
    %c0_i32 = arith.constant 0 : i32
    %c0_i32_0 = arith.constant 0 : i32
    %c0_i32_1 = arith.constant 0 : i32
    return %c0_i32, %c0_i32_0 : i32, i32
  }
  func.func @transform_2(%arg0: i32) -> (i32, i32) {
    %c0_i32 = arith.constant 0 : i32
    %c0_i32_0 = arith.constant 0 : i32
    %c0_i32_1 = arith.constant 0 : i32
    return %c0_i32, %c0_i32_0 : i32, i32
  }
  func.func @transform_3(%arg0: i32) -> (i32, i32) {
    %c0_i32 = arith.constant 0 : i32
    %c0_i32_0 = arith.constant 0 : i32
    return %arg0, %c0_i32 : i32, i32
  }
}

module attributes {stable_mosaic.version = 11 : i64} {
  func.func @_lstm_recurrence_kernel(%arg0: i32, %arg1: i32, %arg2: memref<2x8x1024xf32, #tpu.memory_space<vmem>>, %arg3: memref<256x1024xbf16, #tpu.memory_space<vmem>>, %arg4: memref<256x128xf32, #tpu.memory_space<vmem>>, %arg5: memref<1x128xf32, #tpu.memory_space<vmem>>, %arg6: memref<1x2x128xf32, #tpu.memory_space<vmem>>, %arg7: memref<2x256xf32, #tpu.memory_space<vmem>>, %arg8: memref<2x256xf32, #tpu.memory_space<vmem>>) attributes {dimension_semantics = [#tpu.dimension_semantics<parallel>, #tpu.dimension_semantics<arbitrary>], iteration_bounds = array<i64: 1, 1>, scalar_prefetch = 0 : i64, scratch_operands = 2 : i64, tpu.core_type = #tpu.core_type<tc>, window_params = [{transform_indices = @transform_0, window_bounds = array<i64: 2, 8, 1024>}, {pipeline_mode = #tpu.pipeline_mode<synchronous>, transform_indices = @transform_1, window_bounds = array<i64: 256, 1024>}, {pipeline_mode = #tpu.pipeline_mode<synchronous>, transform_indices = @transform_2, window_bounds = array<i64: 256, 128>}, {pipeline_mode = #tpu.pipeline_mode<synchronous>, transform_indices = @transform_3, window_bounds = array<i64: 1, 128>}, {transform_indices = @transform_4, window_bounds = array<i64: 1, 2, 128>}]} {
    %c0_i32 = arith.constant 0 : i32
    %0 = arith.cmpi eq, %arg1, %c0_i32 : i32
    %1 = arith.extui %0 : i1 to i32
    %c0_i32_0 = arith.constant 0 : i32
    %2 = arith.cmpi ne, %1, %c0_i32_0 : i32
    scf.if %2 {
      %cst_44 = arith.constant 0.000000e+00 : f32
      %179 = vector.broadcast %cst_44 : f32 to vector<2x256xf32>
      %c0_45 = arith.constant 0 : index
      %c0_46 = arith.constant 0 : index
      %180 = vector.load %arg7[%c0_45, %c0_46] : memref<2x256xf32, #tpu.memory_space<vmem>>, vector<2x256xf32>
      tpu.vector_store %arg7[%c0_45, %c0_46], %179 {strides = array<i32>} : memref<2x256xf32, #tpu.memory_space<vmem>>, vector<2x256xf32>,
      %cst_47 = arith.constant 0.000000e+00 : f32
      %181 = vector.broadcast %cst_47 : f32 to vector<2x256xf32>
      %c0_48 = arith.constant 0 : index
      %c0_49 = arith.constant 0 : index
      %182 = vector.load %arg8[%c0_48, %c0_49] : memref<2x256xf32, #tpu.memory_space<vmem>>, vector<2x256xf32>
      tpu.vector_store %arg8[%c0_48, %c0_49], %181 {strides = array<i32>} : memref<2x256xf32, #tpu.memory_space<vmem>>, vector<2x256xf32>,
    } else {
    }
    %c0 = arith.constant 0 : index
    %c0_1 = arith.constant 0 : index
    %3 = vector.load %arg7[%c0, %c0_1] : memref<2x256xf32, #tpu.memory_space<vmem>>, vector<2x256xf32>
    %c0_2 = arith.constant 0 : index
    %c0_3 = arith.constant 0 : index
    %4 = vector.load %arg8[%c0_2, %c0_3] : memref<2x256xf32, #tpu.memory_space<vmem>>, vector<2x256xf32>
    %c0_4 = arith.constant 0 : index
    %c0_5 = arith.constant 0 : index
    %5 = vector.load %arg3[%c0_4, %c0_5] : memref<256x1024xbf16, #tpu.memory_space<vmem>>, vector<256x1024xbf16>
    %c0_6 = arith.constant 0 : index
    %c0_7 = arith.constant 0 : index
    %c0_8 = arith.constant 0 : index
    %6 = vector.load %arg2[%c0_6, %c0_7, %c0_8] : memref<2x8x1024xf32, #tpu.memory_space<vmem>>, vector<2x1x1024xf32>
    %7 = vector.shape_cast %6 : vector<2x1x1024xf32> to vector<2x1024xf32>
    %8 = arith.truncf %3 : vector<2x256xf32> to vector<2x256xbf16>
    %cst = arith.constant dense<0.000000e+00> : vector<2x1024xf32>
    %9 = tpu.matmul %8, %5, %cst {dimension_numbers = #tpu.dot_dimension_numbers<[1], [0], [0], [1], [0, 0, 1, 1], [], []>} : vector<2x256xbf16>, vector<256x1024xbf16>, vector<2x1024xf32> -> vector<2x1024xf32>
    %10 = arith.addf %7, %9 : vector<2x1024xf32>
    %11 = vector.extract_strided_slice %10 {offsets = [0, 0], sizes = [2, 768], strides = [1, 1]} : vector<2x1024xf32> to vector<2x768xf32>
    %12 = arith.negf %11 : vector<2x768xf32>
    %13 = math.exp %12 : vector<2x768xf32>
    %cst_9 = arith.constant 1.000000e+00 : f32
    %14 = vector.broadcast %cst_9 : f32 to vector<2x768xf32>
    %15 = arith.addf %14, %13 : vector<2x768xf32>
    %16 = arith.divf %14, %15 : vector<2x768xf32>
    %17 = vector.extract_strided_slice %16 {offsets = [0, 0], sizes = [2, 256], strides = [1, 1]} : vector<2x768xf32> to vector<2x256xf32>
    %18 = vector.extract_strided_slice %16 {offsets = [0, 256], sizes = [2, 256], strides = [1, 1]} : vector<2x768xf32> to vector<2x256xf32>
    %19 = vector.extract_strided_slice %16 {offsets = [0, 512], sizes = [2, 256], strides = [1, 1]} : vector<2x768xf32> to vector<2x256xf32>
    %20 = vector.extract_strided_slice %10 {offsets = [0, 768], sizes = [2, 256], strides = [1, 1]} : vector<2x1024xf32> to vector<2x256xf32>
    %21 = math.tanh %20 : vector<2x256xf32>
    %22 = arith.mulf %18, %4 : vector<2x256xf32>
    %23 = arith.mulf %17, %21 : vector<2x256xf32>
    %24 = arith.addf %22, %23 : vector<2x256xf32>
    %25 = math.tanh %24 : vector<2x256xf32>
    %26 = arith.mulf %19, %25 : vector<2x256xf32>
    %c0_10 = arith.constant 0 : index
    %c1 = arith.constant 1 : index
    %c0_11 = arith.constant 0 : index
    %27 = vector.load %arg2[%c0_10, %c1, %c0_11] : memref<2x8x1024xf32, #tpu.memory_space<vmem>>, vector<2x1x1024xf32>
    %28 = vector.shape_cast %27 : vector<2x1x1024xf32> to vector<2x1024xf32>
    %29 = arith.truncf %26 : vector<2x256xf32> to vector<2x256xbf16>
    %cst_12 = arith.constant dense<0.000000e+00> : vector<2x1024xf32>
    %30 = tpu.matmul %29, %5, %cst_12 {dimension_numbers = #tpu.dot_dimension_numbers<[1], [0], [0], [1], [0, 0, 1, 1], [], []>} : vector<2x256xbf16>, vector<256x1024xbf16>, vector<2x1024xf32> -> vector<2x1024xf32>
    %31 = arith.addf %28, %30 : vector<2x1024xf32>
    %32 = vector.extract_strided_slice %31 {offsets = [0, 0], sizes = [2, 768], strides = [1, 1]} : vector<2x1024xf32> to vector<2x768xf32>
    %33 = arith.negf %32 : vector<2x768xf32>
    %34 = math.exp %33 : vector<2x768xf32>
    %cst_13 = arith.constant 1.000000e+00 : f32
    %35 = vector.broadcast %cst_13 : f32 to vector<2x768xf32>
    %36 = arith.addf %35, %34 : vector<2x768xf32>
    %37 = arith.divf %35, %36 : vector<2x768xf32>
    %38 = vector.extract_strided_slice %37 {offsets = [0, 0], sizes = [2, 256], strides = [1, 1]} : vector<2x768xf32> to vector<2x256xf32>
    %39 = vector.extract_strided_slice %37 {offsets = [0, 256], sizes = [2, 256], strides = [1, 1]} : vector<2x768xf32> to vector<2x256xf32>
    %40 = vector.extract_strided_slice %37 {offsets = [0, 512], sizes = [2, 256], strides = [1, 1]} : vector<2x768xf32> to vector<2x256xf32>
    %41 = vector.extract_strided_slice %31 {offsets = [0, 768], sizes = [2, 256], strides = [1, 1]} : vector<2x1024xf32> to vector<2x256xf32>
    %42 = math.tanh %41 : vector<2x256xf32>
    %43 = arith.mulf %39, %24 : vector<2x256xf32>
    %44 = arith.mulf %38, %42 : vector<2x256xf32>
    %45 = arith.addf %43, %44 : vector<2x256xf32>
    %46 = math.tanh %45 : vector<2x256xf32>
    %47 = arith.mulf %40, %46 : vector<2x256xf32>
    %c0_14 = arith.constant 0 : index
    %c2 = arith.constant 2 : index
    %c0_15 = arith.constant 0 : index
    %48 = vector.load %arg2[%c0_14, %c2, %c0_15] : memref<2x8x1024xf32, #tpu.memory_space<vmem>>, vector<2x1x1024xf32>
    %49 = vector.shape_cast %48 : vector<2x1x1024xf32> to vector<2x1024xf32>
    %50 = arith.truncf %47 : vector<2x256xf32> to vector<2x256xbf16>
    %cst_16 = arith.constant dense<0.000000e+00> : vector<2x1024xf32>
    %51 = tpu.matmul %50, %5, %cst_16 {dimension_numbers = #tpu.dot_dimension_numbers<[1], [0], [0], [1], [0, 0, 1, 1], [], []>} : vector<2x256xbf16>, vector<256x1024xbf16>, vector<2x1024xf32> -> vector<2x1024xf32>
    %52 = arith.addf %49, %51 : vector<2x1024xf32>
    %53 = vector.extract_strided_slice %52 {offsets = [0, 0], sizes = [2, 768], strides = [1, 1]} : vector<2x1024xf32> to vector<2x768xf32>
    %54 = arith.negf %53 : vector<2x768xf32>
    %55 = math.exp %54 : vector<2x768xf32>
    %cst_17 = arith.constant 1.000000e+00 : f32
    %56 = vector.broadcast %cst_17 : f32 to vector<2x768xf32>
    %57 = arith.addf %56, %55 : vector<2x768xf32>
    %58 = arith.divf %56, %57 : vector<2x768xf32>
    %59 = vector.extract_strided_slice %58 {offsets = [0, 0], sizes = [2, 256], strides = [1, 1]} : vector<2x768xf32> to vector<2x256xf32>
    %60 = vector.extract_strided_slice %58 {offsets = [0, 256], sizes = [2, 256], strides = [1, 1]} : vector<2x768xf32> to vector<2x256xf32>
    %61 = vector.extract_strided_slice %58 {offsets = [0, 512], sizes = [2, 256], strides = [1, 1]} : vector<2x768xf32> to vector<2x256xf32>
    %62 = vector.extract_strided_slice %52 {offsets = [0, 768], sizes = [2, 256], strides = [1, 1]} : vector<2x1024xf32> to vector<2x256xf32>
    %63 = math.tanh %62 : vector<2x256xf32>
    %64 = arith.mulf %60, %45 : vector<2x256xf32>
    %65 = arith.mulf %59, %63 : vector<2x256xf32>
    %66 = arith.addf %64, %65 : vector<2x256xf32>
    %67 = math.tanh %66 : vector<2x256xf32>
    %68 = arith.mulf %61, %67 : vector<2x256xf32>
    %c0_18 = arith.constant 0 : index
    %c3 = arith.constant 3 : index
    %c0_19 = arith.constant 0 : index
    %69 = vector.load %arg2[%c0_18, %c3, %c0_19] : memref<2x8x1024xf32, #tpu.memory_space<vmem>>, vector<2x1x1024xf32>
    %70 = vector.shape_cast %69 : vector<2x1x1024xf32> to vector<2x1024xf32>
    %71 = arith.truncf %68 : vector<2x256xf32> to vector<2x256xbf16>
    %cst_20 = arith.constant dense<0.000000e+00> : vector<2x1024xf32>
    %72 = tpu.matmul %71, %5, %cst_20 {dimension_numbers = #tpu.dot_dimension_numbers<[1], [0], [0], [1], [0, 0, 1, 1], [], []>} : vector<2x256xbf16>, vector<256x1024xbf16>, vector<2x1024xf32> -> vector<2x1024xf32>
    %73 = arith.addf %70, %72 : vector<2x1024xf32>
    %74 = vector.extract_strided_slice %73 {offsets = [0, 0], sizes = [2, 768], strides = [1, 1]} : vector<2x1024xf32> to vector<2x768xf32>
    %75 = arith.negf %74 : vector<2x768xf32>
    %76 = math.exp %75 : vector<2x768xf32>
    %cst_21 = arith.constant 1.000000e+00 : f32
    %77 = vector.broadcast %cst_21 : f32 to vector<2x768xf32>
    %78 = arith.addf %77, %76 : vector<2x768xf32>
    %79 = arith.divf %77, %78 : vector<2x768xf32>
    %80 = vector.extract_strided_slice %79 {offsets = [0, 0], sizes = [2, 256], strides = [1, 1]} : vector<2x768xf32> to vector<2x256xf32>
    %81 = vector.extract_strided_slice %79 {offsets = [0, 256], sizes = [2, 256], strides = [1, 1]} : vector<2x768xf32> to vector<2x256xf32>
    %82 = vector.extract_strided_slice %79 {offsets = [0, 512], sizes = [2, 256], strides = [1, 1]} : vector<2x768xf32> to vector<2x256xf32>
    %83 = vector.extract_strided_slice %73 {offsets = [0, 768], sizes = [2, 256], strides = [1, 1]} : vector<2x1024xf32> to vector<2x256xf32>
    %84 = math.tanh %83 : vector<2x256xf32>
    %85 = arith.mulf %81, %66 : vector<2x256xf32>
    %86 = arith.mulf %80, %84 : vector<2x256xf32>
    %87 = arith.addf %85, %86 : vector<2x256xf32>
    %88 = math.tanh %87 : vector<2x256xf32>
    %89 = arith.mulf %82, %88 : vector<2x256xf32>
    %c0_22 = arith.constant 0 : index
    %c4 = arith.constant 4 : index
    %c0_23 = arith.constant 0 : index
    %90 = vector.load %arg2[%c0_22, %c4, %c0_23] : memref<2x8x1024xf32, #tpu.memory_space<vmem>>, vector<2x1x1024xf32>
    %91 = vector.shape_cast %90 : vector<2x1x1024xf32> to vector<2x1024xf32>
    %92 = arith.truncf %89 : vector<2x256xf32> to vector<2x256xbf16>
    %cst_24 = arith.constant dense<0.000000e+00> : vector<2x1024xf32>
    %93 = tpu.matmul %92, %5, %cst_24 {dimension_numbers = #tpu.dot_dimension_numbers<[1], [0], [0], [1], [0, 0, 1, 1], [], []>} : vector<2x256xbf16>, vector<256x1024xbf16>, vector<2x1024xf32> -> vector<2x1024xf32>
    %94 = arith.addf %91, %93 : vector<2x1024xf32>
    %95 = vector.extract_strided_slice %94 {offsets = [0, 0], sizes = [2, 768], strides = [1, 1]} : vector<2x1024xf32> to vector<2x768xf32>
    %96 = arith.negf %95 : vector<2x768xf32>
    %97 = math.exp %96 : vector<2x768xf32>
    %cst_25 = arith.constant 1.000000e+00 : f32
    %98 = vector.broadcast %cst_25 : f32 to vector<2x768xf32>
    %99 = arith.addf %98, %97 : vector<2x768xf32>
    %100 = arith.divf %98, %99 : vector<2x768xf32>
    %101 = vector.extract_strided_slice %100 {offsets = [0, 0], sizes = [2, 256], strides = [1, 1]} : vector<2x768xf32> to vector<2x256xf32>
    %102 = vector.extract_strided_slice %100 {offsets = [0, 256], sizes = [2, 256], strides = [1, 1]} : vector<2x768xf32> to vector<2x256xf32>
    %103 = vector.extract_strided_slice %100 {offsets = [0, 512], sizes = [2, 256], strides = [1, 1]} : vector<2x768xf32> to vector<2x256xf32>
    %104 = vector.extract_strided_slice %94 {offsets = [0, 768], sizes = [2, 256], strides = [1, 1]} : vector<2x1024xf32> to vector<2x256xf32>
    %105 = math.tanh %104 : vector<2x256xf32>
    %106 = arith.mulf %102, %87 : vector<2x256xf32>
    %107 = arith.mulf %101, %105 : vector<2x256xf32>
    %108 = arith.addf %106, %107 : vector<2x256xf32>
    %109 = math.tanh %108 : vector<2x256xf32>
    %110 = arith.mulf %103, %109 : vector<2x256xf32>
    %c0_26 = arith.constant 0 : index
    %c5 = arith.constant 5 : index
    %c0_27 = arith.constant 0 : index
    %111 = vector.load %arg2[%c0_26, %c5, %c0_27] : memref<2x8x1024xf32, #tpu.memory_space<vmem>>, vector<2x1x1024xf32>
    %112 = vector.shape_cast %111 : vector<2x1x1024xf32> to vector<2x1024xf32>
    %113 = arith.truncf %110 : vector<2x256xf32> to vector<2x256xbf16>
    %cst_28 = arith.constant dense<0.000000e+00> : vector<2x1024xf32>
    %114 = tpu.matmul %113, %5, %cst_28 {dimension_numbers = #tpu.dot_dimension_numbers<[1], [0], [0], [1], [0, 0, 1, 1], [], []>} : vector<2x256xbf16>, vector<256x1024xbf16>, vector<2x1024xf32> -> vector<2x1024xf32>
    %115 = arith.addf %112, %114 : vector<2x1024xf32>
    %116 = vector.extract_strided_slice %115 {offsets = [0, 0], sizes = [2, 768], strides = [1, 1]} : vector<2x1024xf32> to vector<2x768xf32>
    %117 = arith.negf %116 : vector<2x768xf32>
    %118 = math.exp %117 : vector<2x768xf32>
    %cst_29 = arith.constant 1.000000e+00 : f32
    %119 = vector.broadcast %cst_29 : f32 to vector<2x768xf32>
    %120 = arith.addf %119, %118 : vector<2x768xf32>
    %121 = arith.divf %119, %120 : vector<2x768xf32>
    %122 = vector.extract_strided_slice %121 {offsets = [0, 0], sizes = [2, 256], strides = [1, 1]} : vector<2x768xf32> to vector<2x256xf32>
    %123 = vector.extract_strided_slice %121 {offsets = [0, 256], sizes = [2, 256], strides = [1, 1]} : vector<2x768xf32> to vector<2x256xf32>
    %124 = vector.extract_strided_slice %121 {offsets = [0, 512], sizes = [2, 256], strides = [1, 1]} : vector<2x768xf32> to vector<2x256xf32>
    %125 = vector.extract_strided_slice %115 {offsets = [0, 768], sizes = [2, 256], strides = [1, 1]} : vector<2x1024xf32> to vector<2x256xf32>
    %126 = math.tanh %125 : vector<2x256xf32>
    %127 = arith.mulf %123, %108 : vector<2x256xf32>
    %128 = arith.mulf %122, %126 : vector<2x256xf32>
    %129 = arith.addf %127, %128 : vector<2x256xf32>
    %130 = math.tanh %129 : vector<2x256xf32>
    %131 = arith.mulf %124, %130 : vector<2x256xf32>
    %c0_30 = arith.constant 0 : index
    %c6 = arith.constant 6 : index
    %c0_31 = arith.constant 0 : index
    %132 = vector.load %arg2[%c0_30, %c6, %c0_31] : memref<2x8x1024xf32, #tpu.memory_space<vmem>>, vector<2x1x1024xf32>
    %133 = vector.shape_cast %132 : vector<2x1x1024xf32> to vector<2x1024xf32>
    %134 = arith.truncf %131 : vector<2x256xf32> to vector<2x256xbf16>
    %cst_32 = arith.constant dense<0.000000e+00> : vector<2x1024xf32>
    %135 = tpu.matmul %134, %5, %cst_32 {dimension_numbers = #tpu.dot_dimension_numbers<[1], [0], [0], [1], [0, 0, 1, 1], [], []>} : vector<2x256xbf16>, vector<256x1024xbf16>, vector<2x1024xf32> -> vector<2x1024xf32>
    %136 = arith.addf %133, %135 : vector<2x1024xf32>
    %137 = vector.extract_strided_slice %136 {offsets = [0, 0], sizes = [2, 768], strides = [1, 1]} : vector<2x1024xf32> to vector<2x768xf32>
    %138 = arith.negf %137 : vector<2x768xf32>
    %139 = math.exp %138 : vector<2x768xf32>
    %cst_33 = arith.constant 1.000000e+00 : f32
    %140 = vector.broadcast %cst_33 : f32 to vector<2x768xf32>
    %141 = arith.addf %140, %139 : vector<2x768xf32>
    %142 = arith.divf %140, %141 : vector<2x768xf32>
    %143 = vector.extract_strided_slice %142 {offsets = [0, 0], sizes = [2, 256], strides = [1, 1]} : vector<2x768xf32> to vector<2x256xf32>
    %144 = vector.extract_strided_slice %142 {offsets = [0, 256], sizes = [2, 256], strides = [1, 1]} : vector<2x768xf32> to vector<2x256xf32>
    %145 = vector.extract_strided_slice %142 {offsets = [0, 512], sizes = [2, 256], strides = [1, 1]} : vector<2x768xf32> to vector<2x256xf32>
    %146 = vector.extract_strided_slice %136 {offsets = [0, 768], sizes = [2, 256], strides = [1, 1]} : vector<2x1024xf32> to vector<2x256xf32>
    %147 = math.tanh %146 : vector<2x256xf32>
    %148 = arith.mulf %144, %129 : vector<2x256xf32>
    %149 = arith.mulf %143, %147 : vector<2x256xf32>
    %150 = arith.addf %148, %149 : vector<2x256xf32>
    %151 = math.tanh %150 : vector<2x256xf32>
    %152 = arith.mulf %145, %151 : vector<2x256xf32>
    %c0_34 = arith.constant 0 : index
    %c7 = arith.constant 7 : index
    %c0_35 = arith.constant 0 : index
    %153 = vector.load %arg2[%c0_34, %c7, %c0_35] : memref<2x8x1024xf32, #tpu.memory_space<vmem>>, vector<2x1x1024xf32>
    %154 = vector.shape_cast %153 : vector<2x1x1024xf32> to vector<2x1024xf32>
    %155 = arith.truncf %152 : vector<2x256xf32> to vector<2x256xbf16>
    %cst_36 = arith.constant dense<0.000000e+00> : vector<2x1024xf32>
    %156 = tpu.matmul %155, %5, %cst_36 {dimension_numbers = #tpu.dot_dimension_numbers<[1], [0], [0], [1], [0, 0, 1, 1], [], []>} : vector<2x256xbf16>, vector<256x1024xbf16>, vector<2x1024xf32> -> vector<2x1024xf32>
    %157 = arith.addf %154, %156 : vector<2x1024xf32>
    %158 = vector.extract_strided_slice %157 {offsets = [0, 0], sizes = [2, 768], strides = [1, 1]} : vector<2x1024xf32> to vector<2x768xf32>
    %159 = arith.negf %158 : vector<2x768xf32>
    %160 = math.exp %159 : vector<2x768xf32>
    %cst_37 = arith.constant 1.000000e+00 : f32
    %161 = vector.broadcast %cst_37 : f32 to vector<2x768xf32>
    %162 = arith.addf %161, %160 : vector<2x768xf32>
    %163 = arith.divf %161, %162 : vector<2x768xf32>
    %164 = vector.extract_strided_slice %163 {offsets = [0, 0], sizes = [2, 256], strides = [1, 1]} : vector<2x768xf32> to vector<2x256xf32>
    %165 = vector.extract_strided_slice %163 {offsets = [0, 256], sizes = [2, 256], strides = [1, 1]} : vector<2x768xf32> to vector<2x256xf32>
    %166 = vector.extract_strided_slice %163 {offsets = [0, 512], sizes = [2, 256], strides = [1, 1]} : vector<2x768xf32> to vector<2x256xf32>
    %167 = vector.extract_strided_slice %157 {offsets = [0, 768], sizes = [2, 256], strides = [1, 1]} : vector<2x1024xf32> to vector<2x256xf32>
    %168 = math.tanh %167 : vector<2x256xf32>
    %169 = arith.mulf %165, %150 : vector<2x256xf32>
    %170 = arith.mulf %164, %168 : vector<2x256xf32>
    %171 = arith.addf %169, %170 : vector<2x256xf32>
    %172 = math.tanh %171 : vector<2x256xf32>
    %173 = arith.mulf %166, %172 : vector<2x256xf32>
    %c0_38 = arith.constant 0 : index
    %c0_39 = arith.constant 0 : index
    %174 = vector.load %arg7[%c0_38, %c0_39] : memref<2x256xf32, #tpu.memory_space<vmem>>, vector<2x256xf32>
    tpu.vector_store %arg7[%c0_38, %c0_39], %173 {strides = array<i32>} : memref<2x256xf32, #tpu.memory_space<vmem>>, vector<2x256xf32>,
    %c0_40 = arith.constant 0 : index
    %c0_41 = arith.constant 0 : index
    %175 = vector.load %arg8[%c0_40, %c0_41] : memref<2x256xf32, #tpu.memory_space<vmem>>, vector<2x256xf32>
    tpu.vector_store %arg8[%c0_40, %c0_41], %171 {strides = array<i32>} : memref<2x256xf32, #tpu.memory_space<vmem>>, vector<2x256xf32>,
    %c0_i32_42 = arith.constant 0 : i32
    %176 = arith.cmpi eq, %arg1, %c0_i32_42 : i32
    %177 = arith.extui %176 : i1 to i32
    %c0_i32_43 = arith.constant 0 : i32
    %178 = arith.cmpi ne, %177, %c0_i32_43 : i32
    scf.if %178 {
      %c0_44 = arith.constant 0 : index
      %c0_45 = arith.constant 0 : index
      %179 = vector.load %arg4[%c0_44, %c0_45] : memref<256x128xf32, #tpu.memory_space<vmem>>, vector<256x128xf32>
      %cst_46 = arith.constant dense<0.000000e+00> : vector<2x128xf32>
      %180 = tpu.matmul %173, %179, %cst_46 {dimension_numbers = #tpu.dot_dimension_numbers<[1], [0], [0], [1], [0, 0, 1, 1], [], []>} : vector<2x256xf32>, vector<256x128xf32>, vector<2x128xf32> -> vector<2x128xf32>
      %c0_47 = arith.constant 0 : index
      %c0_48 = arith.constant 0 : index
      %181 = vector.load %arg5[%c0_47, %c0_48] : memref<1x128xf32, #tpu.memory_space<vmem>>, vector<1x128xf32>
      %182 = vector.broadcast %181 : vector<1x128xf32> to vector<2x128xf32>
      %183 = arith.addf %180, %182 : vector<2x128xf32>
      %c0_49 = arith.constant 0 : index
      %c0_50 = arith.constant 0 : index
      %c0_51 = arith.constant 0 : index
      %184 = vector.load %arg6[%c0_49, %c0_50, %c0_51] : memref<1x2x128xf32, #tpu.memory_space<vmem>>, vector<1x2x128xf32>
      %185 = vector.shape_cast %184 : vector<1x2x128xf32> to vector<2x128xf32>
      %186 = vector.shape_cast %183 : vector<2x128xf32> to vector<1x2x128xf32>
      tpu.vector_store %arg6[%c0_49, %c0_50, %c0_51], %186 {strides = array<i32>} : memref<1x2x128xf32, #tpu.memory_space<vmem>>, vector<1x2x128xf32>,
    } else {
    }
    return
  }
  func.func @transform_0(%arg0: i32, %arg1: i32) -> (i32, i32, i32) {
    %c0_i32 = arith.constant 0 : i32
    %c0_i32_0 = arith.constant 0 : i32
    return %arg0, %arg1, %c0_i32 : i32, i32, i32
  }
  func.func @transform_1(%arg0: i32, %arg1: i32) -> (i32, i32) {
    %c0_i32 = arith.constant 0 : i32
    %c0_i32_0 = arith.constant 0 : i32
    %c0_i32_1 = arith.constant 0 : i32
    return %c0_i32, %c0_i32_0 : i32, i32
  }
  func.func @transform_2(%arg0: i32, %arg1: i32) -> (i32, i32) {
    %c0_i32 = arith.constant 0 : i32
    %c0_i32_0 = arith.constant 0 : i32
    %c0_i32_1 = arith.constant 0 : i32
    return %c0_i32, %c0_i32_0 : i32, i32
  }
  func.func @transform_3(%arg0: i32, %arg1: i32) -> (i32, i32) {
    %c0_i32 = arith.constant 0 : i32
    %c0_i32_0 = arith.constant 0 : i32
    %c0_i32_1 = arith.constant 0 : i32
    return %c0_i32, %c0_i32_0 : i32, i32
  }
  func.func @transform_4(%arg0: i32, %arg1: i32) -> (i32, i32, i32) {
    %c0_i32 = arith.constant 0 : i32
    %c0_i32_0 = arith.constant 0 : i32
    %c0_i32_1 = arith.constant 0 : i32
    return %arg0, %c0_i32, %c0_i32_0 : i32, i32, i32
  }
}

</mosaic_0001>

<llo_original>
// kernel: lstm_classifier_forward.2
$region0: #{lstm_classifier_forward.2}
  #allocation0 [shape = 'u32[]', space=smem, size = 0x4, offset = 0x4, fixed_abs, tag = 'smem constant byte address 0x4 - core index']
  #allocation1 [shape = 'u32[144,128]{1,0:T(1,128)}', space=vmem, size = 0x12000, scoped, tag = 'internal scratch']
  %s0 = inlined_call_operand.vmem [shape: bf16[16,768], index: 0, kind: input, shape index: {}]
  %s1 = inlined_call_operand.vmem [shape: bf16[768,1024], index: 1, kind: input, shape index: {}]
  %s2 = inlined_call_operand.vmem [shape: f32[1,1024], index: 2, kind: input, shape index: {}]
  %s3 = inlined_call_operand.vmem [shape: f32[16,1024], index: 3, kind: output, shape index: {}]
  %s4 = sld [smem:[#allocation0]]
  $region22: #{lstm_classifier_forward.2} parent=0
    _
  %s6 = ssub.s32 1, %s4
  %s7 = scalar_select 0, %s6, %s4
  // Predicated region
  $region2: #{lstm_classifier_forward.2} parent=0 // pred_check
    _
  $region3: #{lstm_classifier_forward.2} parent=0 // pred_check_branch
    %9 = sbr.rel (0) target = $region5
  $region4: #{lstm_classifier_forward.2} parent=0 // pred_region
    _
  $region5: #{lstm_classifier_forward.2} parent=0 // pred_fallthru
    _
  // Predicated region
  $region6: #{lstm_classifier_forward.2} parent=0 // pred_check
    _
  $region7: #{lstm_classifier_forward.2} parent=0 // pred_check_branch
    %11 = sbr.rel (0) target = $region9
  $region8: #{lstm_classifier_forward.2} parent=0 // pred_region
    _
  $region9: #{lstm_classifier_forward.2} parent=0 // pred_fallthru
    _
  // Predicated region
  $region10: #{lstm_classifier_forward.2} parent=0 // pred_check
    _
  $region11: #{lstm_classifier_forward.2} parent=0 // pred_check_branch
    %13 = sbr.rel (0) target = $region13
  $region12: #{lstm_classifier_forward.2} parent=0 // pred_region
    _
  $region13: #{lstm_classifier_forward.2} parent=0 // pred_fallthru
    _
  %v14 = vld [vmem:[%s0] sm:$0xff]
  %v15 = vld [vmem:[%s0 + $0x8] sm:$0xff]
  %v16 = vld [vmem:[%s0 + $0x10] sm:$0xff]
  %v17 = vld [vmem:[%s0 + $0x18] sm:$0xff]
  %v18 = vld [vmem:[%s0 + $0x20] sm:$0xff]
  %v19 = vld [vmem:[%s0 + $0x28] sm:$0xff]
  %v20 = vld [vmem:[%s1] sm:$0xff]
  %v21 = vld [vmem:[%s1 + $0x8] sm:$0xff]
  %v22 = vld [vmem:[%s1 + $0x10] sm:$0xff]
  %v23 = vld [vmem:[%s1 + $0x18] sm:$0xff]
  %v24 = vld [vmem:[%s1 + $0x20] sm:$0xff]
  %v25 = vld [vmem:[%s1 + $0x28] sm:$0xff]
  %v26 = vld [vmem:[%s1 + $0x30] sm:$0xff]
  %v27 = vld [vmem:[%s1 + $0x38] sm:$0xff]
  %v28 = vld [vmem:[%s1 + $0x40] sm:$0xff]
  %v29 = vld [vmem:[%s1 + $0x48] sm:$0xff]
  %v30 = vld [vmem:[%s1 + $0x50] sm:$0xff]
  %v31 = vld [vmem:[%s1 + $0x58] sm:$0xff]
  %v32 = vld [vmem:[%s1 + $0x60] sm:$0xff]
  %v33 = vld [vmem:[%s1 + $0x68] sm:$0xff]
  %v34 = vld [vmem:[%s1 + $0x70] sm:$0xff]
  %v35 = vld [vmem:[%s1 + $0x78] sm:$0xff]
  %v36 = vld [vmem:[%s1 + $0x80] sm:$0xff]
  %v37 = vld [vmem:[%s1 + $0x88] sm:$0xff]
  %v38 = vld [vmem:[%s1 + $0x90] sm:$0xff]
  %v39 = vld [vmem:[%s1 + $0x98] sm:$0xff]
  %v40 = vld [vmem:[%s1 + $0xa0] sm:$0xff]
  %v41 = vld [vmem:[%s1 + $0xa8] sm:$0xff]
  %v42 = vld [vmem:[%s1 + $0xb0] sm:$0xff]
  %v43 = vld [vmem:[%s1 + $0xb8] sm:$0xff]
  %v44 = vld [vmem:[%s1 + $0xc0] sm:$0xff]
  %v45 = vld [vmem:[%s1 + $0xc8] sm:$0xff]
  %v46 = vld [vmem:[%s1 + $0xd0] sm:$0xff]
  %v47 = vld [vmem:[%s1 + $0xd8] sm:$0xff]
  %v48 = vld [vmem:[%s1 + $0xe0] sm:$0xff]
  %v49 = vld [vmem:[%s1 + $0xe8] sm:$0xff]
  %v50 = vld [vmem:[%s1 + $0xf0] sm:$0xff]
  %v51 = vld [vmem:[%s1 + $0xf8] sm:$0xff]
  %v52 = vld [vmem:[%s1 + $0x100] sm:$0xff]
  %v53 = vld [vmem:[%s1 + $0x108] sm:$0xff]
  %v54 = vld [vmem:[%s1 + $0x110] sm:$0xff]
  %v55 = vld [vmem:[%s1 + $0x118] sm:$0xff]
  %v56 = vld [vmem:[%s1 + $0x120] sm:$0xff]
  %v57 = vld [vmem:[%s1 + $0x128] sm:$0xff]
  %v58 = vld [vmem:[%s1 + $0x130] sm:$0xff]
  %v59 = vld [vmem:[%s1 + $0x138] sm:$0xff]
  %v60 = vld [vmem:[%s1 + $0x140] sm:$0xff]
  %v61 = vld [vmem:[%s1 + $0x148] sm:$0xff]
  %v62 = vld [vmem:[%s1 + $0x150] sm:$0xff]
  %v63 = vld [vmem:[%s1 + $0x158] sm:$0xff]
  %v64 = vld [vmem:[%s1 + $0x160] sm:$0xff]
  %v65 = vld [vmem:[%s1 + $0x168] sm:$0xff]
  %v66 = vld [vmem:[%s1 + $0x170] sm:$0xff]
  %v67 = vld [vmem:[%s1 + $0x178] sm:$0xff]
  %v68 = vld [vmem:[%s1 + $0x180] sm:$0xff]
  %v69 = vld [vmem:[%s1 + $0x188] sm:$0xff]
  %v70 = vld [vmem:[%s1 + $0x190] sm:$0xff]
  %v71 = vld [vmem:[%s1 + $0x198] sm:$0xff]
  %v72 = vld [vmem:[%s1 + $0x1a0] sm:$0xff]
  %v73 = vld [vmem:[%s1 + $0x1a8] sm:$0xff]
  %v74 = vld [vmem:[%s1 + $0x1b0] sm:$0xff]
  %v75 = vld [vmem:[%s1 + $0x1b8] sm:$0xff]
  %v76 = vld [vmem:[%s1 + $0x1c0] sm:$0xff]
  %v77 = vld [vmem:[%s1 + $0x1c8] sm:$0xff]
  %v78 = vld [vmem:[%s1 + $0x1d0] sm:$0xff]
  %v79 = vld [vmem:[%s1 + $0x1d8] sm:$0xff]
  %v80 = vld [vmem:[%s1 + $0x1e0] sm:$0xff]
  %v81 = vld [vmem:[%s1 + $0x1e8] sm:$0xff]
  %v82 = vld [vmem:[%s1 + $0x1f0] sm:$0xff]
  %v83 = vld [vmem:[%s1 + $0x1f8] sm:$0xff]
  %v84 = vld [vmem:[%s1 + $0x200] sm:$0xff]
  %v85 = vld [vmem:[%s1 + $0x208] sm:$0xff]
  %v86 = vld [vmem:[%s1 + $0x210] sm:$0xff]
  %v87 = vld [vmem:[%s1 + $0x218] sm:$0xff]
  %v88 = vld [vmem:[%s1 + $0x220] sm:$0xff]
  %v89 = vld [vmem:[%s1 + $0x228] sm:$0xff]
  %v90 = vld [vmem:[%s1 + $0x230] sm:$0xff]
  %v91 = vld [vmem:[%s1 + $0x238] sm:$0xff]
  %v92 = vld [vmem:[%s1 + $0x240] sm:$0xff]
  %v93 = vld [vmem:[%s1 + $0x248] sm:$0xff]
  %v94 = vld [vmem:[%s1 + $0x250] sm:$0xff]
  %v95 = vld [vmem:[%s1 + $0x258] sm:$0xff]
  %v96 = vld [vmem:[%s1 + $0x260] sm:$0xff]
  %v97 = vld [vmem:[%s1 + $0x268] sm:$0xff]
  %v98 = vld [vmem:[%s1 + $0x270] sm:$0xff]
  %v99 = vld [vmem:[%s1 + $0x278] sm:$0xff]
  %v100 = vld [vmem:[%s1 + $0x280] sm:$0xff]
  %v101 = vld [vmem:[%s1 + $0x288] sm:$0xff]
  %v102 = vld [vmem:[%s1 + $0x290] sm:$0xff]
  %v103 = vld [vmem:[%s1 + $0x298] sm:$0xff]
  %v104 = vld [vmem:[%s1 + $0x2a0] sm:$0xff]
  %v105 = vld [vmem:[%s1 + $0x2a8] sm:$0xff]
  %v106 = vld [vmem:[%s1 + $0x2b0] sm:$0xff]
  %v107 = vld [vmem:[%s1 + $0x2b8] sm:$0xff]
  %v108 = vld [vmem:[%s1 + $0x2c0] sm:$0xff]
  %v109 = vld [vmem:[%s1 + $0x2c8] sm:$0xff]
  %v110 = vld [vmem:[%s1 + $0x2d0] sm:$0xff]
  %v111 = vld [vmem:[%s1 + $0x2d8] sm:$0xff]
  %v112 = vld [vmem:[%s1 + $0x2e0] sm:$0xff]
  %v113 = vld [vmem:[%s1 + $0x2e8] sm:$0xff]
  %v114 = vld [vmem:[%s1 + $0x2f0] sm:$0xff]
  %v115 = vld [vmem:[%s1 + $0x2f8] sm:$0xff]
  %v116 = vld [vmem:[%s1 + $0x300] sm:$0xff]
  %v117 = vld [vmem:[%s1 + $0x308] sm:$0xff]
  %v118 = vld [vmem:[%s1 + $0x310] sm:$0xff]
  %v119 = vld [vmem:[%s1 + $0x318] sm:$0xff]
  %v120 = vld [vmem:[%s1 + $0x320] sm:$0xff]
  %v121 = vld [vmem:[%s1 + $0x328] sm:$0xff]
  %v122 = vld [vmem:[%s1 + $0x330] sm:$0xff]
  %v123 = vld [vmem:[%s1 + $0x338] sm:$0xff]
  %v124 = vld [vmem:[%s1 + $0x340] sm:$0xff]
  %v125 = vld [vmem:[%s1 + $0x348] sm:$0xff]
  %v126 = vld [vmem:[%s1 + $0x350] sm:$0xff]
  %v127 = vld [vmem:[%s1 + $0x358] sm:$0xff]
  %v128 = vld [vmem:[%s1 + $0x360] sm:$0xff]
  %v129 = vld [vmem:[%s1 + $0x368] sm:$0xff]
  %v130 = vld [vmem:[%s1 + $0x370] sm:$0xff]
  %v131 = vld [vmem:[%s1 + $0x378] sm:$0xff]
  %v132 = vld [vmem:[%s1 + $0x380] sm:$0xff]
  %v133 = vld [vmem:[%s1 + $0x388] sm:$0xff]
  %v134 = vld [vmem:[%s1 + $0x390] sm:$0xff]
  %v135 = vld [vmem:[%s1 + $0x398] sm:$0xff]
  %v136 = vld [vmem:[%s1 + $0x3a0] sm:$0xff]
  %v137 = vld [vmem:[%s1 + $0x3a8] sm:$0xff]
  %v138 = vld [vmem:[%s1 + $0x3b0] sm:$0xff]
  %v139 = vld [vmem:[%s1 + $0x3b8] sm:$0xff]
  %v140 = vld [vmem:[%s1 + $0x3c0] sm:$0xff]
  %v141 = vld [vmem:[%s1 + $0x3c8] sm:$0xff]
  %v142 = vld [vmem:[%s1 + $0x3d0] sm:$0xff]
  %v143 = vld [vmem:[%s1 + $0x3d8] sm:$0xff]
  %v144 = vld [vmem:[%s1 + $0x3e0] sm:$0xff]
  %v145 = vld [vmem:[%s1 + $0x3e8] sm:$0xff]
  %v146 = vld [vmem:[%s1 + $0x3f0] sm:$0xff]
  %v147 = vld [vmem:[%s1 + $0x3f8] sm:$0xff]
  %v148 = vld [vmem:[%s1 + $0x400] sm:$0xff]
  %v149 = vld [vmem:[%s1 + $0x408] sm:$0xff]
  %v150 = vld [vmem:[%s1 + $0x410] sm:$0xff]
  %v151 = vld [vmem:[%s1 + $0x418] sm:$0xff]
  %v152 = vld [vmem:[%s1 + $0x420] sm:$0xff]
  %v153 = vld [vmem:[%s1 + $0x428] sm:$0xff]
  %v154 = vld [vmem:[%s1 + $0x430] sm:$0xff]
  %v155 = vld [vmem:[%s1 + $0x438] sm:$0xff]
  %v156 = vld [vmem:[%s1 + $0x440] sm:$0xff]
  %v157 = vld [vmem:[%s1 + $0x448] sm:$0xff]
  %v158 = vld [vmem:[%s1 + $0x450] sm:$0xff]
  %v159 = vld [vmem:[%s1 + $0x458] sm:$0xff]
  %v160 = vld [vmem:[%s1 + $0x460] sm:$0xff]
  %v161 = vld [vmem:[%s1 + $0x468] sm:$0xff]
  %v162 = vld [vmem:[%s1 + $0x470] sm:$0xff]
  %v163 = vld [vmem:[%s1 + $0x478] sm:$0xff]
  %v164 = vld [vmem:[%s1 + $0x480] sm:$0xff]
  %v165 = vld [vmem:[%s1 + $0x488] sm:$0xff]
  %v166 = vld [vmem:[%s1 + $0x490] sm:$0xff]
  %v167 = vld [vmem:[%s1 + $0x498] sm:$0xff]
  %v168 = vld [vmem:[%s1 + $0x4a0] sm:$0xff]
  %v169 = vld [vmem:[%s1 + $0x4a8] sm:$0xff]
  %v170 = vld [vmem:[%s1 + $0x4b0] sm:$0xff]
  %v171 = vld [vmem:[%s1 + $0x4b8] sm:$0xff]
  %v172 = vld [vmem:[%s1 + $0x4c0] sm:$0xff]
  %v173 = vld [vmem:[%s1 + $0x4c8] sm:$0xff]
  %v174 = vld [vmem:[%s1 + $0x4d0] sm:$0xff]
  %v175 = vld [vmem:[%s1 + $0x4d8] sm:$0xff]
  %v176 = vld [vmem:[%s1 + $0x4e0] sm:$0xff]
  %v177 = vld [vmem:[%s1 + $0x4e8] sm:$0xff]
  %v178 = vld [vmem:[%s1 + $0x4f0] sm:$0xff]
  %v179 = vld [vmem:[%s1 + $0x4f8] sm:$0xff]
  %v180 = vld [vmem:[%s1 + $0x500] sm:$0xff]
  %v181 = vld [vmem:[%s1 + $0x508] sm:$0xff]
  %v182 = vld [vmem:[%s1 + $0x510] sm:$0xff]
  %v183 = vld [vmem:[%s1 + $0x518] sm:$0xff]
  %v184 = vld [vmem:[%s1 + $0x520] sm:$0xff]
  %v185 = vld [vmem:[%s1 + $0x528] sm:$0xff]
  %v186 = vld [vmem:[%s1 + $0x530] sm:$0xff]
  %v187 = vld [vmem:[%s1 + $0x538] sm:$0xff]
  %v188 = vld [vmem:[%s1 + $0x540] sm:$0xff]
  %v189 = vld [vmem:[%s1 + $0x548] sm:$0xff]
  %v190 = vld [vmem:[%s1 + $0x550] sm:$0xff]
  %v191 = vld [vmem:[%s1 + $0x558] sm:$0xff]
  %v192 = vld [vmem:[%s1 + $0x560] sm:$0xff]
  %v193 = vld [vmem:[%s1 + $0x568] sm:$0xff]
  %v194 = vld [vmem:[%s1 + $0x570] sm:$0xff]
  %v195 = vld [vmem:[%s1 + $0x578] sm:$0xff]
  %v196 = vld [vmem:[%s1 + $0x580] sm:$0xff]
  %v197 = vld [vmem:[%s1 + $0x588] sm:$0xff]
  %v198 = vld [vmem:[%s1 + $0x590] sm:$0xff]
  %v199 = vld [vmem:[%s1 + $0x598] sm:$0xff]
  %v200 = vld [vmem:[%s1 + $0x5a0] sm:$0xff]
  %v201 = vld [vmem:[%s1 + $0x5a8] sm:$0xff]
  %v202 = vld [vmem:[%s1 + $0x5b0] sm:$0xff]
  %v203 = vld [vmem:[%s1 + $0x5b8] sm:$0xff]
  %v204 = vld [vmem:[%s1 + $0x5c0] sm:$0xff]
  %v205 = vld [vmem:[%s1 + $0x5c8] sm:$0xff]
  %v206 = vld [vmem:[%s1 + $0x5d0] sm:$0xff]
  %v207 = vld [vmem:[%s1 + $0x5d8] sm:$0xff]
  %v208 = vld [vmem:[%s1 + $0x5e0] sm:$0xff]
  %v209 = vld [vmem:[%s1 + $0x5e8] sm:$0xff]
  %v210 = vld [vmem:[%s1 + $0x5f0] sm:$0xff]
  %v211 = vld [vmem:[%s1 + $0x5f8] sm:$0xff]
  %v212 = vld [vmem:[%s1 + $0x600] sm:$0xff]
  %v213 = vld [vmem:[%s1 + $0x608] sm:$0xff]
  %v214 = vld [vmem:[%s1 + $0x610] sm:$0xff]
  %v215 = vld [vmem:[%s1 + $0x618] sm:$0xff]
  %v216 = vld [vmem:[%s1 + $0x620] sm:$0xff]
  %v217 = vld [vmem:[%s1 + $0x628] sm:$0xff]
  %v218 = vld [vmem:[%s1 + $0x630] sm:$0xff]
  %v219 = vld [vmem:[%s1 + $0x638] sm:$0xff]
  %v220 = vld [vmem:[%s1 + $0x640] sm:$0xff]
  %v221 = vld [vmem:[%s1 + $0x648] sm:$0xff]
  %v222 = vld [vmem:[%s1 + $0x650] sm:$0xff]
  %v223 = vld [vmem:[%s1 + $0x658] sm:$0xff]
  %v224 = vld [vmem:[%s1 + $0x660] sm:$0xff]
  %v225 = vld [vmem:[%s1 + $0x668] sm:$0xff]
  %v226 = vld [vmem:[%s1 + $0x670] sm:$0xff]
  %v227 = vld [vmem:[%s1 + $0x678] sm:$0xff]
  %v228 = vld [vmem:[%s1 + $0x680] sm:$0xff]
  %v229 = vld [vmem:[%s1 + $0x688] sm:$0xff]
  %v230 = vld [vmem:[%s1 + $0x690] sm:$0xff]
  %v231 = vld [vmem:[%s1 + $0x698] sm:$0xff]
  %v232 = vld [vmem:[%s1 + $0x6a0] sm:$0xff]
  %v233 = vld [vmem:[%s1 + $0x6a8] sm:$0xff]
  %v234 = vld [vmem:[%s1 + $0x6b0] sm:$0xff]
  %v235 = vld [vmem:[%s1 + $0x6b8] sm:$0xff]
  %v236 = vld [vmem:[%s1 + $0x6c0] sm:$0xff]
  %v237 = vld [vmem:[%s1 + $0x6c8] sm:$0xff]
  %v238 = vld [vmem:[%s1 + $0x6d0] sm:$0xff]
  %v239 = vld [vmem:[%s1 + $0x6d8] sm:$0xff]
  %v240 = vld [vmem:[%s1 + $0x6e0] sm:$0xff]
  %v241 = vld [vmem:[%s1 + $0x6e8] sm:$0xff]
  %v242 = vld [vmem:[%s1 + $0x6f0] sm:$0xff]
  %v243 = vld [vmem:[%s1 + $0x6f8] sm:$0xff]
  %v244 = vld [vmem:[%s1 + $0x700] sm:$0xff]
  %v245 = vld [vmem:[%s1 + $0x708] sm:$0xff]
  %v246 = vld [vmem:[%s1 + $0x710] sm:$0xff]
  %v247 = vld [vmem:[%s1 + $0x718] sm:$0xff]
  %v248 = vld [vmem:[%s1 + $0x720] sm:$0xff]
  %v249 = vld [vmem:[%s1 + $0x728] sm:$0xff]
  %v250 = vld [vmem:[%s1 + $0x730] sm:$0xff]
  %v251 = vld [vmem:[%s1 + $0x738] sm:$0xff]
  %v252 = vld [vmem:[%s1 + $0x740] sm:$0xff]
  %v253 = vld [vmem:[%s1 + $0x748] sm:$0xff]
  %v254 = vld [vmem:[%s1 + $0x750] sm:$0xff]
  %v255 = vld [vmem:[%s1 + $0x758] sm:$0xff]
  %v256 = vld [vmem:[%s1 + $0x760] sm:$0xff]
  %v257 = vld [vmem:[%s1 + $0x768] sm:$0xff]
  %v258 = vld [vmem:[%s1 + $0x770] sm:$0xff]
  %v259 = vld [vmem:[%s1 + $0x778] sm:$0xff]
  %v260 = vld [vmem:[%s1 + $0x780] sm:$0xff]
  %v261 = vld [vmem:[%s1 + $0x788] sm:$0xff]
  %v262 = vld [vmem:[%s1 + $0x790] sm:$0xff]
  %v263 = vld [vmem:[%s1 + $0x798] sm:$0xff]
  %v264 = vld [vmem:[%s1 + $0x7a0] sm:$0xff]
  %v265 = vld [vmem:[%s1 + $0x7a8] sm:$0xff]
  %v266 = vld [vmem:[%s1 + $0x7b0] sm:$0xff]
  %v267 = vld [vmem:[%s1 + $0x7b8] sm:$0xff]
  %v268 = vld [vmem:[%s1 + $0x7c0] sm:$0xff]
  %v269 = vld [vmem:[%s1 + $0x7c8] sm:$0xff]
  %v270 = vld [vmem:[%s1 + $0x7d0] sm:$0xff]
  %v271 = vld [vmem:[%s1 + $0x7d8] sm:$0xff]
  %v272 = vld [vmem:[%s1 + $0x7e0] sm:$0xff]
  %v273 = vld [vmem:[%s1 + $0x7e8] sm:$0xff]
  %v274 = vld [vmem:[%s1 + $0x7f0] sm:$0xff]
  %v275 = vld [vmem:[%s1 + $0x7f8] sm:$0xff]
  %v276 = vld [vmem:[%s1 + $0x800] sm:$0xff]
  %v277 = vld [vmem:[%s1 + $0x808] sm:$0xff]
  %v278 = vld [vmem:[%s1 + $0x810] sm:$0xff]
  %v279 = vld [vmem:[%s1 + $0x818] sm:$0xff]
  %v280 = vld [vmem:[%s1 + $0x820] sm:$0xff]
  %v281 = vld [vmem:[%s1 + $0x828] sm:$0xff]
  %v282 = vld [vmem:[%s1 + $0x830] sm:$0xff]
  %v283 = vld [vmem:[%s1 + $0x838] sm:$0xff]
  %v284 = vld [vmem:[%s1 + $0x840] sm:$0xff]
  %v285 = vld [vmem:[%s1 + $0x848] sm:$0xff]
  %v286 = vld [vmem:[%s1 + $0x850] sm:$0xff]
  %v287 = vld [vmem:[%s1 + $0x858] sm:$0xff]
  %v288 = vld [vmem:[%s1 + $0x860] sm:$0xff]
  %v289 = vld [vmem:[%s1 + $0x868] sm:$0xff]
  %v290 = vld [vmem:[%s1 + $0x870] sm:$0xff]
  %v291 = vld [vmem:[%s1 + $0x878] sm:$0xff]
  %v292 = vld [vmem:[%s1 + $0x880] sm:$0xff]
  %v293 = vld [vmem:[%s1 + $0x888] sm:$0xff]
  %v294 = vld [vmem:[%s1 + $0x890] sm:$0xff]
  %v295 = vld [vmem:[%s1 + $0x898] sm:$0xff]
  %v296 = vld [vmem:[%s1 + $0x8a0] sm:$0xff]
  %v297 = vld [vmem:[%s1 + $0x8a8] sm:$0xff]
  %v298 = vld [vmem:[%s1 + $0x8b0] sm:$0xff]
  %v299 = vld [vmem:[%s1 + $0x8b8] sm:$0xff]
  %v300 = vld [vmem:[%s1 + $0x8c0] sm:$0xff]
  %v301 = vld [vmem:[%s1 + $0x8c8] sm:$0xff]
  %v302 = vld [vmem:[%s1 + $0x8d0] sm:$0xff]
  %v303 = vld [vmem:[%s1 + $0x8d8] sm:$0xff]
  %v304 = vld [vmem:[%s1 + $0x8e0] sm:$0xff]
  %v305 = vld [vmem:[%s1 + $0x8e8] sm:$0xff]
  %v306 = vld [vmem:[%s1 + $0x8f0] sm:$0xff]
  %v307 = vld [vmem:[%s1 + $0x8f8] sm:$0xff]
  %v308 = vld [vmem:[%s1 + $0x900] sm:$0xff]
  %v309 = vld [vmem:[%s1 + $0x908] sm:$0xff]
  %v310 = vld [vmem:[%s1 + $0x910] sm:$0xff]
  %v311 = vld [vmem:[%s1 + $0x918] sm:$0xff]
  %v312 = vld [vmem:[%s1 + $0x920] sm:$0xff]
  %v313 = vld [vmem:[%s1 + $0x928] sm:$0xff]
  %v314 = vld [vmem:[%s1 + $0x930] sm:$0xff]
  %v315 = vld [vmem:[%s1 + $0x938] sm:$0xff]
  %v316 = vld [vmem:[%s1 + $0x940] sm:$0xff]
  %v317 = vld [vmem:[%s1 + $0x948] sm:$0xff]
  %v318 = vld [vmem:[%s1 + $0x950] sm:$0xff]
  %v319 = vld [vmem:[%s1 + $0x958] sm:$0xff]
  %v320 = vld [vmem:[%s1 + $0x960] sm:$0xff]
  %v321 = vld [vmem:[%s1 + $0x968] sm:$0xff]
  %v322 = vld [vmem:[%s1 + $0x970] sm:$0xff]
  %v323 = vld [vmem:[%s1 + $0x978] sm:$0xff]
  %v324 = vld [vmem:[%s1 + $0x980] sm:$0xff]
  %v325 = vld [vmem:[%s1 + $0x988] sm:$0xff]
  %v326 = vld [vmem:[%s1 + $0x990] sm:$0xff]
  %v327 = vld [vmem:[%s1 + $0x998] sm:$0xff]
  %v328 = vld [vmem:[%s1 + $0x9a0] sm:$0xff]
  %v329 = vld [vmem:[%s1 + $0x9a8] sm:$0xff]
  %v330 = vld [vmem:[%s1 + $0x9b0] sm:$0xff]
  %v331 = vld [vmem:[%s1 + $0x9b8] sm:$0xff]
  %v332 = vld [vmem:[%s1 + $0x9c0] sm:$0xff]
  %v333 = vld [vmem:[%s1 + $0x9c8] sm:$0xff]
  %v334 = vld [vmem:[%s1 + $0x9d0] sm:$0xff]
  %v335 = vld [vmem:[%s1 + $0x9d8] sm:$0xff]
  %v336 = vld [vmem:[%s1 + $0x9e0] sm:$0xff]
  %v337 = vld [vmem:[%s1 + $0x9e8] sm:$0xff]
  %v338 = vld [vmem:[%s1 + $0x9f0] sm:$0xff]
  %v339 = vld [vmem:[%s1 + $0x9f8] sm:$0xff]
  %v340 = vld [vmem:[%s1 + $0xa00] sm:$0xff]
  %v341 = vld [vmem:[%s1 + $0xa08] sm:$0xff]
  %v342 = vld [vmem:[%s1 + $0xa10] sm:$0xff]
  %v343 = vld [vmem:[%s1 + $0xa18] sm:$0xff]
  %v344 = vld [vmem:[%s1 + $0xa20] sm:$0xff]
  %v345 = vld [vmem:[%s1 + $0xa28] sm:$0xff]
  %v346 = vld [vmem:[%s1 + $0xa30] sm:$0xff]
  %v347 = vld [vmem:[%s1 + $0xa38] sm:$0xff]
  %v348 = vld [vmem:[%s1 + $0xa40] sm:$0xff]
  %v349 = vld [vmem:[%s1 + $0xa48] sm:$0xff]
  %v350 = vld [vmem:[%s1 + $0xa50] sm:$0xff]
  %v351 = vld [vmem:[%s1 + $0xa58] sm:$0xff]
  %v352 = vld [vmem:[%s1 + $0xa60] sm:$0xff]
  %v353 = vld [vmem:[%s1 + $0xa68] sm:$0xff]
  %v354 = vld [vmem:[%s1 + $0xa70] sm:$0xff]
  %v355 = vld [vmem:[%s1 + $0xa78] sm:$0xff]
  %v356 = vld [vmem:[%s1 + $0xa80] sm:$0xff]
  %v357 = vld [vmem:[%s1 + $0xa88] sm:$0xff]
  %v358 = vld [vmem:[%s1 + $0xa90] sm:$0xff]
  %v359 = vld [vmem:[%s1 + $0xa98] sm:$0xff]
  %v360 = vld [vmem:[%s1 + $0xaa0] sm:$0xff]
  %v361 = vld [vmem:[%s1 + $0xaa8] sm:$0xff]
  %v362 = vld [vmem:[%s1 + $0xab0] sm:$0xff]
  %v363 = vld [vmem:[%s1 + $0xab8] sm:$0xff]
  %v364 = vld [vmem:[%s1 + $0xac0] sm:$0xff]
  %v365 = vld [vmem:[%s1 + $0xac8] sm:$0xff]
  %v366 = vld [vmem:[%s1 + $0xad0] sm:$0xff]
  %v367 = vld [vmem:[%s1 + $0xad8] sm:$0xff]
  %v368 = vld [vmem:[%s1 + $0xae0] sm:$0xff]
  %v369 = vld [vmem:[%s1 + $0xae8] sm:$0xff]
  %v370 = vld [vmem:[%s1 + $0xaf0] sm:$0xff]
  %v371 = vld [vmem:[%s1 + $0xaf8] sm:$0xff]
  %v372 = vld [vmem:[%s1 + $0xb00] sm:$0xff]
  %v373 = vld [vmem:[%s1 + $0xb08] sm:$0xff]
  %v374 = vld [vmem:[%s1 + $0xb10] sm:$0xff]
  %v375 = vld [vmem:[%s1 + $0xb18] sm:$0xff]
  %v376 = vld [vmem:[%s1 + $0xb20] sm:$0xff]
  %v377 = vld [vmem:[%s1 + $0xb28] sm:$0xff]
  %v378 = vld [vmem:[%s1 + $0xb30] sm:$0xff]
  %v379 = vld [vmem:[%s1 + $0xb38] sm:$0xff]
  %v380 = vld [vmem:[%s1 + $0xb40] sm:$0xff]
  %v381 = vld [vmem:[%s1 + $0xb48] sm:$0xff]
  %v382 = vld [vmem:[%s1 + $0xb50] sm:$0xff]
  %v383 = vld [vmem:[%s1 + $0xb58] sm:$0xff]
  %v384 = vld [vmem:[%s1 + $0xb60] sm:$0xff]
  %v385 = vld [vmem:[%s1 + $0xb68] sm:$0xff]
  %v386 = vld [vmem:[%s1 + $0xb70] sm:$0xff]
  %v387 = vld [vmem:[%s1 + $0xb78] sm:$0xff]
  %v388 = vld [vmem:[%s1 + $0xb80] sm:$0xff]
  %v389 = vld [vmem:[%s1 + $0xb88] sm:$0xff]
  %v390 = vld [vmem:[%s1 + $0xb90] sm:$0xff]
  %v391 = vld [vmem:[%s1 + $0xb98] sm:$0xff]
  %v392 = vld [vmem:[%s1 + $0xba0] sm:$0xff]
  %v393 = vld [vmem:[%s1 + $0xba8] sm:$0xff]
  %v394 = vld [vmem:[%s1 + $0xbb0] sm:$0xff]
  %v395 = vld [vmem:[%s1 + $0xbb8] sm:$0xff]
  %v396 = vld [vmem:[%s1 + $0xbc0] sm:$0xff]
  %v397 = vld [vmem:[%s1 + $0xbc8] sm:$0xff]
  %v398 = vld [vmem:[%s1 + $0xbd0] sm:$0xff]
  %v399 = vld [vmem:[%s1 + $0xbd8] sm:$0xff]
  %v400 = vld [vmem:[%s1 + $0xbe0] sm:$0xff]
  %v401 = vld [vmem:[%s1 + $0xbe8] sm:$0xff]
  %v402 = vld [vmem:[%s1 + $0xbf0] sm:$0xff]
  %v403 = vld [vmem:[%s1 + $0xbf8] sm:$0xff]
  %v404 = vld [vmem:[%s2] sm:$0xff]
  %v406 = vlaneseq
  %v407 = vshrl.u32 %v406, 7
  %v408 = vsub.s32 0, %v407
  %v409 = vrot.slane %v404, %v408
  %v410 = vlaneseq
  %v411 = vshrl.u32 %v410, 7
  %v412 = vsub.s32 1, %v411
  %v413 = vrot.slane %v404, %v412
  %v414 = vlaneseq
  %v415 = vshrl.u32 %v414, 7
  %v416 = vsub.s32 2, %v415
  %v417 = vrot.slane %v404, %v416
  %v418 = vlaneseq
  %v419 = vshrl.u32 %v418, 7
  %v420 = vsub.s32 3, %v419
  %v421 = vrot.slane %v404, %v420
  %v422 = vlaneseq
  %v423 = vshrl.u32 %v422, 7
  %v424 = vsub.s32 4, %v423
  %v425 = vrot.slane %v404, %v424
  %v426 = vlaneseq
  %v427 = vshrl.u32 %v426, 7
  %v428 = vsub.s32 5, %v427
  %v429 = vrot.slane %v404, %v428
  %v430 = vlaneseq
  %v431 = vshrl.u32 %v430, 7
  %v432 = vsub.s32 6, %v431
  %v433 = vrot.slane %v404, %v432
  %v434 = vlaneseq
  %v435 = vshrl.u32 %v434, 7
  %v436 = vsub.s32 7, %v435
  %v437 = vrot.slane %v404, %v436
  %v452 = vunpack.c.l.b16 %v14
  %v453 = vunpack.c.h.b16 %v14
  %v454 = vunpack.c.l.b16 %v15
  %v455 = vunpack.c.h.b16 %v15
  %v456 = vunpack.c.l.b16 %v16
  %v457 = vunpack.c.h.b16 %v16
  %v458 = vunpack.c.l.b16 %v17
  %v459 = vunpack.c.h.b16 %v17
  %v460 = vunpack.c.l.b16 %v18
  %v461 = vunpack.c.h.b16 %v18
  %v462 = vunpack.c.l.b16 %v19
  %v463 = vunpack.c.h.b16 %v19
  %v464 = vpack.c.b16 %v458, %v452
  %v465 = vpack.c.b16 %v459, %v453
  %v466 = vpack.c.b16 %v460, %v454
  %v467 = vpack.c.b16 %v461, %v455
  %v468 = vpack.c.b16 %v462, %v456
  %v469 = vpack.c.b16 %v463, %v457
  %v860 = vunpack.c.l.b16 %v20
  %v861 = vunpack.c.h.b16 %v20
  %v862 = vunpack.c.l.b16 %v21
  %v863 = vunpack.c.h.b16 %v21
  %v864 = vunpack.c.l.b16 %v22
  %v865 = vunpack.c.h.b16 %v22
  %v866 = vunpack.c.l.b16 %v23
  %v867 = vunpack.c.h.b16 %v23
  %v868 = vunpack.c.l.b16 %v24
  %v869 = vunpack.c.h.b16 %v24
  %v870 = vunpack.c.l.b16 %v25
  %v871 = vunpack.c.h.b16 %v25
  %v872 = vunpack.c.l.b16 %v26
  %v873 = vunpack.c.h.b16 %v26
  %v874 = vunpack.c.l.b16 %v27
  %v875 = vunpack.c.h.b16 %v27
  %v876 = vunpack.c.l.b16 %v28
  %v877 = vunpack.c.h.b16 %v28
  %v878 = vunpack.c.l.b16 %v29
  %v879 = vunpack.c.h.b16 %v29
  %v880 = vunpack.c.l.b16 %v30
  %v881 = vunpack.c.h.b16 %v30
  %v882 = vunpack.c.l.b16 %v31
  %v883 = vunpack.c.h.b16 %v31
  %v884 = vunpack.c.l.b16 %v32
  %v885 = vunpack.c.h.b16 %v32
  %v886 = vunpack.c.l.b16 %v33
  %v887 = vunpack.c.h.b16 %v33
  %v888 = vunpack.c.l.b16 %v34
  %v889 = vunpack.c.h.b16 %v34
  %v890 = vunpack.c.l.b16 %v35
  %v891 = vunpack.c.h.b16 %v35
  %v892 = vunpack.c.l.b16 %v36
  %v893 = vunpack.c.h.b16 %v36
  %v894 = vunpack.c.l.b16 %v37
  %v895 = vunpack.c.h.b16 %v37
  %v896 = vunpack.c.l.b16 %v38
  %v897 = vunpack.c.h.b16 %v38
  %v898 = vunpack.c.l.b16 %v39
  %v899 = vunpack.c.h.b16 %v39
  %v900 = vunpack.c.l.b16 %v40
  %v901 = vunpack.c.h.b16 %v40
  %v902 = vunpack.c.l.b16 %v41
  %v903 = vunpack.c.h.b16 %v41
  %v904 = vunpack.c.l.b16 %v42
  %v905 = vunpack.c.h.b16 %v42
  %v906 = vunpack.c.l.b16 %v43
  %v907 = vunpack.c.h.b16 %v43
  %v908 = vunpack.c.l.b16 %v44
  %v909 = vunpack.c.h.b16 %v44
  %v910 = vunpack.c.l.b16 %v45
  %v911 = vunpack.c.h.b16 %v45
  %v912 = vunpack.c.l.b16 %v46
  %v913 = vunpack.c.h.b16 %v46
  %v914 = vunpack.c.l.b16 %v47
  %v915 = vunpack.c.h.b16 %v47
  %v916 = vunpack.c.l.b16 %v48
  %v917 = vunpack.c.h.b16 %v48
  %v918 = vunpack.c.l.b16 %v49
  %v919 = vunpack.c.h.b16 %v49
  %v920 = vunpack.c.l.b16 %v50
  %v921 = vunpack.c.h.b16 %v50
  %v922 = vunpack.c.l.b16 %v51
  %v923 = vunpack.c.h.b16 %v51
  %v924 = vunpack.c.l.b16 %v52
  %v925 = vunpack.c.h.b16 %v52
  %v926 = vunpack.c.l.b16 %v53
  %v927 = vunpack.c.h.b16 %v53
  %v928 = vunpack.c.l.b16 %v54
  %v929 = vunpack.c.h.b16 %v54
  %v930 = vunpack.c.l.b16 %v55
  %v931 = vunpack.c.h.b16 %v55
  %v932 = vunpack.c.l.b16 %v56
  %v933 = vunpack.c.h.b16 %v56
  %v934 = vunpack.c.l.b16 %v57
  %v935 = vunpack.c.h.b16 %v57
  %v936 = vunpack.c.l.b16 %v58
  %v937 = vunpack.c.h.b16 %v58
  %v938 = vunpack.c.l.b16 %v59
  %v939 = vunpack.c.h.b16 %v59
  %v940 = vunpack.c.l.b16 %v60
  %v941 = vunpack.c.h.b16 %v60
  %v942 = vunpack.c.l.b16 %v61
  %v943 = vunpack.c.h.b16 %v61
  %v944 = vunpack.c.l.b16 %v62
  %v945 = vunpack.c.h.b16 %v62
  %v946 = vunpack.c.l.b16 %v63
  %v947 = vunpack.c.h.b16 %v63
  %v948 = vunpack.c.l.b16 %v64
  %v949 = vunpack.c.h.b16 %v64
  %v950 = vunpack.c.l.b16 %v65
  %v951 = vunpack.c.h.b16 %v65
  %v952 = vunpack.c.l.b16 %v66
  %v953 = vunpack.c.h.b16 %v66
  %v954 = vunpack.c.l.b16 %v67
  %v955 = vunpack.c.h.b16 %v67
  %v956 = vunpack.c.l.b16 %v68
  %v957 = vunpack.c.h.b16 %v68
  %v958 = vunpack.c.l.b16 %v69
  %v959 = vunpack.c.h.b16 %v69
  %v960 = vunpack.c.l.b16 %v70
  %v961 = vunpack.c.h.b16 %v70
  %v962 = vunpack.c.l.b16 %v71
  %v963 = vunpack.c.h.b16 %v71
  %v964 = vunpack.c.l.b16 %v72
  %v965 = vunpack.c.h.b16 %v72
  %v966 = vunpack.c.l.b16 %v73
  %v967 = vunpack.c.h.b16 %v73
  %v968 = vunpack.c.l.b16 %v74
  %v969 = vunpack.c.h.b16 %v74
  %v970 = vunpack.c.l.b16 %v75
  %v971 = vunpack.c.h.b16 %v75
  %v972 = vunpack.c.l.b16 %v76
  %v973 = vunpack.c.h.b16 %v76
  %v974 = vunpack.c.l.b16 %v77
  %v975 = vunpack.c.h.b16 %v77
  %v976 = vunpack.c.l.b16 %v78
  %v977 = vunpack.c.h.b16 %v78
  %v978 = vunpack.c.l.b16 %v79
  %v979 = vunpack.c.h.b16 %v79
  %v980 = vunpack.c.l.b16 %v80
  %v981 = vunpack.c.h.b16 %v80
  %v982 = vunpack.c.l.b16 %v81
  %v983 = vunpack.c.h.b16 %v81
  %v984 = vunpack.c.l.b16 %v82
  %v985 = vunpack.c.h.b16 %v82
  %v986 = vunpack.c.l.b16 %v83
  %v987 = vunpack.c.h.b16 %v83
  %v988 = vunpack.c.l.b16 %v84
  %v989 = vunpack.c.h.b16 %v84
  %v990 = vunpack.c.l.b16 %v85
  %v991 = vunpack.c.h.b16 %v85
  %v992 = vunpack.c.l.b16 %v86
  %v993 = vunpack.c.h.b16 %v86
  %v994 = vunpack.c.l.b16 %v87
  %v995 = vunpack.c.h.b16 %v87
  %v996 = vunpack.c.l.b16 %v88
  %v997 = vunpack.c.h.b16 %v88
  %v998 = vunpack.c.l.b16 %v89
  %v999 = vunpack.c.h.b16 %v89
  %v1000 = vunpack.c.l.b16 %v90
  %v1001 = vunpack.c.h.b16 %v90
  %v1002 = vunpack.c.l.b16 %v91
  %v1003 = vunpack.c.h.b16 %v91
  %v1004 = vunpack.c.l.b16 %v92
  %v1005 = vunpack.c.h.b16 %v92
  %v1006 = vunpack.c.l.b16 %v93
  %v1007 = vunpack.c.h.b16 %v93
  %v1008 = vunpack.c.l.b16 %v94
  %v1009 = vunpack.c.h.b16 %v94
  %v1010 = vunpack.c.l.b16 %v95
  %v1011 = vunpack.c.h.b16 %v95
  %v1012 = vunpack.c.l.b16 %v96
  %v1013 = vunpack.c.h.b16 %v96
  %v1014 = vunpack.c.l.b16 %v97
  %v1015 = vunpack.c.h.b16 %v97
  %v1016 = vunpack.c.l.b16 %v98
  %v1017 = vunpack.c.h.b16 %v98
  %v1018 = vunpack.c.l.b16 %v99
  %v1019 = vunpack.c.h.b16 %v99
  %v1020 = vunpack.c.l.b16 %v100
  %v1021 = vunpack.c.h.b16 %v100
  %v1022 = vunpack.c.l.b16 %v101
  %v1023 = vunpack.c.h.b16 %v101
  %v1024 = vunpack.c.l.b16 %v102
  %v1025 = vunpack.c.h.b16 %v102
  %v1026 = vunpack.c.l.b16 %v103
  %v1027 = vunpack.c.h.b16 %v103
  %v1028 = vunpack.c.l.b16 %v104
  %v1029 = vunpack.c.h.b16 %v104
  %v1030 = vunpack.c.l.b16 %v105
  %v1031 = vunpack.c.h.b16 %v105
  %v1032 = vunpack.c.l.b16 %v106
  %v1033 = vunpack.c.h.b16 %v106
  %v1034 = vunpack.c.l.b16 %v107
  %v1035 = vunpack.c.h.b16 %v107
  %v1036 = vunpack.c.l.b16 %v108
  %v1037 = vunpack.c.h.b16 %v108
  %v1038 = vunpack.c.l.b16 %v109
  %v1039 = vunpack.c.h.b16 %v109
  %v1040 = vunpack.c.l.b16 %v110
  %v1041 = vunpack.c.h.b16 %v110
  %v1042 = vunpack.c.l.b16 %v111
  %v1043 = vunpack.c.h.b16 %v111
  %v1044 = vunpack.c.l.b16 %v112
  %v1045 = vunpack.c.h.b16 %v112
  %v1046 = vunpack.c.l.b16 %v113
  %v1047 = vunpack.c.h.b16 %v113
  %v1048 = vunpack.c.l.b16 %v114
  %v1049 = vunpack.c.h.b16 %v114
  %v1050 = vunpack.c.l.b16 %v115
  %v1051 = vunpack.c.h.b16 %v115
  %v1052 = vunpack.c.l.b16 %v116
  %v1053 = vunpack.c.h.b16 %v116
  %v1054 = vunpack.c.l.b16 %v117
  %v1055 = vunpack.c.h.b16 %v117
  %v1056 = vunpack.c.l.b16 %v118
  %v1057 = vunpack.c.h.b16 %v118
  %v1058 = vunpack.c.l.b16 %v119
  %v1059 = vunpack.c.h.b16 %v119
  %v1060 = vunpack.c.l.b16 %v120
  %v1061 = vunpack.c.h.b16 %v120
  %v1062 = vunpack.c.l.b16 %v121
  %v1063 = vunpack.c.h.b16 %v121
  %v1064 = vunpack.c.l.b16 %v122
  %v1065 = vunpack.c.h.b16 %v122
  %v1066 = vunpack.c.l.b16 %v123
  %v1067 = vunpack.c.h.b16 %v123
  %v1068 = vunpack.c.l.b16 %v124
  %v1069 = vunpack.c.h.b16 %v124
  %v1070 = vunpack.c.l.b16 %v125
  %v1071 = vunpack.c.h.b16 %v125
  %v1072 = vunpack.c.l.b16 %v126
  %v1073 = vunpack.c.h.b16 %v126
  %v1074 = vunpack.c.l.b16 %v127
  %v1075 = vunpack.c.h.b16 %v127
  %v1076 = vunpack.c.l.b16 %v128
  %v1077 = vunpack.c.h.b16 %v128
  %v1078 = vunpack.c.l.b16 %v129
  %v1079 = vunpack.c.h.b16 %v129
  %v1080 = vunpack.c.l.b16 %v130
  %v1081 = vunpack.c.h.b16 %v130
  %v1082 = vunpack.c.l.b16 %v131
  %v1083 = vunpack.c.h.b16 %v131
  %v1084 = vunpack.c.l.b16 %v132
  %v1085 = vunpack.c.h.b16 %v132
  %v1086 = vunpack.c.l.b16 %v133
  %v1087 = vunpack.c.h.b16 %v133
  %v1088 = vunpack.c.l.b16 %v134
  %v1089 = vunpack.c.h.b16 %v134
  %v1090 = vunpack.c.l.b16 %v135
  %v1091 = vunpack.c.h.b16 %v135
  %v1092 = vunpack.c.l.b16 %v136
  %v1093 = vunpack.c.h.b16 %v136
  %v1094 = vunpack.c.l.b16 %v137
  %v1095 = vunpack.c.h.b16 %v137
  %v1096 = vunpack.c.l.b16 %v138
  %v1097 = vunpack.c.h.b16 %v138
  %v1098 = vunpack.c.l.b16 %v139
  %v1099 = vunpack.c.h.b16 %v139
  %v1100 = vunpack.c.l.b16 %v140
  %v1101 = vunpack.c.h.b16 %v140
  %v1102 = vunpack.c.l.b16 %v141
  %v1103 = vunpack.c.h.b16 %v141
  %v1104 = vunpack.c.l.b16 %v142
  %v1105 = vunpack.c.h.b16 %v142
  %v1106 = vunpack.c.l.b16 %v143
  %v1107 = vunpack.c.h.b16 %v143
  %v1108 = vunpack.c.l.b16 %v144
  %v1109 = vunpack.c.h.b16 %v144
  %v1110 = vunpack.c.l.b16 %v145
  %v1111 = vunpack.c.h.b16 %v145
  %v1112 = vunpack.c.l.b16 %v146
  %v1113 = vunpack.c.h.b16 %v146
  %v1114 = vunpack.c.l.b16 %v147
  %v1115 = vunpack.c.h.b16 %v147
  %v1116 = vunpack.c.l.b16 %v148
  %v1117 = vunpack.c.h.b16 %v148
  %v1118 = vunpack.c.l.b16 %v149
  %v1119 = vunpack.c.h.b16 %v149
  %v1120 = vunpack.c.l.b16 %v150
  %v1121 = vunpack.c.h.b16 %v150
  %v1122 = vunpack.c.l.b16 %v151
  %v1123 = vunpack.c.h.b16 %v151
  %v1124 = vunpack.c.l.b16 %v152
  %v1125 = vunpack.c.h.b16 %v152
  %v1126 = vunpack.c.l.b16 %v153
  %v1127 = vunpack.c.h.b16 %v153
  %v1128 = vunpack.c.l.b16 %v154
  %v1129 = vunpack.c.h.b16 %v154
  %v1130 = vunpack.c.l.b16 %v155
  %v1131 = vunpack.c.h.b16 %v155
  %v1132 = vunpack.c.l.b16 %v156
  %v1133 = vunpack.c.h.b16 %v156
  %v1134 = vunpack.c.l.b16 %v157
  %v1135 = vunpack.c.h.b16 %v157
  %v1136 = vunpack.c.l.b16 %v158
  %v1137 = vunpack.c.h.b16 %v158
  %v1138 = vunpack.c.l.b16 %v159
  %v1139 = vunpack.c.h.b16 %v159
  %v1140 = vunpack.c.l.b16 %v160
  %v1141 = vunpack.c.h.b16 %v160
  %v1142 = vunpack.c.l.b16 %v161
  %v1143 = vunpack.c.h.b16 %v161
  %v1144 = vunpack.c.l.b16 %v162
  %v1145 = vunpack.c.h.b16 %v162
  %v1146 = vunpack.c.l.b16 %v163
  %v1147 = vunpack.c.h.b16 %v163
  %v1148 = vunpack.c.l.b16 %v164
  %v1149 = vunpack.c.h.b16 %v164
  %v1150 = vunpack.c.l.b16 %v165
  %v1151 = vunpack.c.h.b16 %v165
  %v1152 = vunpack.c.l.b16 %v166
  %v1153 = vunpack.c.h.b16 %v166
  %v1154 = vunpack.c.l.b16 %v167
  %v1155 = vunpack.c.h.b16 %v167
  %v1156 = vunpack.c.l.b16 %v168
  %v1157 = vunpack.c.h.b16 %v168
  %v1158 = vunpack.c.l.b16 %v169
  %v1159 = vunpack.c.h.b16 %v169
  %v1160 = vunpack.c.l.b16 %v170
  %v1161 = vunpack.c.h.b16 %v170
  %v1162 = vunpack.c.l.b16 %v171
  %v1163 = vunpack.c.h.b16 %v171
  %v1164 = vunpack.c.l.b16 %v172
  %v1165 = vunpack.c.h.b16 %v172
  %v1166 = vunpack.c.l.b16 %v173
  %v1167 = vunpack.c.h.b16 %v173
  %v1168 = vunpack.c.l.b16 %v174
  %v1169 = vunpack.c.h.b16 %v174
  %v1170 = vunpack.c.l.b16 %v175
  %v1171 = vunpack.c.h.b16 %v175
  %v1172 = vunpack.c.l.b16 %v176
  %v1173 = vunpack.c.h.b16 %v176
  %v1174 = vunpack.c.l.b16 %v177
  %v1175 = vunpack.c.h.b16 %v177
  %v1176 = vunpack.c.l.b16 %v178
  %v1177 = vunpack.c.h.b16 %v178
  %v1178 = vunpack.c.l.b16 %v179
  %v1179 = vunpack.c.h.b16 %v179
  %v1180 = vunpack.c.l.b16 %v180
  %v1181 = vunpack.c.h.b16 %v180
  %v1182 = vunpack.c.l.b16 %v181
  %v1183 = vunpack.c.h.b16 %v181
  %v1184 = vunpack.c.l.b16 %v182
  %v1185 = vunpack.c.h.b16 %v182
  %v1186 = vunpack.c.l.b16 %v183
  %v1187 = vunpack.c.h.b16 %v183
  %v1188 = vunpack.c.l.b16 %v184
  %v1189 = vunpack.c.h.b16 %v184
  %v1190 = vunpack.c.l.b16 %v185
  %v1191 = vunpack.c.h.b16 %v185
  %v1192 = vunpack.c.l.b16 %v186
  %v1193 = vunpack.c.h.b16 %v186
  %v1194 = vunpack.c.l.b16 %v187
  %v1195 = vunpack.c.h.b16 %v187
  %v1196 = vunpack.c.l.b16 %v188
  %v1197 = vunpack.c.h.b16 %v188
  %v1198 = vunpack.c.l.b16 %v189
  %v1199 = vunpack.c.h.b16 %v189
  %v1200 = vunpack.c.l.b16 %v190
  %v1201 = vunpack.c.h.b16 %v190
  %v1202 = vunpack.c.l.b16 %v191
  %v1203 = vunpack.c.h.b16 %v191
  %v1204 = vunpack.c.l.b16 %v192
  %v1205 = vunpack.c.h.b16 %v192
  %v1206 = vunpack.c.l.b16 %v193
  %v1207 = vunpack.c.h.b16 %v193
  %v1208 = vunpack.c.l.b16 %v194
  %v1209 = vunpack.c.h.b16 %v194
  %v1210 = vunpack.c.l.b16 %v195
  %v1211 = vunpack.c.h.b16 %v195
  %v1212 = vunpack.c.l.b16 %v196
  %v1213 = vunpack.c.h.b16 %v196
  %v1214 = vunpack.c.l.b16 %v197
  %v1215 = vunpack.c.h.b16 %v197
  %v1216 = vunpack.c.l.b16 %v198
  %v1217 = vunpack.c.h.b16 %v198
  %v1218 = vunpack.c.l.b16 %v199
  %v1219 = vunpack.c.h.b16 %v199
  %v1220 = vunpack.c.l.b16 %v200
  %v1221 = vunpack.c.h.b16 %v200
  %v1222 = vunpack.c.l.b16 %v201
  %v1223 = vunpack.c.h.b16 %v201
  %v1224 = vunpack.c.l.b16 %v202
  %v1225 = vunpack.c.h.b16 %v202
  %v1226 = vunpack.c.l.b16 %v203
  %v1227 = vunpack.c.h.b16 %v203
  %v1228 = vunpack.c.l.b16 %v204
  %v1229 = vunpack.c.h.b16 %v204
  %v1230 = vunpack.c.l.b16 %v205
  %v1231 = vunpack.c.h.b16 %v205
  %v1232 = vunpack.c.l.b16 %v206
  %v1233 = vunpack.c.h.b16 %v206
  %v1234 = vunpack.c.l.b16 %v207
  %v1235 = vunpack.c.h.b16 %v207
  %v1236 = vunpack.c.l.b16 %v208
  %v1237 = vunpack.c.h.b16 %v208
  %v1238 = vunpack.c.l.b16 %v209
  %v1239 = vunpack.c.h.b16 %v209
  %v1240 = vunpack.c.l.b16 %v210
  %v1241 = vunpack.c.h.b16 %v210
  %v1242 = vunpack.c.l.b16 %v211
  %v1243 = vunpack.c.h.b16 %v211
  %v1244 = vunpack.c.l.b16 %v212
  %v1245 = vunpack.c.h.b16 %v212
  %v1246 = vunpack.c.l.b16 %v213
  %v1247 = vunpack.c.h.b16 %v213
  %v1248 = vunpack.c.l.b16 %v214
  %v1249 = vunpack.c.h.b16 %v214
  %v1250 = vunpack.c.l.b16 %v215
  %v1251 = vunpack.c.h.b16 %v215
  %v1252 = vunpack.c.l.b16 %v216
  %v1253 = vunpack.c.h.b16 %v216
  %v1254 = vunpack.c.l.b16 %v217
  %v1255 = vunpack.c.h.b16 %v217
  %v1256 = vunpack.c.l.b16 %v218
  %v1257 = vunpack.c.h.b16 %v218
  %v1258 = vunpack.c.l.b16 %v219
  %v1259 = vunpack.c.h.b16 %v219
  %v1260 = vunpack.c.l.b16 %v220
  %v1261 = vunpack.c.h.b16 %v220
  %v1262 = vunpack.c.l.b16 %v221
  %v1263 = vunpack.c.h.b16 %v221
  %v1264 = vunpack.c.l.b16 %v222
  %v1265 = vunpack.c.h.b16 %v222
  %v1266 = vunpack.c.l.b16 %v223
  %v1267 = vunpack.c.h.b16 %v223
  %v1268 = vunpack.c.l.b16 %v224
  %v1269 = vunpack.c.h.b16 %v224
  %v1270 = vunpack.c.l.b16 %v225
  %v1271 = vunpack.c.h.b16 %v225
  %v1272 = vunpack.c.l.b16 %v226
  %v1273 = vunpack.c.h.b16 %v226
  %v1274 = vunpack.c.l.b16 %v227
  %v1275 = vunpack.c.h.b16 %v227
  %v1276 = vunpack.c.l.b16 %v228
  %v1277 = vunpack.c.h.b16 %v228
  %v1278 = vunpack.c.l.b16 %v229
  %v1279 = vunpack.c.h.b16 %v229
  %v1280 = vunpack.c.l.b16 %v230
  %v1281 = vunpack.c.h.b16 %v230
  %v1282 = vunpack.c.l.b16 %v231
  %v1283 = vunpack.c.h.b16 %v231
  %v1284 = vunpack.c.l.b16 %v232
  %v1285 = vunpack.c.h.b16 %v232
  %v1286 = vunpack.c.l.b16 %v233
  %v1287 = vunpack.c.h.b16 %v233
  %v1288 = vunpack.c.l.b16 %v234
  %v1289 = vunpack.c.h.b16 %v234
  %v1290 = vunpack.c.l.b16 %v235
  %v1291 = vunpack.c.h.b16 %v235
  %v1292 = vunpack.c.l.b16 %v236
  %v1293 = vunpack.c.h.b16 %v236
  %v1294 = vunpack.c.l.b16 %v237
  %v1295 = vunpack.c.h.b16 %v237
  %v1296 = vunpack.c.l.b16 %v238
  %v1297 = vunpack.c.h.b16 %v238
  %v1298 = vunpack.c.l.b16 %v239
  %v1299 = vunpack.c.h.b16 %v239
  %v1300 = vunpack.c.l.b16 %v240
  %v1301 = vunpack.c.h.b16 %v240
  %v1302 = vunpack.c.l.b16 %v241
  %v1303 = vunpack.c.h.b16 %v241
  %v1304 = vunpack.c.l.b16 %v242
  %v1305 = vunpack.c.h.b16 %v242
  %v1306 = vunpack.c.l.b16 %v243
  %v1307 = vunpack.c.h.b16 %v243
  %v1308 = vunpack.c.l.b16 %v244
  %v1309 = vunpack.c.h.b16 %v244
  %v1310 = vunpack.c.l.b16 %v245
  %v1311 = vunpack.c.h.b16 %v245
  %v1312 = vunpack.c.l.b16 %v246
  %v1313 = vunpack.c.h.b16 %v246
  %v1314 = vunpack.c.l.b16 %v247
  %v1315 = vunpack.c.h.b16 %v247
  %v1316 = vunpack.c.l.b16 %v248
  %v1317 = vunpack.c.h.b16 %v248
  %v1318 = vunpack.c.l.b16 %v249
  %v1319 = vunpack.c.h.b16 %v249
  %v1320 = vunpack.c.l.b16 %v250
  %v1321 = vunpack.c.h.b16 %v250
  %v1322 = vunpack.c.l.b16 %v251
  %v1323 = vunpack.c.h.b16 %v251
  %v1324 = vunpack.c.l.b16 %v252
  %v1325 = vunpack.c.h.b16 %v252
  %v1326 = vunpack.c.l.b16 %v253
  %v1327 = vunpack.c.h.b16 %v253
  %v1328 = vunpack.c.l.b16 %v254
  %v1329 = vunpack.c.h.b16 %v254
  %v1330 = vunpack.c.l.b16 %v255
  %v1331 = vunpack.c.h.b16 %v255
  %v1332 = vunpack.c.l.b16 %v256
  %v1333 = vunpack.c.h.b16 %v256
  %v1334 = vunpack.c.l.b16 %v257
  %v1335 = vunpack.c.h.b16 %v257
  %v1336 = vunpack.c.l.b16 %v258
  %v1337 = vunpack.c.h.b16 %v258
  %v1338 = vunpack.c.l.b16 %v259
  %v1339 = vunpack.c.h.b16 %v259
  %v1340 = vunpack.c.l.b16 %v260
  %v1341 = vunpack.c.h.b16 %v260
  %v1342 = vunpack.c.l.b16 %v261
  %v1343 = vunpack.c.h.b16 %v261
  %v1344 = vunpack.c.l.b16 %v262
  %v1345 = vunpack.c.h.b16 %v262
  %v1346 = vunpack.c.l.b16 %v263
  %v1347 = vunpack.c.h.b16 %v263
  %v1348 = vunpack.c.l.b16 %v264
  %v1349 = vunpack.c.h.b16 %v264
  %v1350 = vunpack.c.l.b16 %v265
  %v1351 = vunpack.c.h.b16 %v265
  %v1352 = vunpack.c.l.b16 %v266
  %v1353 = vunpack.c.h.b16 %v266
  %v1354 = vunpack.c.l.b16 %v267
  %v1355 = vunpack.c.h.b16 %v267
  %v1356 = vunpack.c.l.b16 %v268
  %v1357 = vunpack.c.h.b16 %v268
  %v1358 = vunpack.c.l.b16 %v269
  %v1359 = vunpack.c.h.b16 %v269
  %v1360 = vunpack.c.l.b16 %v270
  %v1361 = vunpack.c.h.b16 %v270
  %v1362 = vunpack.c.l.b16 %v271
  %v1363 = vunpack.c.h.b16 %v271
  %v1364 = vunpack.c.l.b16 %v272
  %v1365 = vunpack.c.h.b16 %v272
  %v1366 = vunpack.c.l.b16 %v273
  %v1367 = vunpack.c.h.b16 %v273
  %v1368 = vunpack.c.l.b16 %v274
  %v1369 = vunpack.c.h.b16 %v274
  %v1370 = vunpack.c.l.b16 %v275
  %v1371 = vunpack.c.h.b16 %v275
  %v1372 = vunpack.c.l.b16 %v276
  %v1373 = vunpack.c.h.b16 %v276
  %v1374 = vunpack.c.l.b16 %v277
  %v1375 = vunpack.c.h.b16 %v277
  %v1376 = vunpack.c.l.b16 %v278
  %v1377 = vunpack.c.h.b16 %v278
  %v1378 = vunpack.c.l.b16 %v279
  %v1379 = vunpack.c.h.b16 %v279
  %v1380 = vunpack.c.l.b16 %v280
  %v1381 = vunpack.c.h.b16 %v280
  %v1382 = vunpack.c.l.b16 %v281
  %v1383 = vunpack.c.h.b16 %v281
  %v1384 = vunpack.c.l.b16 %v282
  %v1385 = vunpack.c.h.b16 %v282
  %v1386 = vunpack.c.l.b16 %v283
  %v1387 = vunpack.c.h.b16 %v283
  %v1388 = vunpack.c.l.b16 %v284
  %v1389 = vunpack.c.h.b16 %v284
  %v1390 = vunpack.c.l.b16 %v285
  %v1391 = vunpack.c.h.b16 %v285
  %v1392 = vunpack.c.l.b16 %v286
  %v1393 = vunpack.c.h.b16 %v286
  %v1394 = vunpack.c.l.b16 %v287
  %v1395 = vunpack.c.h.b16 %v287
  %v1396 = vunpack.c.l.b16 %v288
  %v1397 = vunpack.c.h.b16 %v288
  %v1398 = vunpack.c.l.b16 %v289
  %v1399 = vunpack.c.h.b16 %v289
  %v1400 = vunpack.c.l.b16 %v290
  %v1401 = vunpack.c.h.b16 %v290
  %v1402 = vunpack.c.l.b16 %v291
  %v1403 = vunpack.c.h.b16 %v291
  %v1404 = vunpack.c.l.b16 %v292
  %v1405 = vunpack.c.h.b16 %v292
  %v1406 = vunpack.c.l.b16 %v293
  %v1407 = vunpack.c.h.b16 %v293
  %v1408 = vunpack.c.l.b16 %v294
  %v1409 = vunpack.c.h.b16 %v294
  %v1410 = vunpack.c.l.b16 %v295
  %v1411 = vunpack.c.h.b16 %v295
  %v1412 = vunpack.c.l.b16 %v296
  %v1413 = vunpack.c.h.b16 %v296
  %v1414 = vunpack.c.l.b16 %v297
  %v1415 = vunpack.c.h.b16 %v297
  %v1416 = vunpack.c.l.b16 %v298
  %v1417 = vunpack.c.h.b16 %v298
  %v1418 = vunpack.c.l.b16 %v299
  %v1419 = vunpack.c.h.b16 %v299
  %v1420 = vunpack.c.l.b16 %v300
  %v1421 = vunpack.c.h.b16 %v300
  %v1422 = vunpack.c.l.b16 %v301
  %v1423 = vunpack.c.h.b16 %v301
  %v1424 = vunpack.c.l.b16 %v302
  %v1425 = vunpack.c.h.b16 %v302
  %v1426 = vunpack.c.l.b16 %v303
  %v1427 = vunpack.c.h.b16 %v303
  %v1428 = vunpack.c.l.b16 %v304
  %v1429 = vunpack.c.h.b16 %v304
  %v1430 = vunpack.c.l.b16 %v305
  %v1431 = vunpack.c.h.b16 %v305
  %v1432 = vunpack.c.l.b16 %v306
  %v1433 = vunpack.c.h.b16 %v306
  %v1434 = vunpack.c.l.b16 %v307
  %v1435 = vunpack.c.h.b16 %v307
  %v1436 = vunpack.c.l.b16 %v308
  %v1437 = vunpack.c.h.b16 %v308
  %v1438 = vunpack.c.l.b16 %v309
  %v1439 = vunpack.c.h.b16 %v309
  %v1440 = vunpack.c.l.b16 %v310
  %v1441 = vunpack.c.h.b16 %v310
  %v1442 = vunpack.c.l.b16 %v311
  %v1443 = vunpack.c.h.b16 %v311
  %v1444 = vunpack.c.l.b16 %v312
  %v1445 = vunpack.c.h.b16 %v312
  %v1446 = vunpack.c.l.b16 %v313
  %v1447 = vunpack.c.h.b16 %v313
  %v1448 = vunpack.c.l.b16 %v314
  %v1449 = vunpack.c.h.b16 %v314
  %v1450 = vunpack.c.l.b16 %v315
  %v1451 = vunpack.c.h.b16 %v315
  %v1452 = vunpack.c.l.b16 %v316
  %v1453 = vunpack.c.h.b16 %v316
  %v1454 = vunpack.c.l.b16 %v317
  %v1455 = vunpack.c.h.b16 %v317
  %v1456 = vunpack.c.l.b16 %v318
  %v1457 = vunpack.c.h.b16 %v318
  %v1458 = vunpack.c.l.b16 %v319
  %v1459 = vunpack.c.h.b16 %v319
  %v1460 = vunpack.c.l.b16 %v320
  %v1461 = vunpack.c.h.b16 %v320
  %v1462 = vunpack.c.l.b16 %v321
  %v1463 = vunpack.c.h.b16 %v321
  %v1464 = vunpack.c.l.b16 %v322
  %v1465 = vunpack.c.h.b16 %v322
  %v1466 = vunpack.c.l.b16 %v323
  %v1467 = vunpack.c.h.b16 %v323
  %v1468 = vunpack.c.l.b16 %v324
  %v1469 = vunpack.c.h.b16 %v324
  %v1470 = vunpack.c.l.b16 %v325
  %v1471 = vunpack.c.h.b16 %v325
  %v1472 = vunpack.c.l.b16 %v326
  %v1473 = vunpack.c.h.b16 %v326
  %v1474 = vunpack.c.l.b16 %v327
  %v1475 = vunpack.c.h.b16 %v327
  %v1476 = vunpack.c.l.b16 %v328
  %v1477 = vunpack.c.h.b16 %v328
  %v1478 = vunpack.c.l.b16 %v329
  %v1479 = vunpack.c.h.b16 %v329
  %v1480 = vunpack.c.l.b16 %v330
  %v1481 = vunpack.c.h.b16 %v330
  %v1482 = vunpack.c.l.b16 %v331
  %v1483 = vunpack.c.h.b16 %v331
  %v1484 = vunpack.c.l.b16 %v332
  %v1485 = vunpack.c.h.b16 %v332
  %v1486 = vunpack.c.l.b16 %v333
  %v1487 = vunpack.c.h.b16 %v333
  %v1488 = vunpack.c.l.b16 %v334
  %v1489 = vunpack.c.h.b16 %v334
  %v1490 = vunpack.c.l.b16 %v335
  %v1491 = vunpack.c.h.b16 %v335
  %v1492 = vunpack.c.l.b16 %v336
  %v1493 = vunpack.c.h.b16 %v336
  %v1494 = vunpack.c.l.b16 %v337
  %v1495 = vunpack.c.h.b16 %v337
  %v1496 = vunpack.c.l.b16 %v338
  %v1497 = vunpack.c.h.b16 %v338
  %v1498 = vunpack.c.l.b16 %v339
  %v1499 = vunpack.c.h.b16 %v339
  %v1500 = vunpack.c.l.b16 %v340
  %v1501 = vunpack.c.h.b16 %v340
  %v1502 = vunpack.c.l.b16 %v341
  %v1503 = vunpack.c.h.b16 %v341
  %v1504 = vunpack.c.l.b16 %v342
  %v1505 = vunpack.c.h.b16 %v342
  %v1506 = vunpack.c.l.b16 %v343
  %v1507 = vunpack.c.h.b16 %v343
  %v1508 = vunpack.c.l.b16 %v344
  %v1509 = vunpack.c.h.b16 %v344
  %v1510 = vunpack.c.l.b16 %v345
  %v1511 = vunpack.c.h.b16 %v345
  %v1512 = vunpack.c.l.b16 %v346
  %v1513 = vunpack.c.h.b16 %v346
  %v1514 = vunpack.c.l.b16 %v347
  %v1515 = vunpack.c.h.b16 %v347
  %v1516 = vunpack.c.l.b16 %v348
  %v1517 = vunpack.c.h.b16 %v348
  %v1518 = vunpack.c.l.b16 %v349
  %v1519 = vunpack.c.h.b16 %v349
  %v1520 = vunpack.c.l.b16 %v350
  %v1521 = vunpack.c.h.b16 %v350
  %v1522 = vunpack.c.l.b16 %v351
  %v1523 = vunpack.c.h.b16 %v351
  %v1524 = vunpack.c.l.b16 %v352
  %v1525 = vunpack.c.h.b16 %v352
  %v1526 = vunpack.c.l.b16 %v353
  %v1527 = vunpack.c.h.b16 %v353
  %v1528 = vunpack.c.l.b16 %v354
  %v1529 = vunpack.c.h.b16 %v354
  %v1530 = vunpack.c.l.b16 %v355
  %v1531 = vunpack.c.h.b16 %v355
  %v1532 = vunpack.c.l.b16 %v356
  %v1533 = vunpack.c.h.b16 %v356
  %v1534 = vunpack.c.l.b16 %v357
  %v1535 = vunpack.c.h.b16 %v357
  %v1536 = vunpack.c.l.b16 %v358
  %v1537 = vunpack.c.h.b16 %v358
  %v1538 = vunpack.c.l.b16 %v359
  %v1539 = vunpack.c.h.b16 %v359
  %v1540 = vunpack.c.l.b16 %v360
  %v1541 = vunpack.c.h.b16 %v360
  %v1542 = vunpack.c.l.b16 %v361
  %v1543 = vunpack.c.h.b16 %v361
  %v1544 = vunpack.c.l.b16 %v362
  %v1545 = vunpack.c.h.b16 %v362
  %v1546 = vunpack.c.l.b16 %v363
  %v1547 = vunpack.c.h.b16 %v363
  %v1548 = vunpack.c.l.b16 %v364
  %v1549 = vunpack.c.h.b16 %v364
  %v1550 = vunpack.c.l.b16 %v365
  %v1551 = vunpack.c.h.b16 %v365
  %v1552 = vunpack.c.l.b16 %v366
  %v1553 = vunpack.c.h.b16 %v366
  %v1554 = vunpack.c.l.b16 %v367
  %v1555 = vunpack.c.h.b16 %v367
  %v1556 = vunpack.c.l.b16 %v368
  %v1557 = vunpack.c.h.b16 %v368
  %v1558 = vunpack.c.l.b16 %v369
  %v1559 = vunpack.c.h.b16 %v369
  %v1560 = vunpack.c.l.b16 %v370
  %v1561 = vunpack.c.h.b16 %v370
  %v1562 = vunpack.c.l.b16 %v371
  %v1563 = vunpack.c.h.b16 %v371
  %v1564 = vunpack.c.l.b16 %v372
  %v1565 = vunpack.c.h.b16 %v372
  %v1566 = vunpack.c.l.b16 %v373
  %v1567 = vunpack.c.h.b16 %v373
  %v1568 = vunpack.c.l.b16 %v374
  %v1569 = vunpack.c.h.b16 %v374
  %v1570 = vunpack.c.l.b16 %v375
  %v1571 = vunpack.c.h.b16 %v375
  %v1572 = vunpack.c.l.b16 %v376
  %v1573 = vunpack.c.h.b16 %v376
  %v1574 = vunpack.c.l.b16 %v377
  %v1575 = vunpack.c.h.b16 %v377
  %v1576 = vunpack.c.l.b16 %v378
  %v1577 = vunpack.c.h.b16 %v378
  %v1578 = vunpack.c.l.b16 %v379
  %v1579 = vunpack.c.h.b16 %v379
  %v1580 = vunpack.c.l.b16 %v380
  %v1581 = vunpack.c.h.b16 %v380
  %v1582 = vunpack.c.l.b16 %v381
  %v1583 = vunpack.c.h.b16 %v381
  %v1584 = vunpack.c.l.b16 %v382
  %v1585 = vunpack.c.h.b16 %v382
  %v1586 = vunpack.c.l.b16 %v383
  %v1587 = vunpack.c.h.b16 %v383
  %v1588 = vunpack.c.l.b16 %v384
  %v1589 = vunpack.c.h.b16 %v384
  %v1590 = vunpack.c.l.b16 %v385
  %v1591 = vunpack.c.h.b16 %v385
  %v1592 = vunpack.c.l.b16 %v386
  %v1593 = vunpack.c.h.b16 %v386
  %v1594 = vunpack.c.l.b16 %v387
  %v1595 = vunpack.c.h.b16 %v387
  %v1596 = vunpack.c.l.b16 %v388
  %v1597 = vunpack.c.h.b16 %v388
  %v1598 = vunpack.c.l.b16 %v389
  %v1599 = vunpack.c.h.b16 %v389
  %v1600 = vunpack.c.l.b16 %v390
  %v1601 = vunpack.c.h.b16 %v390
  %v1602 = vunpack.c.l.b16 %v391
  %v1603 = vunpack.c.h.b16 %v391
  %v1604 = vunpack.c.l.b16 %v392
  %v1605 = vunpack.c.h.b16 %v392
  %v1606 = vunpack.c.l.b16 %v393
  %v1607 = vunpack.c.h.b16 %v393
  %v1608 = vunpack.c.l.b16 %v394
  %v1609 = vunpack.c.h.b16 %v394
  %v1610 = vunpack.c.l.b16 %v395
  %v1611 = vunpack.c.h.b16 %v395
  %v1612 = vunpack.c.l.b16 %v396
  %v1613 = vunpack.c.h.b16 %v396
  %v1614 = vunpack.c.l.b16 %v397
  %v1615 = vunpack.c.h.b16 %v397
  %v1616 = vunpack.c.l.b16 %v398
  %v1617 = vunpack.c.h.b16 %v398
  %v1618 = vunpack.c.l.b16 %v399
  %v1619 = vunpack.c.h.b16 %v399
  %v1620 = vunpack.c.l.b16 %v400
  %v1621 = vunpack.c.h.b16 %v400
  %v1622 = vunpack.c.l.b16 %v401
  %v1623 = vunpack.c.h.b16 %v401
  %v1624 = vunpack.c.l.b16 %v402
  %v1625 = vunpack.c.h.b16 %v402
  %v1626 = vunpack.c.l.b16 %v403
  %v1627 = vunpack.c.h.b16 %v403
  %v1628 = vpack.c.b16 %v868, %v860
  %v1629 = vpack.c.b16 %v869, %v861
  %v1630 = vpack.c.b16 %v870, %v862
  %v1631 = vpack.c.b16 %v871, %v863
  %v1632 = vpack.c.b16 %v872, %v864
  %v1633 = vpack.c.b16 %v873, %v865
  %v1634 = vpack.c.b16 %v874, %v866
  %v1635 = vpack.c.b16 %v875, %v867
  %v1636 = vpack.c.b16 %v884, %v876
  %v1637 = vpack.c.b16 %v885, %v877
  %v1638 = vpack.c.b16 %v886, %v878
  %v1639 = vpack.c.b16 %v887, %v879
  %v1640 = vpack.c.b16 %v888, %v880
  %v1641 = vpack.c.b16 %v889, %v881
  %v1642 = vpack.c.b16 %v890, %v882
  %v1643 = vpack.c.b16 %v891, %v883
  %v1644 = vpack.c.b16 %v900, %v892
  %v1645 = vpack.c.b16 %v901, %v893
  %v1646 = vpack.c.b16 %v902, %v894
  %v1647 = vpack.c.b16 %v903, %v895
  %v1648 = vpack.c.b16 %v904, %v896
  %v1649 = vpack.c.b16 %v905, %v897
  %v1650 = vpack.c.b16 %v906, %v898
  %v1651 = vpack.c.b16 %v907, %v899
  %v1652 = vpack.c.b16 %v916, %v908
  %v1653 = vpack.c.b16 %v917, %v909
  %v1654 = vpack.c.b16 %v918, %v910
  %v1655 = vpack.c.b16 %v919, %v911
  %v1656 = vpack.c.b16 %v920, %v912
  %v1657 = vpack.c.b16 %v921, %v913
  %v1658 = vpack.c.b16 %v922, %v914
  %v1659 = vpack.c.b16 %v923, %v915
  %v1660 = vpack.c.b16 %v932, %v924
  %v1661 = vpack.c.b16 %v933, %v925
  %v1662 = vpack.c.b16 %v934, %v926
  %v1663 = vpack.c.b16 %v935, %v927
  %v1664 = vpack.c.b16 %v936, %v928
  %v1665 = vpack.c.b16 %v937, %v929
  %v1666 = vpack.c.b16 %v938, %v930
  %v1667 = vpack.c.b16 %v939, %v931
  %v1668 = vpack.c.b16 %v948, %v940
  %v1669 = vpack.c.b16 %v949, %v941
  %v1670 = vpack.c.b16 %v950, %v942
  %v1671 = vpack.c.b16 %v951, %v943
  %v1672 = vpack.c.b16 %v952, %v944
  %v1673 = vpack.c.b16 %v953, %v945
  %v1674 = vpack.c.b16 %v954, %v946
  %v1675 = vpack.c.b16 %v955, %v947
  %v1676 = vpack.c.b16 %v964, %v956
  %v1677 = vpack.c.b16 %v965, %v957
  %v1678 = vpack.c.b16 %v966, %v958
  %v1679 = vpack.c.b16 %v967, %v959
  %v1680 = vpack.c.b16 %v968, %v960
  %v1681 = vpack.c.b16 %v969, %v961
  %v1682 = vpack.c.b16 %v970, %v962
  %v1683 = vpack.c.b16 %v971, %v963
  %v1684 = vpack.c.b16 %v980, %v972
  %v1685 = vpack.c.b16 %v981, %v973
  %v1686 = vpack.c.b16 %v982, %v974
  %v1687 = vpack.c.b16 %v983, %v975
  %v1688 = vpack.c.b16 %v984, %v976
  %v1689 = vpack.c.b16 %v985, %v977
  %v1690 = vpack.c.b16 %v986, %v978
  %v1691 = vpack.c.b16 %v987, %v979
  %v1692 = vpack.c.b16 %v996, %v988
  %v1693 = vpack.c.b16 %v997, %v989
  %v1694 = vpack.c.b16 %v998, %v990
  %v1695 = vpack.c.b16 %v999, %v991
  %v1696 = vpack.c.b16 %v1000, %v992
  %v1697 = vpack.c.b16 %v1001, %v993
  %v1698 = vpack.c.b16 %v1002, %v994
  %v1699 = vpack.c.b16 %v1003, %v995
  %v1700 = vpack.c.b16 %v1012, %v1004
  %v1701 = vpack.c.b16 %v1013, %v1005
  %v1702 = vpack.c.b16 %v1014, %v1006
  %v1703 = vpack.c.b16 %v1015, %v1007
  %v1704 = vpack.c.b16 %v1016, %v1008
  %v1705 = vpack.c.b16 %v1017, %v1009
  %v1706 = vpack.c.b16 %v1018, %v1010
  %v1707 = vpack.c.b16 %v1019, %v1011
  %v1708 = vpack.c.b16 %v1028, %v1020
  %v1709 = vpack.c.b16 %v1029, %v1021
  %v1710 = vpack.c.b16 %v1030, %v1022
  %v1711 = vpack.c.b16 %v1031, %v1023
  %v1712 = vpack.c.b16 %v1032, %v1024
  %v1713 = vpack.c.b16 %v1033, %v1025
  %v1714 = vpack.c.b16 %v1034, %v1026
  %v1715 = vpack.c.b16 %v1035, %v1027
  %v1716 = vpack.c.b16 %v1044, %v1036
  %v1717 = vpack.c.b16 %v1045, %v1037
  %v1718 = vpack.c.b16 %v1046, %v1038
  %v1719 = vpack.c.b16 %v1047, %v1039
  %v1720 = vpack.c.b16 %v1048, %v1040
  %v1721 = vpack.c.b16 %v1049, %v1041
  %v1722 = vpack.c.b16 %v1050, %v1042
  %v1723 = vpack.c.b16 %v1051, %v1043
  %v1724 = vpack.c.b16 %v1060, %v1052
  %v1725 = vpack.c.b16 %v1061, %v1053
  %v1726 = vpack.c.b16 %v1062, %v1054
  %v1727 = vpack.c.b16 %v1063, %v1055
  %v1728 = vpack.c.b16 %v1064, %v1056
  %v1729 = vpack.c.b16 %v1065, %v1057
  %v1730 = vpack.c.b16 %v1066, %v1058
  %v1731 = vpack.c.b16 %v1067, %v1059
  %v1732 = vpack.c.b16 %v1076, %v1068
  %v1733 = vpack.c.b16 %v1077, %v1069
  %v1734 = vpack.c.b16 %v1078, %v1070
  %v1735 = vpack.c.b16 %v1079, %v1071
  %v1736 = vpack.c.b16 %v1080, %v1072
  %v1737 = vpack.c.b16 %v1081, %v1073
  %v1738 = vpack.c.b16 %v1082, %v1074
  %v1739 = vpack.c.b16 %v1083, %v1075
  %v1740 = vpack.c.b16 %v1092, %v1084
  %v1741 = vpack.c.b16 %v1093, %v1085
  %v1742 = vpack.c.b16 %v1094, %v1086
  %v1743 = vpack.c.b16 %v1095, %v1087
  %v1744 = vpack.c.b16 %v1096, %v1088
  %v1745 = vpack.c.b16 %v1097, %v1089
  %v1746 = vpack.c.b16 %v1098, %v1090
  %v1747 = vpack.c.b16 %v1099, %v1091
  %v1748 = vpack.c.b16 %v1108, %v1100
  %v1749 = vpack.c.b16 %v1109, %v1101
  %v1750 = vpack.c.b16 %v1110, %v1102
  %v1751 = vpack.c.b16 %v1111, %v1103
  %v1752 = vpack.c.b16 %v1112, %v1104
  %v1753 = vpack.c.b16 %v1113, %v1105
  %v1754 = vpack.c.b16 %v1114, %v1106
  %v1755 = vpack.c.b16 %v1115, %v1107
  %v1756 = vpack.c.b16 %v1124, %v1116
  %v1757 = vpack.c.b16 %v1125, %v1117
  %v1758 = vpack.c.b16 %v1126, %v1118
  %v1759 = vpack.c.b16 %v1127, %v1119
  %v1760 = vpack.c.b16 %v1128, %v1120
  %v1761 = vpack.c.b16 %v1129, %v1121
  %v1762 = vpack.c.b16 %v1130, %v1122
  %v1763 = vpack.c.b16 %v1131, %v1123
  %v1764 = vpack.c.b16 %v1140, %v1132
  %v1765 = vpack.c.b16 %v1141, %v1133
  %v1766 = vpack.c.b16 %v1142, %v1134
  %v1767 = vpack.c.b16 %v1143, %v1135
  %v1768 = vpack.c.b16 %v1144, %v1136
  %v1769 = vpack.c.b16 %v1145, %v1137
  %v1770 = vpack.c.b16 %v1146, %v1138
  %v1771 = vpack.c.b16 %v1147, %v1139
  %v1772 = vpack.c.b16 %v1156, %v1148
  %v1773 = vpack.c.b16 %v1157, %v1149
  %v1774 = vpack.c.b16 %v1158, %v1150
  %v1775 = vpack.c.b16 %v1159, %v1151
  %v1776 = vpack.c.b16 %v1160, %v1152
  %v1777 = vpack.c.b16 %v1161, %v1153
  %v1778 = vpack.c.b16 %v1162, %v1154
  %v1779 = vpack.c.b16 %v1163, %v1155
  %v1780 = vpack.c.b16 %v1172, %v1164
  %v1781 = vpack.c.b16 %v1173, %v1165
  %v1782 = vpack.c.b16 %v1174, %v1166
  %v1783 = vpack.c.b16 %v1175, %v1167
  %v1784 = vpack.c.b16 %v1176, %v1168
  %v1785 = vpack.c.b16 %v1177, %v1169
  %v1786 = vpack.c.b16 %v1178, %v1170
  %v1787 = vpack.c.b16 %v1179, %v1171
  %v1788 = vpack.c.b16 %v1188, %v1180
  %v1789 = vpack.c.b16 %v1189, %v1181
  %v1790 = vpack.c.b16 %v1190, %v1182
  %v1791 = vpack.c.b16 %v1191, %v1183
  %v1792 = vpack.c.b16 %v1192, %v1184
  %v1793 = vpack.c.b16 %v1193, %v1185
  %v1794 = vpack.c.b16 %v1194, %v1186
  %v1795 = vpack.c.b16 %v1195, %v1187
  %v1796 = vpack.c.b16 %v1204, %v1196
  %v1797 = vpack.c.b16 %v1205, %v1197
  %v1798 = vpack.c.b16 %v1206, %v1198
  %v1799 = vpack.c.b16 %v1207, %v1199
  %v1800 = vpack.c.b16 %v1208, %v1200
  %v1801 = vpack.c.b16 %v1209, %v1201
  %v1802 = vpack.c.b16 %v1210, %v1202
  %v1803 = vpack.c.b16 %v1211, %v1203
  %v1804 = vpack.c.b16 %v1220, %v1212
  %v1805 = vpack.c.b16 %v1221, %v1213
  %v1806 = vpack.c.b16 %v1222, %v1214
  %v1807 = vpack.c.b16 %v1223, %v1215
  %v1808 = vpack.c.b16 %v1224, %v1216
  %v1809 = vpack.c.b16 %v1225, %v1217
  %v1810 = vpack.c.b16 %v1226, %v1218
  %v1811 = vpack.c.b16 %v1227, %v1219
  %v1812 = vpack.c.b16 %v1236, %v1228
  %v1813 = vpack.c.b16 %v1237, %v1229
  %v1814 = vpack.c.b16 %v1238, %v1230
  %v1815 = vpack.c.b16 %v1239, %v1231
  %v1816 = vpack.c.b16 %v1240, %v1232
  %v1817 = vpack.c.b16 %v1241, %v1233
  %v1818 = vpack.c.b16 %v1242, %v1234
  %v1819 = vpack.c.b16 %v1243, %v1235
  %v1820 = vpack.c.b16 %v1252, %v1244
  %v1821 = vpack.c.b16 %v1253, %v1245
  %v1822 = vpack.c.b16 %v1254, %v1246
  %v1823 = vpack.c.b16 %v1255, %v1247
  %v1824 = vpack.c.b16 %v1256, %v1248
  %v1825 = vpack.c.b16 %v1257, %v1249
  %v1826 = vpack.c.b16 %v1258, %v1250
  %v1827 = vpack.c.b16 %v1259, %v1251
  %v1828 = vpack.c.b16 %v1268, %v1260
  %v1829 = vpack.c.b16 %v1269, %v1261
  %v1830 = vpack.c.b16 %v1270, %v1262
  %v1831 = vpack.c.b16 %v1271, %v1263
  %v1832 = vpack.c.b16 %v1272, %v1264
  %v1833 = vpack.c.b16 %v1273, %v1265
  %v1834 = vpack.c.b16 %v1274, %v1266
  %v1835 = vpack.c.b16 %v1275, %v1267
  %v1836 = vpack.c.b16 %v1284, %v1276
  %v1837 = vpack.c.b16 %v1285, %v1277
  %v1838 = vpack.c.b16 %v1286, %v1278
  %v1839 = vpack.c.b16 %v1287, %v1279
  %v1840 = vpack.c.b16 %v1288, %v1280
  %v1841 = vpack.c.b16 %v1289, %v1281
  %v1842 = vpack.c.b16 %v1290, %v1282
  %v1843 = vpack.c.b16 %v1291, %v1283
  %v1844 = vpack.c.b16 %v1300, %v1292
  %v1845 = vpack.c.b16 %v1301, %v1293
  %v1846 = vpack.c.b16 %v1302, %v1294
  %v1847 = vpack.c.b16 %v1303, %v1295
  %v1848 = vpack.c.b16 %v1304, %v1296
  %v1849 = vpack.c.b16 %v1305, %v1297
  %v1850 = vpack.c.b16 %v1306, %v1298
  %v1851 = vpack.c.b16 %v1307, %v1299
  %v1852 = vpack.c.b16 %v1316, %v1308
  %v1853 = vpack.c.b16 %v1317, %v1309
  %v1854 = vpack.c.b16 %v1318, %v1310
  %v1855 = vpack.c.b16 %v1319, %v1311
  %v1856 = vpack.c.b16 %v1320, %v1312
  %v1857 = vpack.c.b16 %v1321, %v1313
  %v1858 = vpack.c.b16 %v1322, %v1314
  %v1859 = vpack.c.b16 %v1323, %v1315
  %v1860 = vpack.c.b16 %v1332, %v1324
  %v1861 = vpack.c.b16 %v1333, %v1325
  %v1862 = vpack.c.b16 %v1334, %v1326
  %v1863 = vpack.c.b16 %v1335, %v1327
  %v1864 = vpack.c.b16 %v1336, %v1328
  %v1865 = vpack.c.b16 %v1337, %v1329
  %v1866 = vpack.c.b16 %v1338, %v1330
  %v1867 = vpack.c.b16 %v1339, %v1331
  %v1868 = vpack.c.b16 %v1348, %v1340
  %v1869 = vpack.c.b16 %v1349, %v1341
  %v1870 = vpack.c.b16 %v1350, %v1342
  %v1871 = vpack.c.b16 %v1351, %v1343
  %v1872 = vpack.c.b16 %v1352, %v1344
  %v1873 = vpack.c.b16 %v1353, %v1345
  %v1874 = vpack.c.b16 %v1354, %v1346
  %v1875 = vpack.c.b16 %v1355, %v1347
  %v1876 = vpack.c.b16 %v1364, %v1356
  %v1877 = vpack.c.b16 %v1365, %v1357
  %v1878 = vpack.c.b16 %v1366, %v1358
  %v1879 = vpack.c.b16 %v1367, %v1359
  %v1880 = vpack.c.b16 %v1368, %v1360
  %v1881 = vpack.c.b16 %v1369, %v1361
  %v1882 = vpack.c.b16 %v1370, %v1362
  %v1883 = vpack.c.b16 %v1371, %v1363
  %v1884 = vpack.c.b16 %v1380, %v1372
  %v1885 = vpack.c.b16 %v1381, %v1373
  %v1886 = vpack.c.b16 %v1382, %v1374
  %v1887 = vpack.c.b16 %v1383, %v1375
  %v1888 = vpack.c.b16 %v1384, %v1376
  %v1889 = vpack.c.b16 %v1385, %v1377
  %v1890 = vpack.c.b16 %v1386, %v1378
  %v1891 = vpack.c.b16 %v1387, %v1379
  %v1892 = vpack.c.b16 %v1396, %v1388
  %v1893 = vpack.c.b16 %v1397, %v1389
  %v1894 = vpack.c.b16 %v1398, %v1390
  %v1895 = vpack.c.b16 %v1399, %v1391
  %v1896 = vpack.c.b16 %v1400, %v1392
  %v1897 = vpack.c.b16 %v1401, %v1393
  %v1898 = vpack.c.b16 %v1402, %v1394
  %v1899 = vpack.c.b16 %v1403, %v1395
  %v1900 = vpack.c.b16 %v1412, %v1404
  %v1901 = vpack.c.b16 %v1413, %v1405
  %v1902 = vpack.c.b16 %v1414, %v1406
  %v1903 = vpack.c.b16 %v1415, %v1407
  %v1904 = vpack.c.b16 %v1416, %v1408
  %v1905 = vpack.c.b16 %v1417, %v1409
  %v1906 = vpack.c.b16 %v1418, %v1410
  %v1907 = vpack.c.b16 %v1419, %v1411
  %v1908 = vpack.c.b16 %v1428, %v1420
  %v1909 = vpack.c.b16 %v1429, %v1421
  %v1910 = vpack.c.b16 %v1430, %v1422
  %v1911 = vpack.c.b16 %v1431, %v1423
  %v1912 = vpack.c.b16 %v1432, %v1424
  %v1913 = vpack.c.b16 %v1433, %v1425
  %v1914 = vpack.c.b16 %v1434, %v1426
  %v1915 = vpack.c.b16 %v1435, %v1427
  %v1916 = vpack.c.b16 %v1444, %v1436
  %v1917 = vpack.c.b16 %v1445, %v1437
  %v1918 = vpack.c.b16 %v1446, %v1438
  %v1919 = vpack.c.b16 %v1447, %v1439
  %v1920 = vpack.c.b16 %v1448, %v1440
  %v1921 = vpack.c.b16 %v1449, %v1441
  %v1922 = vpack.c.b16 %v1450, %v1442
  %v1923 = vpack.c.b16 %v1451, %v1443
  %v1924 = vpack.c.b16 %v1460, %v1452
  %v1925 = vpack.c.b16 %v1461, %v1453
  %v1926 = vpack.c.b16 %v1462, %v1454
  %v1927 = vpack.c.b16 %v1463, %v1455
  %v1928 = vpack.c.b16 %v1464, %v1456
  %v1929 = vpack.c.b16 %v1465, %v1457
  %v1930 = vpack.c.b16 %v1466, %v1458
  %v1931 = vpack.c.b16 %v1467, %v1459
  %v1932 = vpack.c.b16 %v1476, %v1468
  %v1933 = vpack.c.b16 %v1477, %v1469
  %v1934 = vpack.c.b16 %v1478, %v1470
  %v1935 = vpack.c.b16 %v1479, %v1471
  %v1936 = vpack.c.b16 %v1480, %v1472
  %v1937 = vpack.c.b16 %v1481, %v1473
  %v1938 = vpack.c.b16 %v1482, %v1474
  %v1939 = vpack.c.b16 %v1483, %v1475
  %v1940 = vpack.c.b16 %v1492, %v1484
  %v1941 = vpack.c.b16 %v1493, %v1485
  %v1942 = vpack.c.b16 %v1494, %v1486
  %v1943 = vpack.c.b16 %v1495, %v1487
  %v1944 = vpack.c.b16 %v1496, %v1488
  %v1945 = vpack.c.b16 %v1497, %v1489
  %v1946 = vpack.c.b16 %v1498, %v1490
  %v1947 = vpack.c.b16 %v1499, %v1491
  %v1948 = vpack.c.b16 %v1508, %v1500
  %v1949 = vpack.c.b16 %v1509, %v1501
  %v1950 = vpack.c.b16 %v1510, %v1502
  %v1951 = vpack.c.b16 %v1511, %v1503
  %v1952 = vpack.c.b16 %v1512, %v1504
  %v1953 = vpack.c.b16 %v1513, %v1505
  %v1954 = vpack.c.b16 %v1514, %v1506
  %v1955 = vpack.c.b16 %v1515, %v1507
  %v1956 = vpack.c.b16 %v1524, %v1516
  %v1957 = vpack.c.b16 %v1525, %v1517
  %v1958 = vpack.c.b16 %v1526, %v1518
  %v1959 = vpack.c.b16 %v1527, %v1519
  %v1960 = vpack.c.b16 %v1528, %v1520
  %v1961 = vpack.c.b16 %v1529, %v1521
  %v1962 = vpack.c.b16 %v1530, %v1522
  %v1963 = vpack.c.b16 %v1531, %v1523
  %v1964 = vpack.c.b16 %v1540, %v1532
  %v1965 = vpack.c.b16 %v1541, %v1533
  %v1966 = vpack.c.b16 %v1542, %v1534
  %v1967 = vpack.c.b16 %v1543, %v1535
  %v1968 = vpack.c.b16 %v1544, %v1536
  %v1969 = vpack.c.b16 %v1545, %v1537
  %v1970 = vpack.c.b16 %v1546, %v1538
  %v1971 = vpack.c.b16 %v1547, %v1539
  %v1972 = vpack.c.b16 %v1556, %v1548
  %v1973 = vpack.c.b16 %v1557, %v1549
  %v1974 = vpack.c.b16 %v1558, %v1550
  %v1975 = vpack.c.b16 %v1559, %v1551
  %v1976 = vpack.c.b16 %v1560, %v1552
  %v1977 = vpack.c.b16 %v1561, %v1553
  %v1978 = vpack.c.b16 %v1562, %v1554
  %v1979 = vpack.c.b16 %v1563, %v1555
  %v1980 = vpack.c.b16 %v1572, %v1564
  %v1981 = vpack.c.b16 %v1573, %v1565
  %v1982 = vpack.c.b16 %v1574, %v1566
  %v1983 = vpack.c.b16 %v1575, %v1567
  %v1984 = vpack.c.b16 %v1576, %v1568
  %v1985 = vpack.c.b16 %v1577, %v1569
  %v1986 = vpack.c.b16 %v1578, %v1570
  %v1987 = vpack.c.b16 %v1579, %v1571
  %v1988 = vpack.c.b16 %v1588, %v1580
  %v1989 = vpack.c.b16 %v1589, %v1581
  %v1990 = vpack.c.b16 %v1590, %v1582
  %v1991 = vpack.c.b16 %v1591, %v1583
  %v1992 = vpack.c.b16 %v1592, %v1584
  %v1993 = vpack.c.b16 %v1593, %v1585
  %v1994 = vpack.c.b16 %v1594, %v1586
  %v1995 = vpack.c.b16 %v1595, %v1587
  %v1996 = vpack.c.b16 %v1604, %v1596
  %v1997 = vpack.c.b16 %v1605, %v1597
  %v1998 = vpack.c.b16 %v1606, %v1598
  %v1999 = vpack.c.b16 %v1607, %v1599
  %v2000 = vpack.c.b16 %v1608, %v1600
  %v2001 = vpack.c.b16 %v1609, %v1601
  %v2002 = vpack.c.b16 %v1610, %v1602
  %v2003 = vpack.c.b16 %v1611, %v1603
  %v2004 = vpack.c.b16 %v1620, %v1612
  %v2005 = vpack.c.b16 %v1621, %v1613
  %v2006 = vpack.c.b16 %v1622, %v1614
  %v2007 = vpack.c.b16 %v1623, %v1615
  %v2008 = vpack.c.b16 %v1624, %v1616
  %v2009 = vpack.c.b16 %v1625, %v1617
  %v2010 = vpack.c.b16 %v1626, %v1618
  %v2011 = vpack.c.b16 %v1627, %v1619
  %2396 = vmatprep.subr.bf16.mxu0 %v1629
  %2397 = vmatpush1.bf16.msra.mxu0 %v1628
  %2398 = vmatprep.subr.bf16.mxu0 %v1637
  %2399 = vmatpush1.bf16.msra.mxu0 %v1636
  %2400 = vmatprep.subr.bf16.mxu0 %v1645
  %2401 = vmatpush1.bf16.msra.mxu0 %v1644
  %2402 = vmatprep.subr.bf16.mxu0 %v1653
  %2403 = vmatpush1.bf16.msra.mxu0 %v1652
  %2404 = vmatprep.subr.bf16.mxu0 %v1661
  %2405 = vmatpush1.bf16.msra.mxu0 %v1660
  %2406 = vmatprep.subr.bf16.mxu0 %v1669
  %2407 = vmatpush1.bf16.msra.mxu0 %v1668
  %2408 = vmatprep.subr.bf16.mxu0 %v1677
  %2409 = vmatpush1.bf16.msra.mxu0 %v1676
  %2410 = vmatprep.subr.bf16.mxu0 %v1685
  %2411 = vmatpush1.bf16.msra.mxu0 %v1684
  %2412 = vmatprep.subr.bf16.mxu0 %v1693
  %2413 = vmatpush1.bf16.msra.mxu0 %v1692
  %2414 = vmatprep.subr.bf16.mxu0 %v1701
  %2415 = vmatpush1.bf16.msra.mxu0 %v1700
  %2416 = vmatprep.subr.bf16.mxu0 %v1709
  %2417 = vmatpush1.bf16.msra.mxu0 %v1708
  %2418 = vmatprep.subr.bf16.mxu0 %v1717
  %2419 = vmatpush1.bf16.msra.mxu0 %v1716
  %2420 = vmatprep.subr.bf16.mxu0 %v1725
  %2421 = vmatpush1.bf16.msra.mxu0 %v1724
  %2422 = vmatprep.subr.bf16.mxu0 %v1733
  %2423 = vmatpush1.bf16.msra.mxu0 %v1732
  %2424 = vmatprep.subr.bf16.mxu0 %v1741
  %2425 = vmatpush1.bf16.msra.mxu0 %v1740
  %2426 = vmatprep.subr.bf16.mxu0 %v1749
  %2427 = vmatpush1.bf16.msra.mxu0 %v1748
  %2428 = vmatprep.mubr.bf16.mxu0 %v465
  %2429 = vmatmul.mubr.bf16.gmra.mrb[0].mxu0 %v464
  %v2430 = vpop.f32.mrb[0].mxu0
  %v2431 = vadd.f32 %v409, %v2430
  %v2432 = vpop.f32.mrb[0].mxu0
  %v2433 = vadd.f32 %v413, %v2432
  %v2434 = vpop.f32.mrb[0].mxu0
  %v2435 = vadd.f32 %v409, %v2434
  %v2436 = vpop.f32.mrb[0].mxu0
  %v2437 = vadd.f32 %v413, %v2436
  %2438 = vdwg.mxu0
  %2439 = vmatprep.subr.bf16.mxu0 %v1757
  %2440 = vmatpush1.bf16.msra.mxu0 %v1756
  %2441 = vmatprep.subr.bf16.mxu0 %v1765
  %2442 = vmatpush1.bf16.msra.mxu0 %v1764
  %2443 = vmatprep.subr.bf16.mxu0 %v1773
  %2444 = vmatpush1.bf16.msra.mxu0 %v1772
  %2445 = vmatprep.subr.bf16.mxu0 %v1781
  %2446 = vmatpush1.bf16.msra.mxu0 %v1780
  %2447 = vmatprep.subr.bf16.mxu0 %v1789
  %2448 = vmatpush1.bf16.msra.mxu0 %v1788
  %2449 = vmatprep.subr.bf16.mxu0 %v1797
  %2450 = vmatpush1.bf16.msra.mxu0 %v1796
  %2451 = vmatprep.subr.bf16.mxu0 %v1805
  %2452 = vmatpush1.bf16.msra.mxu0 %v1804
  %2453 = vmatprep.subr.bf16.mxu0 %v1813
  %2454 = vmatpush1.bf16.msra.mxu0 %v1812
  %2455 = vmatprep.subr.bf16.mxu0 %v1821
  %2456 = vmatpush1.bf16.msra.mxu0 %v1820
  %2457 = vmatprep.subr.bf16.mxu0 %v1829
  %2458 = vmatpush1.bf16.msra.mxu0 %v1828
  %2459 = vmatprep.subr.bf16.mxu0 %v1837
  %2460 = vmatpush1.bf16.msra.mxu0 %v1836
  %2461 = vmatprep.subr.bf16.mxu0 %v1845
  %2462 = vmatpush1.bf16.msra.mxu0 %v1844
  %2463 = vmatprep.subr.bf16.mxu0 %v1853
  %2464 = vmatpush1.bf16.msra.mxu0 %v1852
  %2465 = vmatprep.subr.bf16.mxu0 %v1861
  %2466 = vmatpush1.bf16.msra.mxu0 %v1860
  %2467 = vmatprep.subr.bf16.mxu0 %v1869
  %2468 = vmatpush1.bf16.msra.mxu0 %v1868
  %2469 = vmatprep.subr.bf16.mxu0 %v1877
  %2470 = vmatpush1.bf16.msra.mxu0 %v1876
  %2471 = vmatprep.mubr.bf16.mxu0 %v467
  %2472 = vmatmul.mubr.bf16.gmra.mrb[0].mxu0 %v466
  %v2473 = vpop.f32.mrb[0].mxu0
  %v2474 = vadd.f32 %v2431, %v2473
  %v2475 = vpop.f32.mrb[0].mxu0
  %v2476 = vadd.f32 %v2433, %v2475
  %v2477 = vpop.f32.mrb[0].mxu0
  %v2478 = vadd.f32 %v2435, %v2477
  %v2479 = vpop.f32.mrb[0].mxu0
  %v2480 = vadd.f32 %v2437, %v2479
  %2481 = vdwg.mxu0
  %2482 = vmatprep.subr.bf16.mxu0 %v1885
  %2483 = vmatpush1.bf16.msra.mxu0 %v1884
  %2484 = vmatprep.subr.bf16.mxu0 %v1893
  %2485 = vmatpush1.bf16.msra.mxu0 %v1892
  %2486 = vmatprep.subr.bf16.mxu0 %v1901
  %2487 = vmatpush1.bf16.msra.mxu0 %v1900
  %2488 = vmatprep.subr.bf16.mxu0 %v1909
  %2489 = vmatpush1.bf16.msra.mxu0 %v1908
  %2490 = vmatprep.subr.bf16.mxu0 %v1917
  %2491 = vmatpush1.bf16.msra.mxu0 %v1916
  %2492 = vmatprep.subr.bf16.mxu0 %v1925
  %2493 = vmatpush1.bf16.msra.mxu0 %v1924
  %2494 = vmatprep.subr.bf16.mxu0 %v1933
  %2495 = vmatpush1.bf16.msra.mxu0 %v1932
  %2496 = vmatprep.subr.bf16.mxu0 %v1941
  %2497 = vmatpush1.bf16.msra.mxu0 %v1940
  %2498 = vmatprep.subr.bf16.mxu0 %v1949
  %2499 = vmatpush1.bf16.msra.mxu0 %v1948
  %2500 = vmatprep.subr.bf16.mxu0 %v1957
  %2501 = vmatpush1.bf16.msra.mxu0 %v1956
  %2502 = vmatprep.subr.bf16.mxu0 %v1965
  %2503 = vmatpush1.bf16.msra.mxu0 %v1964
  %2504 = vmatprep.subr.bf16.mxu0 %v1973
  %2505 = vmatpush1.bf16.msra.mxu0 %v1972
  %2506 = vmatprep.subr.bf16.mxu0 %v1981
  %2507 = vmatpush1.bf16.msra.mxu0 %v1980
  %2508 = vmatprep.subr.bf16.mxu0 %v1989
  %2509 = vmatpush1.bf16.msra.mxu0 %v1988
  %2510 = vmatprep.subr.bf16.mxu0 %v1997
  %2511 = vmatpush1.bf16.msra.mxu0 %v1996
  %2512 = vmatprep.subr.bf16.mxu0 %v2005
  %2513 = vmatpush1.bf16.msra.mxu0 %v2004
  %2514 = vmatprep.mubr.bf16.mxu0 %v469
  %2515 = vmatmul.mubr.bf16.gmra.mrb[0].mxu0 %v468
  %v2516 = vpop.f32.mrb[0].mxu0
  %v2517 = vadd.f32 %v2474, %v2516
  %v2518 = vpop.f32.mrb[0].mxu0
  %v2519 = vadd.f32 %v2476, %v2518
  %v2520 = vpop.f32.mrb[0].mxu0
  %v2521 = vadd.f32 %v2478, %v2520
  %v2522 = vpop.f32.mrb[0].mxu0
  %v2523 = vadd.f32 %v2480, %v2522
  %2524 = vdwg.mxu0
  %2525 = vmatprep.subr.bf16.mxu0 %v1631
  %2526 = vmatpush1.bf16.msra.mxu0 %v1630
  %2527 = vmatprep.subr.bf16.mxu0 %v1639
  %2528 = vmatpush1.bf16.msra.mxu0 %v1638
  %2529 = vmatprep.subr.bf16.mxu0 %v1647
  %2530 = vmatpush1.bf16.msra.mxu0 %v1646
  %2531 = vmatprep.subr.bf16.mxu0 %v1655
  %2532 = vmatpush1.bf16.msra.mxu0 %v1654
  %2533 = vmatprep.subr.bf16.mxu0 %v1663
  %2534 = vmatpush1.bf16.msra.mxu0 %v1662
  %2535 = vmatprep.subr.bf16.mxu0 %v1671
  %2536 = vmatpush1.bf16.msra.mxu0 %v1670
  %2537 = vmatprep.subr.bf16.mxu0 %v1679
  %2538 = vmatpush1.bf16.msra.mxu0 %v1678
  %2539 = vmatprep.subr.bf16.mxu0 %v1687
  %2540 = vmatpush1.bf16.msra.mxu0 %v1686
  %2541 = vmatprep.subr.bf16.mxu0 %v1695
  %2542 = vmatpush1.bf16.msra.mxu0 %v1694
  %2543 = vmatprep.subr.bf16.mxu0 %v1703
  %2544 = vmatpush1.bf16.msra.mxu0 %v1702
  %2545 = vmatprep.subr.bf16.mxu0 %v1711
  %2546 = vmatpush1.bf16.msra.mxu0 %v1710
  %2547 = vmatprep.subr.bf16.mxu0 %v1719
  %2548 = vmatpush1.bf16.msra.mxu0 %v1718
  %2549 = vmatprep.subr.bf16.mxu0 %v1727
  %2550 = vmatpush1.bf16.msra.mxu0 %v1726
  %2551 = vmatprep.subr.bf16.mxu0 %v1735
  %2552 = vmatpush1.bf16.msra.mxu0 %v1734
  %2553 = vmatprep.subr.bf16.mxu0 %v1743
  %2554 = vmatpush1.bf16.msra.mxu0 %v1742
  %2555 = vmatprep.subr.bf16.mxu0 %v1751
  %2556 = vmatpush1.bf16.msra.mxu0 %v1750
  %2557 = vmatprep.mubr.bf16.mxu0 %v465
  %2558 = vmatmul.mubr.bf16.gmra.mrb[0].mxu0 %v464
  %v2559 = vpop.f32.mrb[0].mxu0
  %v2560 = vadd.f32 %v417, %v2559
  %v2561 = vpop.f32.mrb[0].mxu0
  %v2562 = vadd.f32 %v421, %v2561
  %v2563 = vpop.f32.mrb[0].mxu0
  %v2564 = vadd.f32 %v417, %v2563
  %v2565 = vpop.f32.mrb[0].mxu0
  %v2566 = vadd.f32 %v421, %v2565
  %2567 = vdwg.mxu0
  %2568 = vmatprep.subr.bf16.mxu0 %v1759
  %2569 = vmatpush1.bf16.msra.mxu0 %v1758
  %2570 = vmatprep.subr.bf16.mxu0 %v1767
  %2571 = vmatpush1.bf16.msra.mxu0 %v1766
  %2572 = vmatprep.subr.bf16.mxu0 %v1775
  %2573 = vmatpush1.bf16.msra.mxu0 %v1774
  %2574 = vmatprep.subr.bf16.mxu0 %v1783
  %2575 = vmatpush1.bf16.msra.mxu0 %v1782
  %2576 = vmatprep.subr.bf16.mxu0 %v1791
  %2577 = vmatpush1.bf16.msra.mxu0 %v1790
  %2578 = vmatprep.subr.bf16.mxu0 %v1799
  %2579 = vmatpush1.bf16.msra.mxu0 %v1798
  %2580 = vmatprep.subr.bf16.mxu0 %v1807
  %2581 = vmatpush1.bf16.msra.mxu0 %v1806
  %2582 = vmatprep.subr.bf16.mxu0 %v1815
  %2583 = vmatpush1.bf16.msra.mxu0 %v1814
  %2584 = vmatprep.subr.bf16.mxu0 %v1823
  %2585 = vmatpush1.bf16.msra.mxu0 %v1822
  %2586 = vmatprep.subr.bf16.mxu0 %v1831
  %2587 = vmatpush1.bf16.msra.mxu0 %v1830
  %2588 = vmatprep.subr.bf16.mxu0 %v1839
  %2589 = vmatpush1.bf16.msra.mxu0 %v1838
  %2590 = vmatprep.subr.bf16.mxu0 %v1847
  %2591 = vmatpush1.bf16.msra.mxu0 %v1846
  %2592 = vmatprep.subr.bf16.mxu0 %v1855
  %2593 = vmatpush1.bf16.msra.mxu0 %v1854
  %2594 = vmatprep.subr.bf16.mxu0 %v1863
  %2595 = vmatpush1.bf16.msra.mxu0 %v1862
  %2596 = vmatprep.subr.bf16.mxu0 %v1871
  %2597 = vmatpush1.bf16.msra.mxu0 %v1870
  %2598 = vmatprep.subr.bf16.mxu0 %v1879
  %2599 = vmatpush1.bf16.msra.mxu0 %v1878
  %2600 = vmatprep.mubr.bf16.mxu0 %v467
  %2601 = vmatmul.mubr.bf16.gmra.mrb[0].mxu0 %v466
  %v2602 = vpop.f32.mrb[0].mxu0
  %v2603 = vadd.f32 %v2560, %v2602
  %v2604 = vpop.f32.mrb[0].mxu0
  %v2605 = vadd.f32 %v2562, %v2604
  %v2606 = vpop.f32.mrb[0].mxu0
  %v2607 = vadd.f32 %v2564, %v2606
  %v2608 = vpop.f32.mrb[0].mxu0
  %v2609 = vadd.f32 %v2566, %v2608
  %2610 = vdwg.mxu0
  %2611 = vmatprep.subr.bf16.mxu0 %v1887
  %2612 = vmatpush1.bf16.msra.mxu0 %v1886
  %2613 = vmatprep.subr.bf16.mxu0 %v1895
  %2614 = vmatpush1.bf16.msra.mxu0 %v1894
  %2615 = vmatprep.subr.bf16.mxu0 %v1903
  %2616 = vmatpush1.bf16.msra.mxu0 %v1902
  %2617 = vmatprep.subr.bf16.mxu0 %v1911
  %2618 = vmatpush1.bf16.msra.mxu0 %v1910
  %2619 = vmatprep.subr.bf16.mxu0 %v1919
  %2620 = vmatpush1.bf16.msra.mxu0 %v1918
  %2621 = vmatprep.subr.bf16.mxu0 %v1927
  %2622 = vmatpush1.bf16.msra.mxu0 %v1926
  %2623 = vmatprep.subr.bf16.mxu0 %v1935
  %2624 = vmatpush1.bf16.msra.mxu0 %v1934
  %2625 = vmatprep.subr.bf16.mxu0 %v1943
  %2626 = vmatpush1.bf16.msra.mxu0 %v1942
  %2627 = vmatprep.subr.bf16.mxu0 %v1951
  %2628 = vmatpush1.bf16.msra.mxu0 %v1950
  %2629 = vmatprep.subr.bf16.mxu0 %v1959
  %2630 = vmatpush1.bf16.msra.mxu0 %v1958
  %2631 = vmatprep.subr.bf16.mxu0 %v1967
  %2632 = vmatpush1.bf16.msra.mxu0 %v1966
  %2633 = vmatprep.subr.bf16.mxu0 %v1975
  %2634 = vmatpush1.bf16.msra.mxu0 %v1974
  %2635 = vmatprep.subr.bf16.mxu0 %v1983
  %2636 = vmatpush1.bf16.msra.mxu0 %v1982
  %2637 = vmatprep.subr.bf16.mxu0 %v1991
  %2638 = vmatpush1.bf16.msra.mxu0 %v1990
  %2639 = vmatprep.subr.bf16.mxu0 %v1999
  %2640 = vmatpush1.bf16.msra.mxu0 %v1998
  %2641 = vmatprep.subr.bf16.mxu0 %v2007
  %2642 = vmatpush1.bf16.msra.mxu0 %v2006
  %2643 = vmatprep.mubr.bf16.mxu0 %v469
  %2644 = vmatmul.mubr.bf16.gmra.mrb[0].mxu0 %v468
  %v2645 = vpop.f32.mrb[0].mxu0
  %v2646 = vadd.f32 %v2603, %v2645
  %v2647 = vpop.f32.mrb[0].mxu0
  %v2648 = vadd.f32 %v2605, %v2647
  %v2649 = vpop.f32.mrb[0].mxu0
  %v2650 = vadd.f32 %v2607, %v2649
  %v2651 = vpop.f32.mrb[0].mxu0
  %v2652 = vadd.f32 %v2609, %v2651
  %2653 = vdwg.mxu0
  %2654 = vmatprep.subr.bf16.mxu0 %v1633
  %2655 = vmatpush1.bf16.msra.mxu0 %v1632
  %2656 = vmatprep.subr.bf16.mxu0 %v1641
  %2657 = vmatpush1.bf16.msra.mxu0 %v1640
  %2658 = vmatprep.subr.bf16.mxu0 %v1649
  %2659 = vmatpush1.bf16.msra.mxu0 %v1648
  %2660 = vmatprep.subr.bf16.mxu0 %v1657
  %2661 = vmatpush1.bf16.msra.mxu0 %v1656
  %2662 = vmatprep.subr.bf16.mxu0 %v1665
  %2663 = vmatpush1.bf16.msra.mxu0 %v1664
  %2664 = vmatprep.subr.bf16.mxu0 %v1673
  %2665 = vmatpush1.bf16.msra.mxu0 %v1672
  %2666 = vmatprep.subr.bf16.mxu0 %v1681
  %2667 = vmatpush1.bf16.msra.mxu0 %v1680
  %2668 = vmatprep.subr.bf16.mxu0 %v1689
  %2669 = vmatpush1.bf16.msra.mxu0 %v1688
  %2670 = vmatprep.subr.bf16.mxu0 %v1697
  %2671 = vmatpush1.bf16.msra.mxu0 %v1696
  %2672 = vmatprep.subr.bf16.mxu0 %v1705
  %2673 = vmatpush1.bf16.msra.mxu0 %v1704
  %2674 = vmatprep.subr.bf16.mxu0 %v1713
  %2675 = vmatpush1.bf16.msra.mxu0 %v1712
  %2676 = vmatprep.subr.bf16.mxu0 %v1721
  %2677 = vmatpush1.bf16.msra.mxu0 %v1720
  %2678 = vmatprep.subr.bf16.mxu0 %v1729
  %2679 = vmatpush1.bf16.msra.mxu0 %v1728
  %2680 = vmatprep.subr.bf16.mxu0 %v1737
  %2681 = vmatpush1.bf16.msra.mxu0 %v1736
  %2682 = vmatprep.subr.bf16.mxu0 %v1745
  %2683 = vmatpush1.bf16.msra.mxu0 %v1744
  %2684 = vmatprep.subr.bf16.mxu0 %v1753
  %2685 = vmatpush1.bf16.msra.mxu0 %v1752
  %2686 = vmatprep.mubr.bf16.mxu0 %v465
  %2687 = vmatmul.mubr.bf16.gmra.mrb[0].mxu0 %v464
  %v2688 = vpop.f32.mrb[0].mxu0
  %v2689 = vadd.f32 %v425, %v2688
  %v2690 = vpop.f32.mrb[0].mxu0
  %v2691 = vadd.f32 %v429, %v2690
  %v2692 = vpop.f32.mrb[0].mxu0
  %v2693 = vadd.f32 %v425, %v2692
  %v2694 = vpop.f32.mrb[0].mxu0
  %v2695 = vadd.f32 %v429, %v2694
  %2696 = vdwg.mxu0
  %2697 = vmatprep.subr.bf16.mxu0 %v1761
  %2698 = vmatpush1.bf16.msra.mxu0 %v1760
  %2699 = vmatprep.subr.bf16.mxu0 %v1769
  %2700 = vmatpush1.bf16.msra.mxu0 %v1768
  %2701 = vmatprep.subr.bf16.mxu0 %v1777
  %2702 = vmatpush1.bf16.msra.mxu0 %v1776
  %2703 = vmatprep.subr.bf16.mxu0 %v1785
  %2704 = vmatpush1.bf16.msra.mxu0 %v1784
  %2705 = vmatprep.subr.bf16.mxu0 %v1793
  %2706 = vmatpush1.bf16.msra.mxu0 %v1792
  %2707 = vmatprep.subr.bf16.mxu0 %v1801
  %2708 = vmatpush1.bf16.msra.mxu0 %v1800
  %2709 = vmatprep.subr.bf16.mxu0 %v1809
  %2710 = vmatpush1.bf16.msra.mxu0 %v1808
  %2711 = vmatprep.subr.bf16.mxu0 %v1817
  %2712 = vmatpush1.bf16.msra.mxu0 %v1816
  %2713 = vmatprep.subr.bf16.mxu0 %v1825
  %2714 = vmatpush1.bf16.msra.mxu0 %v1824
  %2715 = vmatprep.subr.bf16.mxu0 %v1833
  %2716 = vmatpush1.bf16.msra.mxu0 %v1832
  %2717 = vmatprep.subr.bf16.mxu0 %v1841
  %2718 = vmatpush1.bf16.msra.mxu0 %v1840
  %2719 = vmatprep.subr.bf16.mxu0 %v1849
  %2720 = vmatpush1.bf16.msra.mxu0 %v1848
  %2721 = vmatprep.subr.bf16.mxu0 %v1857
  %2722 = vmatpush1.bf16.msra.mxu0 %v1856
  %2723 = vmatprep.subr.bf16.mxu0 %v1865
  %2724 = vmatpush1.bf16.msra.mxu0 %v1864
  %2725 = vmatprep.subr.bf16.mxu0 %v1873
  %2726 = vmatpush1.bf16.msra.mxu0 %v1872
  %2727 = vmatprep.subr.bf16.mxu0 %v1881
  %2728 = vmatpush1.bf16.msra.mxu0 %v1880
  %2729 = vmatprep.mubr.bf16.mxu0 %v467
  %2730 = vmatmul.mubr.bf16.gmra.mrb[0].mxu0 %v466
  %v2731 = vpop.f32.mrb[0].mxu0
  %v2732 = vadd.f32 %v2689, %v2731
  %v2733 = vpop.f32.mrb[0].mxu0
  %v2734 = vadd.f32 %v2691, %v2733
  %v2735 = vpop.f32.mrb[0].mxu0
  %v2736 = vadd.f32 %v2693, %v2735
  %v2737 = vpop.f32.mrb[0].mxu0
  %v2738 = vadd.f32 %v2695, %v2737
  %2739 = vdwg.mxu0
  %2740 = vmatprep.subr.bf16.mxu0 %v1889
  %2741 = vmatpush1.bf16.msra.mxu0 %v1888
  %2742 = vmatprep.subr.bf16.mxu0 %v1897
  %2743 = vmatpush1.bf16.msra.mxu0 %v1896
  %2744 = vmatprep.subr.bf16.mxu0 %v1905
  %2745 = vmatpush1.bf16.msra.mxu0 %v1904
  %2746 = vmatprep.subr.bf16.mxu0 %v1913
  %2747 = vmatpush1.bf16.msra.mxu0 %v1912
  %2748 = vmatprep.subr.bf16.mxu0 %v1921
  %2749 = vmatpush1.bf16.msra.mxu0 %v1920
  %2750 = vmatprep.subr.bf16.mxu0 %v1929
  %2751 = vmatpush1.bf16.msra.mxu0 %v1928
  %2752 = vmatprep.subr.bf16.mxu0 %v1937
  %2753 = vmatpush1.bf16.msra.mxu0 %v1936
  %2754 = vmatprep.subr.bf16.mxu0 %v1945
  %2755 = vmatpush1.bf16.msra.mxu0 %v1944
  %2756 = vmatprep.subr.bf16.mxu0 %v1953
  %2757 = vmatpush1.bf16.msra.mxu0 %v1952
  %2758 = vmatprep.subr.bf16.mxu0 %v1961
  %2759 = vmatpush1.bf16.msra.mxu0 %v1960
  %2760 = vmatprep.subr.bf16.mxu0 %v1969
  %2761 = vmatpush1.bf16.msra.mxu0 %v1968
  %2762 = vmatprep.subr.bf16.mxu0 %v1977
  %2763 = vmatpush1.bf16.msra.mxu0 %v1976
  %2764 = vmatprep.subr.bf16.mxu0 %v1985
  %2765 = vmatpush1.bf16.msra.mxu0 %v1984
  %2766 = vmatprep.subr.bf16.mxu0 %v1993
  %2767 = vmatpush1.bf16.msra.mxu0 %v1992
  %2768 = vmatprep.subr.bf16.mxu0 %v2001
  %2769 = vmatpush1.bf16.msra.mxu0 %v2000
  %2770 = vmatprep.subr.bf16.mxu0 %v2009
  %2771 = vmatpush1.bf16.msra.mxu0 %v2008
  %2772 = vmatprep.mubr.bf16.mxu0 %v469
  %2773 = vmatmul.mubr.bf16.gmra.mrb[0].mxu0 %v468
  %v2774 = vpop.f32.mrb[0].mxu0
  %v2775 = vadd.f32 %v2732, %v2774
  %v2776 = vpop.f32.mrb[0].mxu0
  %v2777 = vadd.f32 %v2734, %v2776
  %v2778 = vpop.f32.mrb[0].mxu0
  %v2779 = vadd.f32 %v2736, %v2778
  %v2780 = vpop.f32.mrb[0].mxu0
  %v2781 = vadd.f32 %v2738, %v2780
  %2782 = vdwg.mxu0
  %2783 = vmatprep.subr.bf16.mxu0 %v1635
  %2784 = vmatpush1.bf16.msra.mxu0 %v1634
  %2785 = vmatprep.subr.bf16.mxu0 %v1643
  %2786 = vmatpush1.bf16.msra.mxu0 %v1642
  %2787 = vmatprep.subr.bf16.mxu0 %v1651
  %2788 = vmatpush1.bf16.msra.mxu0 %v1650
  %2789 = vmatprep.subr.bf16.mxu0 %v1659
  %2790 = vmatpush1.bf16.msra.mxu0 %v1658
  %2791 = vmatprep.subr.bf16.mxu0 %v1667
  %2792 = vmatpush1.bf16.msra.mxu0 %v1666
  %2793 = vmatprep.subr.bf16.mxu0 %v1675
  %2794 = vmatpush1.bf16.msra.mxu0 %v1674
  %2795 = vmatprep.subr.bf16.mxu0 %v1683
  %2796 = vmatpush1.bf16.msra.mxu0 %v1682
  %2797 = vmatprep.subr.bf16.mxu0 %v1691
  %2798 = vmatpush1.bf16.msra.mxu0 %v1690
  %2799 = vmatprep.subr.bf16.mxu0 %v1699
  %2800 = vmatpush1.bf16.msra.mxu0 %v1698
  %2801 = vmatprep.subr.bf16.mxu0 %v1707
  %2802 = vmatpush1.bf16.msra.mxu0 %v1706
  %2803 = vmatprep.subr.bf16.mxu0 %v1715
  %2804 = vmatpush1.bf16.msra.mxu0 %v1714
  %2805 = vmatprep.subr.bf16.mxu0 %v1723
  %2806 = vmatpush1.bf16.msra.mxu0 %v1722
  %2807 = vmatprep.subr.bf16.mxu0 %v1731
  %2808 = vmatpush1.bf16.msra.mxu0 %v1730
  %2809 = vmatprep.subr.bf16.mxu0 %v1739
  %2810 = vmatpush1.bf16.msra.mxu0 %v1738
  %2811 = vmatprep.subr.bf16.mxu0 %v1747
  %2812 = vmatpush1.bf16.msra.mxu0 %v1746
  %2813 = vmatprep.subr.bf16.mxu0 %v1755
  %2814 = vmatpush1.bf16.msra.mxu0 %v1754
  %2815 = vmatprep.mubr.bf16.mxu0 %v465
  %2816 = vmatmul.mubr.bf16.gmra.mrb[0].mxu0 %v464
  %v2817 = vpop.f32.mrb[0].mxu0
  %v2818 = vadd.f32 %v433, %v2817
  %v2819 = vpop.f32.mrb[0].mxu0
  %v2820 = vadd.f32 %v437, %v2819
  %v2821 = vpop.f32.mrb[0].mxu0
  %v2822 = vadd.f32 %v433, %v2821
  %v2823 = vpop.f32.mrb[0].mxu0
  %v2824 = vadd.f32 %v437, %v2823
  %2825 = vdwg.mxu0
  %2826 = vmatprep.subr.bf16.mxu0 %v1763
  %2827 = vmatpush1.bf16.msra.mxu0 %v1762
  %2828 = vmatprep.subr.bf16.mxu0 %v1771
  %2829 = vmatpush1.bf16.msra.mxu0 %v1770
  %2830 = vmatprep.subr.bf16.mxu0 %v1779
  %2831 = vmatpush1.bf16.msra.mxu0 %v1778
  %2832 = vmatprep.subr.bf16.mxu0 %v1787
  %2833 = vmatpush1.bf16.msra.mxu0 %v1786
  %2834 = vmatprep.subr.bf16.mxu0 %v1795
  %2835 = vmatpush1.bf16.msra.mxu0 %v1794
  %2836 = vmatprep.subr.bf16.mxu0 %v1803
  %2837 = vmatpush1.bf16.msra.mxu0 %v1802
  %2838 = vmatprep.subr.bf16.mxu0 %v1811
  %2839 = vmatpush1.bf16.msra.mxu0 %v1810
  %2840 = vmatprep.subr.bf16.mxu0 %v1819
  %2841 = vmatpush1.bf16.msra.mxu0 %v1818
  %2842 = vmatprep.subr.bf16.mxu0 %v1827
  %2843 = vmatpush1.bf16.msra.mxu0 %v1826
  %2844 = vmatprep.subr.bf16.mxu0 %v1835
  %2845 = vmatpush1.bf16.msra.mxu0 %v1834
  %2846 = vmatprep.subr.bf16.mxu0 %v1843
  %2847 = vmatpush1.bf16.msra.mxu0 %v1842
  %2848 = vmatprep.subr.bf16.mxu0 %v1851
  %2849 = vmatpush1.bf16.msra.mxu0 %v1850
  %2850 = vmatprep.subr.bf16.mxu0 %v1859
  %2851 = vmatpush1.bf16.msra.mxu0 %v1858
  %2852 = vmatprep.subr.bf16.mxu0 %v1867
  %2853 = vmatpush1.bf16.msra.mxu0 %v1866
  %2854 = vmatprep.subr.bf16.mxu0 %v1875
  %2855 = vmatpush1.bf16.msra.mxu0 %v1874
  %2856 = vmatprep.subr.bf16.mxu0 %v1883
  %2857 = vmatpush1.bf16.msra.mxu0 %v1882
  %2858 = vmatprep.mubr.bf16.mxu0 %v467
  %2859 = vmatmul.mubr.bf16.gmra.mrb[0].mxu0 %v466
  %v2860 = vpop.f32.mrb[0].mxu0
  %v2861 = vadd.f32 %v2818, %v2860
  %v2862 = vpop.f32.mrb[0].mxu0
  %v2863 = vadd.f32 %v2820, %v2862
  %v2864 = vpop.f32.mrb[0].mxu0
  %v2865 = vadd.f32 %v2822, %v2864
  %v2866 = vpop.f32.mrb[0].mxu0
  %v2867 = vadd.f32 %v2824, %v2866
  %2868 = vdwg.mxu0
  %2869 = vmatprep.subr.bf16.mxu0 %v1891
  %2870 = vmatpush1.bf16.msra.mxu0 %v1890
  %2871 = vmatprep.subr.bf16.mxu0 %v1899
  %2872 = vmatpush1.bf16.msra.mxu0 %v1898
  %2873 = vmatprep.subr.bf16.mxu0 %v1907
  %2874 = vmatpush1.bf16.msra.mxu0 %v1906
  %2875 = vmatprep.subr.bf16.mxu0 %v1915
  %2876 = vmatpush1.bf16.msra.mxu0 %v1914
  %2877 = vmatprep.subr.bf16.mxu0 %v1923
  %2878 = vmatpush1.bf16.msra.mxu0 %v1922
  %2879 = vmatprep.subr.bf16.mxu0 %v1931
  %2880 = vmatpush1.bf16.msra.mxu0 %v1930
  %2881 = vmatprep.subr.bf16.mxu0 %v1939
  %2882 = vmatpush1.bf16.msra.mxu0 %v1938
  %2883 = vmatprep.subr.bf16.mxu0 %v1947
  %2884 = vmatpush1.bf16.msra.mxu0 %v1946
  %2885 = vmatprep.subr.bf16.mxu0 %v1955
  %2886 = vmatpush1.bf16.msra.mxu0 %v1954
  %2887 = vmatprep.subr.bf16.mxu0 %v1963
  %2888 = vmatpush1.bf16.msra.mxu0 %v1962
  %2889 = vmatprep.subr.bf16.mxu0 %v1971
  %2890 = vmatpush1.bf16.msra.mxu0 %v1970
  %2891 = vmatprep.subr.bf16.mxu0 %v1979
  %2892 = vmatpush1.bf16.msra.mxu0 %v1978
  %2893 = vmatprep.subr.bf16.mxu0 %v1987
  %2894 = vmatpush1.bf16.msra.mxu0 %v1986
  %2895 = vmatprep.subr.bf16.mxu0 %v1995
  %2896 = vmatpush1.bf16.msra.mxu0 %v1994
  %2897 = vmatprep.subr.bf16.mxu0 %v2003
  %2898 = vmatpush1.bf16.msra.mxu0 %v2002
  %2899 = vmatprep.subr.bf16.mxu0 %v2011
  %2900 = vmatpush1.bf16.msra.mxu0 %v2010
  %2901 = vmatprep.mubr.bf16.mxu0 %v469
  %2902 = vmatmul.mubr.bf16.gmra.mrb[0].mxu0 %v468
  %v2903 = vpop.f32.mrb[0].mxu0
  %v2904 = vadd.f32 %v2861, %v2903
  %v2905 = vpop.f32.mrb[0].mxu0
  %v2906 = vadd.f32 %v2863, %v2905
  %v2907 = vpop.f32.mrb[0].mxu0
  %v2908 = vadd.f32 %v2865, %v2907
  %v2909 = vpop.f32.mrb[0].mxu0
  %v2910 = vadd.f32 %v2867, %v2909
  %2911 = vdwg.mxu0
  %2912 = vst [vmem:[%s3] sm:$0xff] %v2517
  %2913 = vst [vmem:[%s3 + $0x8] sm:$0xff] %v2519
  %2914 = vst [vmem:[%s3 + $0x10] sm:$0xff] %v2646
  %2915 = vst [vmem:[%s3 + $0x18] sm:$0xff] %v2648
  %2916 = vst [vmem:[%s3 + $0x20] sm:$0xff] %v2775
  %2917 = vst [vmem:[%s3 + $0x28] sm:$0xff] %v2777
  %2918 = vst [vmem:[%s3 + $0x30] sm:$0xff] %v2904
  %2919 = vst [vmem:[%s3 + $0x38] sm:$0xff] %v2906
  %2920 = vst [vmem:[%s3 + $0x40] sm:$0xff] %v2521
  %2921 = vst [vmem:[%s3 + $0x48] sm:$0xff] %v2523
  %2922 = vst [vmem:[%s3 + $0x50] sm:$0xff] %v2650
  %2923 = vst [vmem:[%s3 + $0x58] sm:$0xff] %v2652
  %2924 = vst [vmem:[%s3 + $0x60] sm:$0xff] %v2779
  %2925 = vst [vmem:[%s3 + $0x68] sm:$0xff] %v2781
  %2926 = vst [vmem:[%s3 + $0x70] sm:$0xff] %v2908
  %2927 = vst [vmem:[%s3 + $0x78] sm:$0xff] %v2910
  // Predicated region
  $region14: #{lstm_classifier_forward.2} parent=0 // pred_check
    _
  $region15: #{lstm_classifier_forward.2} parent=0 // pred_check_branch
    %2929 = sbr.rel (0) target = $region17
  $region16: #{lstm_classifier_forward.2} parent=0 // pred_region
    _
  $region17: #{lstm_classifier_forward.2} parent=0 // pred_fallthru
    _
  // Predicated region
  $region18: #{lstm_classifier_forward.2} parent=0 // pred_check
    _
  $region19: #{lstm_classifier_forward.2} parent=0 // pred_check_branch
    %2931 = sbr.rel (0) target = $region21
  $region20: #{lstm_classifier_forward.2} parent=0 // pred_region
    _
  $region21: #{lstm_classifier_forward.2} parent=0 // pred_fallthru
    _

// kernel: lstm_classifier_forward.3
$region0: #{lstm_classifier_forward.3}
  #allocation0 [shape = 'u32[]', space=smem, size = 0x4, offset = 0x4, fixed_abs, tag = 'smem constant byte address 0x4 - core index']
  #allocation1 [shape = 'u32[144,128]{1,0:T(1,128)}', space=vmem, size = 0x12000, scoped, tag = 'internal scratch']
  #allocation2 [shape = 'f32[2,256]{1,0:T(2,128)}', space=vmem, size = 0x800, scoped, tag = 'scratch operand']
  #allocation3 [shape = 'f32[2,256]{1,0:T(2,128)}', space=vmem, size = 0x800, scoped, tag = 'scratch operand']
  %s0 = inlined_call_operand.vmem [shape: f32[2,8,1024], index: 0, kind: input, shape index: {}]
  %s1 = inlined_call_operand.vmem [shape: bf16[256,1024], index: 1, kind: input, shape index: {}]
  %s2 = inlined_call_operand.vmem [shape: f32[256,128], index: 2, kind: input, shape index: {}]
  %s3 = inlined_call_operand.vmem [shape: f32[1,128], index: 3, kind: input, shape index: {}]
  %s4 = inlined_call_operand.hbm [shape: f32[1,2,128], index: 4, kind: output, shape index: {}]
  %s5 = sld [smem:[#allocation0]]
  $region34: #{lstm_classifier_forward.3} parent=0
    _
  %s7 = ssub.s32 1, %s5
  %s8 = scalar_select 0, %s7, %s5
  $region1: #{lstm_classifier_forward.3} parent=0
    #allocation4 [shape = 'u8[1024]{0}', space=vmem, size = 0x400, scoped, tag = 'output window, operand 0, single buffered']
    #allocation5 [shape = 's32[1]{0}', space=sflag, size = 0x4, scoped, tag = 'scoped memory for lstm_classifier_forward.3']
    %9 = vsyncpa [#allocation5], 0
    // Predicated region
    $region2: #{lstm_classifier_forward.3} parent=1 // pred_check
      _
    $region3: #{lstm_classifier_forward.3} parent=1 // pred_check_branch
      %11 = sbr.rel (0) target = $region5
    $region4: #{lstm_classifier_forward.3} parent=1 // pred_region
      _
    $region5: #{lstm_classifier_forward.3} parent=1 // pred_fallthru
      _
    // Predicated region
    $region6: #{lstm_classifier_forward.3} parent=1 // pred_check
      _
    $region7: #{lstm_classifier_forward.3} parent=1 // pred_check_branch
      %13 = sbr.rel (0) target = $region9
    $region8: #{lstm_classifier_forward.3} parent=1 // pred_region
      _
    $region9: #{lstm_classifier_forward.3} parent=1 // pred_fallthru
      _
    // Predicated region
    $region10: #{lstm_classifier_forward.3} parent=1 // pred_check
      _
    $region11: #{lstm_classifier_forward.3} parent=1 // pred_check_branch
      %15 = sbr.rel (0) target = $region13
    $region12: #{lstm_classifier_forward.3} parent=1 // pred_region
      _
    $region13: #{lstm_classifier_forward.3} parent=1 // pred_fallthru
      _
    // Predicated region
    $region14: #{lstm_classifier_forward.3} parent=1 // pred_check
      _
    $region15: #{lstm_classifier_forward.3} parent=1 // pred_check_branch
      %17 = sbr.rel (0) target = $region17
    $region16: #{lstm_classifier_forward.3} parent=1 // pred_region
      _
    $region17: #{lstm_classifier_forward.3} parent=1 // pred_fallthru
      _
    %p18 = scmp.eq.s32.totalorder 0, 0
    // Predicated region
    $region18: #{lstm_classifier_forward.3} parent=1 // pred_check
      %p19 = pneg %p18
    $region19: #{lstm_classifier_forward.3} parent=1 // pred_check_branch
      %21 = sbr.rel (%p19) target = $region21
    $region20: #{lstm_classifier_forward.3} parent=1 // pred_region
      %22 = vst [vmem:[#allocation2] sm:$0xf] 0.0
      %23 = vst [vmem:[#allocation3] sm:$0xf] 0.0
    $region21: #{lstm_classifier_forward.3} parent=1 // pred_fallthru
      _
    %v24 = vld [vmem:[#allocation2] sm:$0xf]
    %v25 = vld [vmem:[#allocation3] sm:$0xf]
    %v26 = vld [vmem:[%s1] sm:$0xff]
    %v27 = vld [vmem:[%s1 + $0x8] sm:$0xff]
    %v28 = vld [vmem:[%s1 + $0x10] sm:$0xff]
    %v29 = vld [vmem:[%s1 + $0x18] sm:$0xff]
    %v30 = vld [vmem:[%s1 + $0x20] sm:$0xff]
    %v31 = vld [vmem:[%s1 + $0x28] sm:$0xff]
    %v32 = vld [vmem:[%s1 + $0x30] sm:$0xff]
    %v33 = vld [vmem:[%s1 + $0x38] sm:$0xff]
    %v34 = vld [vmem:[%s1 + $0x40] sm:$0xff]
    %v35 = vld [vmem:[%s1 + $0x48] sm:$0xff]
    %v36 = vld [vmem:[%s1 + $0x50] sm:$0xff]
    %v37 = vld [vmem:[%s1 + $0x58] sm:$0xff]
    %v38 = vld [vmem:[%s1 + $0x60] sm:$0xff]
    %v39 = vld [vmem:[%s1 + $0x68] sm:$0xff]
    %v40 = vld [vmem:[%s1 + $0x70] sm:$0xff]
    %v41 = vld [vmem:[%s1 + $0x78] sm:$0xff]
    %v42 = vld [vmem:[%s1 + $0x80] sm:$0xff]
    %v43 = vld [vmem:[%s1 + $0x88] sm:$0xff]
    %v44 = vld [vmem:[%s1 + $0x90] sm:$0xff]
    %v45 = vld [vmem:[%s1 + $0x98] sm:$0xff]
    %v46 = vld [vmem:[%s1 + $0xa0] sm:$0xff]
    %v47 = vld [vmem:[%s1 + $0xa8] sm:$0xff]
    %v48 = vld [vmem:[%s1 + $0xb0] sm:$0xff]
    %v49 = vld [vmem:[%s1 + $0xb8] sm:$0xff]
    %v50 = vld [vmem:[%s1 + $0xc0] sm:$0xff]
    %v51 = vld [vmem:[%s1 + $0xc8] sm:$0xff]
    %v52 = vld [vmem:[%s1 + $0xd0] sm:$0xff]
    %v53 = vld [vmem:[%s1 + $0xd8] sm:$0xff]
    %v54 = vld [vmem:[%s1 + $0xe0] sm:$0xff]
    %v55 = vld [vmem:[%s1 + $0xe8] sm:$0xff]
    %v56 = vld [vmem:[%s1 + $0xf0] sm:$0xff]
    %v57 = vld [vmem:[%s1 + $0xf8] sm:$0xff]
    %v58 = vld [vmem:[%s1 + $0x100] sm:$0xff]
    %v59 = vld [vmem:[%s1 + $0x108] sm:$0xff]
    %v60 = vld [vmem:[%s1 + $0x110] sm:$0xff]
    %v61 = vld [vmem:[%s1 + $0x118] sm:$0xff]
    %v62 = vld [vmem:[%s1 + $0x120] sm:$0xff]
    %v63 = vld [vmem:[%s1 + $0x128] sm:$0xff]
    %v64 = vld [vmem:[%s1 + $0x130] sm:$0xff]
    %v65 = vld [vmem:[%s1 + $0x138] sm:$0xff]
    %v66 = vld [vmem:[%s1 + $0x140] sm:$0xff]
    %v67 = vld [vmem:[%s1 + $0x148] sm:$0xff]
    %v68 = vld [vmem:[%s1 + $0x150] sm:$0xff]
    %v69 = vld [vmem:[%s1 + $0x158] sm:$0xff]
    %v70 = vld [vmem:[%s1 + $0x160] sm:$0xff]
    %v71 = vld [vmem:[%s1 + $0x168] sm:$0xff]
    %v72 = vld [vmem:[%s1 + $0x170] sm:$0xff]
    %v73 = vld [vmem:[%s1 + $0x178] sm:$0xff]
    %v74 = vld [vmem:[%s1 + $0x180] sm:$0xff]
    %v75 = vld [vmem:[%s1 + $0x188] sm:$0xff]
    %v76 = vld [vmem:[%s1 + $0x190] sm:$0xff]
    %v77 = vld [vmem:[%s1 + $0x198] sm:$0xff]
    %v78 = vld [vmem:[%s1 + $0x1a0] sm:$0xff]
    %v79 = vld [vmem:[%s1 + $0x1a8] sm:$0xff]
    %v80 = vld [vmem:[%s1 + $0x1b0] sm:$0xff]
    %v81 = vld [vmem:[%s1 + $0x1b8] sm:$0xff]
    %v82 = vld [vmem:[%s1 + $0x1c0] sm:$0xff]
    %v83 = vld [vmem:[%s1 + $0x1c8] sm:$0xff]
    %v84 = vld [vmem:[%s1 + $0x1d0] sm:$0xff]
    %v85 = vld [vmem:[%s1 + $0x1d8] sm:$0xff]
    %v86 = vld [vmem:[%s1 + $0x1e0] sm:$0xff]
    %v87 = vld [vmem:[%s1 + $0x1e8] sm:$0xff]
    %v88 = vld [vmem:[%s1 + $0x1f0] sm:$0xff]
    %v89 = vld [vmem:[%s1 + $0x1f8] sm:$0xff]
    %v90 = vld [vmem:[%s1 + $0x200] sm:$0xff]
    %v91 = vld [vmem:[%s1 + $0x208] sm:$0xff]
    %v92 = vld [vmem:[%s1 + $0x210] sm:$0xff]
    %v93 = vld [vmem:[%s1 + $0x218] sm:$0xff]
    %v94 = vld [vmem:[%s1 + $0x220] sm:$0xff]
    %v95 = vld [vmem:[%s1 + $0x228] sm:$0xff]
    %v96 = vld [vmem:[%s1 + $0x230] sm:$0xff]
    %v97 = vld [vmem:[%s1 + $0x238] sm:$0xff]
    %v98 = vld [vmem:[%s1 + $0x240] sm:$0xff]
    %v99 = vld [vmem:[%s1 + $0x248] sm:$0xff]
    %v100 = vld [vmem:[%s1 + $0x250] sm:$0xff]
    %v101 = vld [vmem:[%s1 + $0x258] sm:$0xff]
    %v102 = vld [vmem:[%s1 + $0x260] sm:$0xff]
    %v103 = vld [vmem:[%s1 + $0x268] sm:$0xff]
    %v104 = vld [vmem:[%s1 + $0x270] sm:$0xff]
    %v105 = vld [vmem:[%s1 + $0x278] sm:$0xff]
    %v106 = vld [vmem:[%s1 + $0x280] sm:$0xff]
    %v107 = vld [vmem:[%s1 + $0x288] sm:$0xff]
    %v108 = vld [vmem:[%s1 + $0x290] sm:$0xff]
    %v109 = vld [vmem:[%s1 + $0x298] sm:$0xff]
    %v110 = vld [vmem:[%s1 + $0x2a0] sm:$0xff]
    %v111 = vld [vmem:[%s1 + $0x2a8] sm:$0xff]
    %v112 = vld [vmem:[%s1 + $0x2b0] sm:$0xff]
    %v113 = vld [vmem:[%s1 + $0x2b8] sm:$0xff]
    %v114 = vld [vmem:[%s1 + $0x2c0] sm:$0xff]
    %v115 = vld [vmem:[%s1 + $0x2c8] sm:$0xff]
    %v116 = vld [vmem:[%s1 + $0x2d0] sm:$0xff]
    %v117 = vld [vmem:[%s1 + $0x2d8] sm:$0xff]
    %v118 = vld [vmem:[%s1 + $0x2e0] sm:$0xff]
    %v119 = vld [vmem:[%s1 + $0x2e8] sm:$0xff]
    %v120 = vld [vmem:[%s1 + $0x2f0] sm:$0xff]
    %v121 = vld [vmem:[%s1 + $0x2f8] sm:$0xff]
    %v122 = vld [vmem:[%s1 + $0x300] sm:$0xff]
    %v123 = vld [vmem:[%s1 + $0x308] sm:$0xff]
    %v124 = vld [vmem:[%s1 + $0x310] sm:$0xff]
    %v125 = vld [vmem:[%s1 + $0x318] sm:$0xff]
    %v126 = vld [vmem:[%s1 + $0x320] sm:$0xff]
    %v127 = vld [vmem:[%s1 + $0x328] sm:$0xff]
    %v128 = vld [vmem:[%s1 + $0x330] sm:$0xff]
    %v129 = vld [vmem:[%s1 + $0x338] sm:$0xff]
    %v130 = vld [vmem:[%s1 + $0x340] sm:$0xff]
    %v131 = vld [vmem:[%s1 + $0x348] sm:$0xff]
    %v132 = vld [vmem:[%s1 + $0x350] sm:$0xff]
    %v133 = vld [vmem:[%s1 + $0x358] sm:$0xff]
    %v134 = vld [vmem:[%s1 + $0x360] sm:$0xff]
    %v135 = vld [vmem:[%s1 + $0x368] sm:$0xff]
    %v136 = vld [vmem:[%s1 + $0x370] sm:$0xff]
    %v137 = vld [vmem:[%s1 + $0x378] sm:$0xff]
    %v138 = vld [vmem:[%s1 + $0x380] sm:$0xff]
    %v139 = vld [vmem:[%s1 + $0x388] sm:$0xff]
    %v140 = vld [vmem:[%s1 + $0x390] sm:$0xff]
    %v141 = vld [vmem:[%s1 + $0x398] sm:$0xff]
    %v142 = vld [vmem:[%s1 + $0x3a0] sm:$0xff]
    %v143 = vld [vmem:[%s1 + $0x3a8] sm:$0xff]
    %v144 = vld [vmem:[%s1 + $0x3b0] sm:$0xff]
    %v145 = vld [vmem:[%s1 + $0x3b8] sm:$0xff]
    %v146 = vld [vmem:[%s1 + $0x3c0] sm:$0xff]
    %v147 = vld [vmem:[%s1 + $0x3c8] sm:$0xff]
    %v148 = vld [vmem:[%s1 + $0x3d0] sm:$0xff]
    %v149 = vld [vmem:[%s1 + $0x3d8] sm:$0xff]
    %v150 = vld [vmem:[%s1 + $0x3e0] sm:$0xff]
    %v151 = vld [vmem:[%s1 + $0x3e8] sm:$0xff]
    %v152 = vld [vmem:[%s1 + $0x3f0] sm:$0xff]
    %v153 = vld [vmem:[%s1 + $0x3f8] sm:$0xff]
    %v154 = vld [vmem:[%s0] ss:$8 sm:$0xf]
    %v155 = vld [vmem:[%s0] ss:$8 sm:$0xf0]
    %v156 = vor.u32 %v154, %v155
    %s157 = scalar_lea.vmem %s0, 64
    %v158 = vld [vmem:[%s157] ss:$8 sm:$0xf]
    %v159 = vld [vmem:[%s157] ss:$8 sm:$0xf0]
    %v160 = vor.u32 %v158, %v159
    %v163 = vunpack.c.l.s4 1983009808
    %v164 = vunpack.c.0.s8 %v163
    %v165 = vlaneseq
    %v166 = vshrl.u32 %v165, 7
    %v167 = vsub.s32 %v164, %v166
    %v168 = vrot.slane %v24, %v167
    %v169 = vcombine.high %v168, %v168
    %v172 = vpack.c.bf16 %v168, %v168
    %v173 = vpack.c.bf16 %v169, %v169
    %v302 = vunpack.c.l.b16 %v26
    %v303 = vunpack.c.h.b16 %v26
    %v304 = vunpack.c.l.b16 %v27
    %v305 = vunpack.c.h.b16 %v27
    %v306 = vunpack.c.l.b16 %v28
    %v307 = vunpack.c.h.b16 %v28
    %v308 = vunpack.c.l.b16 %v29
    %v309 = vunpack.c.h.b16 %v29
    %v310 = vunpack.c.l.b16 %v30
    %v311 = vunpack.c.h.b16 %v30
    %v312 = vunpack.c.l.b16 %v31
    %v313 = vunpack.c.h.b16 %v31
    %v314 = vunpack.c.l.b16 %v32
    %v315 = vunpack.c.h.b16 %v32
    %v316 = vunpack.c.l.b16 %v33
    %v317 = vunpack.c.h.b16 %v33
    %v318 = vunpack.c.l.b16 %v34
    %v319 = vunpack.c.h.b16 %v34
    %v320 = vunpack.c.l.b16 %v35
    %v321 = vunpack.c.h.b16 %v35
    %v322 = vunpack.c.l.b16 %v36
    %v323 = vunpack.c.h.b16 %v36
    %v324 = vunpack.c.l.b16 %v37
    %v325 = vunpack.c.h.b16 %v37
    %v326 = vunpack.c.l.b16 %v38
    %v327 = vunpack.c.h.b16 %v38
    %v328 = vunpack.c.l.b16 %v39
    %v329 = vunpack.c.h.b16 %v39
    %v330 = vunpack.c.l.b16 %v40
    %v331 = vunpack.c.h.b16 %v40
    %v332 = vunpack.c.l.b16 %v41
    %v333 = vunpack.c.h.b16 %v41
    %v334 = vunpack.c.l.b16 %v42
    %v335 = vunpack.c.h.b16 %v42
    %v336 = vunpack.c.l.b16 %v43
    %v337 = vunpack.c.h.b16 %v43
    %v338 = vunpack.c.l.b16 %v44
    %v339 = vunpack.c.h.b16 %v44
    %v340 = vunpack.c.l.b16 %v45
    %v341 = vunpack.c.h.b16 %v45
    %v342 = vunpack.c.l.b16 %v46
    %v343 = vunpack.c.h.b16 %v46
    %v344 = vunpack.c.l.b16 %v47
    %v345 = vunpack.c.h.b16 %v47
    %v346 = vunpack.c.l.b16 %v48
    %v347 = vunpack.c.h.b16 %v48
    %v348 = vunpack.c.l.b16 %v49
    %v349 = vunpack.c.h.b16 %v49
    %v350 = vunpack.c.l.b16 %v50
    %v351 = vunpack.c.h.b16 %v50
    %v352 = vunpack.c.l.b16 %v51
    %v353 = vunpack.c.h.b16 %v51
    %v354 = vunpack.c.l.b16 %v52
    %v355 = vunpack.c.h.b16 %v52
    %v356 = vunpack.c.l.b16 %v53
    %v357 = vunpack.c.h.b16 %v53
    %v358 = vunpack.c.l.b16 %v54
    %v359 = vunpack.c.h.b16 %v54
    %v360 = vunpack.c.l.b16 %v55
    %v361 = vunpack.c.h.b16 %v55
    %v362 = vunpack.c.l.b16 %v56
    %v363 = vunpack.c.h.b16 %v56
    %v364 = vunpack.c.l.b16 %v57
    %v365 = vunpack.c.h.b16 %v57
    %v366 = vunpack.c.l.b16 %v58
    %v367 = vunpack.c.h.b16 %v58
    %v368 = vunpack.c.l.b16 %v59
    %v369 = vunpack.c.h.b16 %v59
    %v370 = vunpack.c.l.b16 %v60
    %v371 = vunpack.c.h.b16 %v60
    %v372 = vunpack.c.l.b16 %v61
    %v373 = vunpack.c.h.b16 %v61
    %v374 = vunpack.c.l.b16 %v62
    %v375 = vunpack.c.h.b16 %v62
    %v376 = vunpack.c.l.b16 %v63
    %v377 = vunpack.c.h.b16 %v63
    %v378 = vunpack.c.l.b16 %v64
    %v379 = vunpack.c.h.b16 %v64
    %v380 = vunpack.c.l.b16 %v65
    %v381 = vunpack.c.h.b16 %v65
    %v382 = vunpack.c.l.b16 %v66
    %v383 = vunpack.c.h.b16 %v66
    %v384 = vunpack.c.l.b16 %v67
    %v385 = vunpack.c.h.b16 %v67
    %v386 = vunpack.c.l.b16 %v68
    %v387 = vunpack.c.h.b16 %v68
    %v388 = vunpack.c.l.b16 %v69
    %v389 = vunpack.c.h.b16 %v69
    %v390 = vunpack.c.l.b16 %v70
    %v391 = vunpack.c.h.b16 %v70
    %v392 = vunpack.c.l.b16 %v71
    %v393 = vunpack.c.h.b16 %v71
    %v394 = vunpack.c.l.b16 %v72
    %v395 = vunpack.c.h.b16 %v72
    %v396 = vunpack.c.l.b16 %v73
    %v397 = vunpack.c.h.b16 %v73
    %v398 = vunpack.c.l.b16 %v74
    %v399 = vunpack.c.h.b16 %v74
    %v400 = vunpack.c.l.b16 %v75
    %v401 = vunpack.c.h.b16 %v75
    %v402 = vunpack.c.l.b16 %v76
    %v403 = vunpack.c.h.b16 %v76
    %v404 = vunpack.c.l.b16 %v77
    %v405 = vunpack.c.h.b16 %v77
    %v406 = vunpack.c.l.b16 %v78
    %v407 = vunpack.c.h.b16 %v78
    %v408 = vunpack.c.l.b16 %v79
    %v409 = vunpack.c.h.b16 %v79
    %v410 = vunpack.c.l.b16 %v80
    %v411 = vunpack.c.h.b16 %v80
    %v412 = vunpack.c.l.b16 %v81
    %v413 = vunpack.c.h.b16 %v81
    %v414 = vunpack.c.l.b16 %v82
    %v415 = vunpack.c.h.b16 %v82
    %v416 = vunpack.c.l.b16 %v83
    %v417 = vunpack.c.h.b16 %v83
    %v418 = vunpack.c.l.b16 %v84
    %v419 = vunpack.c.h.b16 %v84
    %v420 = vunpack.c.l.b16 %v85
    %v421 = vunpack.c.h.b16 %v85
    %v422 = vunpack.c.l.b16 %v86
    %v423 = vunpack.c.h.b16 %v86
    %v424 = vunpack.c.l.b16 %v87
    %v425 = vunpack.c.h.b16 %v87
    %v426 = vunpack.c.l.b16 %v88
    %v427 = vunpack.c.h.b16 %v88
    %v428 = vunpack.c.l.b16 %v89
    %v429 = vunpack.c.h.b16 %v89
    %v430 = vunpack.c.l.b16 %v90
    %v431 = vunpack.c.h.b16 %v90
    %v432 = vunpack.c.l.b16 %v91
    %v433 = vunpack.c.h.b16 %v91
    %v434 = vunpack.c.l.b16 %v92
    %v435 = vunpack.c.h.b16 %v92
    %v436 = vunpack.c.l.b16 %v93
    %v437 = vunpack.c.h.b16 %v93
    %v438 = vunpack.c.l.b16 %v94
    %v439 = vunpack.c.h.b16 %v94
    %v440 = vunpack.c.l.b16 %v95
    %v441 = vunpack.c.h.b16 %v95
    %v442 = vunpack.c.l.b16 %v96
    %v443 = vunpack.c.h.b16 %v96
    %v444 = vunpack.c.l.b16 %v97
    %v445 = vunpack.c.h.b16 %v97
    %v446 = vunpack.c.l.b16 %v98
    %v447 = vunpack.c.h.b16 %v98
    %v448 = vunpack.c.l.b16 %v99
    %v449 = vunpack.c.h.b16 %v99
    %v450 = vunpack.c.l.b16 %v100
    %v451 = vunpack.c.h.b16 %v100
    %v452 = vunpack.c.l.b16 %v101
    %v453 = vunpack.c.h.b16 %v101
    %v454 = vunpack.c.l.b16 %v102
    %v455 = vunpack.c.h.b16 %v102
    %v456 = vunpack.c.l.b16 %v103
    %v457 = vunpack.c.h.b16 %v103
    %v458 = vunpack.c.l.b16 %v104
    %v459 = vunpack.c.h.b16 %v104
    %v460 = vunpack.c.l.b16 %v105
    %v461 = vunpack.c.h.b16 %v105
    %v462 = vunpack.c.l.b16 %v106
    %v463 = vunpack.c.h.b16 %v106
    %v464 = vunpack.c.l.b16 %v107
    %v465 = vunpack.c.h.b16 %v107
    %v466 = vunpack.c.l.b16 %v108
    %v467 = vunpack.c.h.b16 %v108
    %v468 = vunpack.c.l.b16 %v109
    %v469 = vunpack.c.h.b16 %v109
    %v470 = vunpack.c.l.b16 %v110
    %v471 = vunpack.c.h.b16 %v110
    %v472 = vunpack.c.l.b16 %v111
    %v473 = vunpack.c.h.b16 %v111
    %v474 = vunpack.c.l.b16 %v112
    %v475 = vunpack.c.h.b16 %v112
    %v476 = vunpack.c.l.b16 %v113
    %v477 = vunpack.c.h.b16 %v113
    %v478 = vunpack.c.l.b16 %v114
    %v479 = vunpack.c.h.b16 %v114
    %v480 = vunpack.c.l.b16 %v115
    %v481 = vunpack.c.h.b16 %v115
    %v482 = vunpack.c.l.b16 %v116
    %v483 = vunpack.c.h.b16 %v116
    %v484 = vunpack.c.l.b16 %v117
    %v485 = vunpack.c.h.b16 %v117
    %v486 = vunpack.c.l.b16 %v118
    %v487 = vunpack.c.h.b16 %v118
    %v488 = vunpack.c.l.b16 %v119
    %v489 = vunpack.c.h.b16 %v119
    %v490 = vunpack.c.l.b16 %v120
    %v491 = vunpack.c.h.b16 %v120
    %v492 = vunpack.c.l.b16 %v121
    %v493 = vunpack.c.h.b16 %v121
    %v494 = vunpack.c.l.b16 %v122
    %v495 = vunpack.c.h.b16 %v122
    %v496 = vunpack.c.l.b16 %v123
    %v497 = vunpack.c.h.b16 %v123
    %v498 = vunpack.c.l.b16 %v124
    %v499 = vunpack.c.h.b16 %v124
    %v500 = vunpack.c.l.b16 %v125
    %v501 = vunpack.c.h.b16 %v125
    %v502 = vunpack.c.l.b16 %v126
    %v503 = vunpack.c.h.b16 %v126
    %v504 = vunpack.c.l.b16 %v127
    %v505 = vunpack.c.h.b16 %v127
    %v506 = vunpack.c.l.b16 %v128
    %v507 = vunpack.c.h.b16 %v128
    %v508 = vunpack.c.l.b16 %v129
    %v509 = vunpack.c.h.b16 %v129
    %v510 = vunpack.c.l.b16 %v130
    %v511 = vunpack.c.h.b16 %v130
    %v512 = vunpack.c.l.b16 %v131
    %v513 = vunpack.c.h.b16 %v131
    %v514 = vunpack.c.l.b16 %v132
    %v515 = vunpack.c.h.b16 %v132
    %v516 = vunpack.c.l.b16 %v133
    %v517 = vunpack.c.h.b16 %v133
    %v518 = vunpack.c.l.b16 %v134
    %v519 = vunpack.c.h.b16 %v134
    %v520 = vunpack.c.l.b16 %v135
    %v521 = vunpack.c.h.b16 %v135
    %v522 = vunpack.c.l.b16 %v136
    %v523 = vunpack.c.h.b16 %v136
    %v524 = vunpack.c.l.b16 %v137
    %v525 = vunpack.c.h.b16 %v137
    %v526 = vunpack.c.l.b16 %v138
    %v527 = vunpack.c.h.b16 %v138
    %v528 = vunpack.c.l.b16 %v139
    %v529 = vunpack.c.h.b16 %v139
    %v530 = vunpack.c.l.b16 %v140
    %v531 = vunpack.c.h.b16 %v140
    %v532 = vunpack.c.l.b16 %v141
    %v533 = vunpack.c.h.b16 %v141
    %v534 = vunpack.c.l.b16 %v142
    %v535 = vunpack.c.h.b16 %v142
    %v536 = vunpack.c.l.b16 %v143
    %v537 = vunpack.c.h.b16 %v143
    %v538 = vunpack.c.l.b16 %v144
    %v539 = vunpack.c.h.b16 %v144
    %v540 = vunpack.c.l.b16 %v145
    %v541 = vunpack.c.h.b16 %v145
    %v542 = vunpack.c.l.b16 %v146
    %v543 = vunpack.c.h.b16 %v146
    %v544 = vunpack.c.l.b16 %v147
    %v545 = vunpack.c.h.b16 %v147
    %v546 = vunpack.c.l.b16 %v148
    %v547 = vunpack.c.h.b16 %v148
    %v548 = vunpack.c.l.b16 %v149
    %v549 = vunpack.c.h.b16 %v149
    %v550 = vunpack.c.l.b16 %v150
    %v551 = vunpack.c.h.b16 %v150
    %v552 = vunpack.c.l.b16 %v151
    %v553 = vunpack.c.h.b16 %v151
    %v554 = vunpack.c.l.b16 %v152
    %v555 = vunpack.c.h.b16 %v152
    %v556 = vunpack.c.l.b16 %v153
    %v557 = vunpack.c.h.b16 %v153
    %v558 = vpack.c.b16 %v310, %v302
    %v559 = vpack.c.b16 %v311, %v303
    %v560 = vpack.c.b16 %v312, %v304
    %v561 = vpack.c.b16 %v313, %v305
    %v562 = vpack.c.b16 %v314, %v306
    %v563 = vpack.c.b16 %v315, %v307
    %v564 = vpack.c.b16 %v316, %v308
    %v565 = vpack.c.b16 %v317, %v309
    %v566 = vpack.c.b16 %v326, %v318
    %v567 = vpack.c.b16 %v327, %v319
    %v568 = vpack.c.b16 %v328, %v320
    %v569 = vpack.c.b16 %v329, %v321
    %v570 = vpack.c.b16 %v330, %v322
    %v571 = vpack.c.b16 %v331, %v323
    %v572 = vpack.c.b16 %v332, %v324
    %v573 = vpack.c.b16 %v333, %v325
    %v574 = vpack.c.b16 %v342, %v334
    %v575 = vpack.c.b16 %v343, %v335
    %v576 = vpack.c.b16 %v344, %v336
    %v577 = vpack.c.b16 %v345, %v337
    %v578 = vpack.c.b16 %v346, %v338
    %v579 = vpack.c.b16 %v347, %v339
    %v580 = vpack.c.b16 %v348, %v340
    %v581 = vpack.c.b16 %v349, %v341
    %v582 = vpack.c.b16 %v358, %v350
    %v583 = vpack.c.b16 %v359, %v351
    %v584 = vpack.c.b16 %v360, %v352
    %v585 = vpack.c.b16 %v361, %v353
    %v586 = vpack.c.b16 %v362, %v354
    %v587 = vpack.c.b16 %v363, %v355
    %v588 = vpack.c.b16 %v364, %v356
    %v589 = vpack.c.b16 %v365, %v357
    %v590 = vpack.c.b16 %v374, %v366
    %v591 = vpack.c.b16 %v375, %v367
    %v592 = vpack.c.b16 %v376, %v368
    %v593 = vpack.c.b16 %v377, %v369
    %v594 = vpack.c.b16 %v378, %v370
    %v595 = vpack.c.b16 %v379, %v371
    %v596 = vpack.c.b16 %v380, %v372
    %v597 = vpack.c.b16 %v381, %v373
    %v598 = vpack.c.b16 %v390, %v382
    %v599 = vpack.c.b16 %v391, %v383
    %v600 = vpack.c.b16 %v392, %v384
    %v601 = vpack.c.b16 %v393, %v385
    %v602 = vpack.c.b16 %v394, %v386
    %v603 = vpack.c.b16 %v395, %v387
    %v604 = vpack.c.b16 %v396, %v388
    %v605 = vpack.c.b16 %v397, %v389
    %v606 = vpack.c.b16 %v406, %v398
    %v607 = vpack.c.b16 %v407, %v399
    %v608 = vpack.c.b16 %v408, %v400
    %v609 = vpack.c.b16 %v409, %v401
    %v610 = vpack.c.b16 %v410, %v402
    %v611 = vpack.c.b16 %v411, %v403
    %v612 = vpack.c.b16 %v412, %v404
    %v613 = vpack.c.b16 %v413, %v405
    %v614 = vpack.c.b16 %v422, %v414
    %v615 = vpack.c.b16 %v423, %v415
    %v616 = vpack.c.b16 %v424, %v416
    %v617 = vpack.c.b16 %v425, %v417
    %v618 = vpack.c.b16 %v426, %v418
    %v619 = vpack.c.b16 %v427, %v419
    %v620 = vpack.c.b16 %v428, %v420
    %v621 = vpack.c.b16 %v429, %v421
    %v622 = vpack.c.b16 %v438, %v430
    %v623 = vpack.c.b16 %v439, %v431
    %v624 = vpack.c.b16 %v440, %v432
    %v625 = vpack.c.b16 %v441, %v433
    %v626 = vpack.c.b16 %v442, %v434
    %v627 = vpack.c.b16 %v443, %v435
    %v628 = vpack.c.b16 %v444, %v436
    %v629 = vpack.c.b16 %v445, %v437
    %v630 = vpack.c.b16 %v454, %v446
    %v631 = vpack.c.b16 %v455, %v447
    %v632 = vpack.c.b16 %v456, %v448
    %v633 = vpack.c.b16 %v457, %v449
    %v634 = vpack.c.b16 %v458, %v450
    %v635 = vpack.c.b16 %v459, %v451
    %v636 = vpack.c.b16 %v460, %v452
    %v637 = vpack.c.b16 %v461, %v453
    %v638 = vpack.c.b16 %v470, %v462
    %v639 = vpack.c.b16 %v471, %v463
    %v640 = vpack.c.b16 %v472, %v464
    %v641 = vpack.c.b16 %v473, %v465
    %v642 = vpack.c.b16 %v474, %v466
    %v643 = vpack.c.b16 %v475, %v467
    %v644 = vpack.c.b16 %v476, %v468
    %v645 = vpack.c.b16 %v477, %v469
    %v646 = vpack.c.b16 %v486, %v478
    %v647 = vpack.c.b16 %v487, %v479
    %v648 = vpack.c.b16 %v488, %v480
    %v649 = vpack.c.b16 %v489, %v481
    %v650 = vpack.c.b16 %v490, %v482
    %v651 = vpack.c.b16 %v491, %v483
    %v652 = vpack.c.b16 %v492, %v484
    %v653 = vpack.c.b16 %v493, %v485
    %v654 = vpack.c.b16 %v502, %v494
    %v655 = vpack.c.b16 %v503, %v495
    %v656 = vpack.c.b16 %v504, %v496
    %v657 = vpack.c.b16 %v505, %v497
    %v658 = vpack.c.b16 %v506, %v498
    %v659 = vpack.c.b16 %v507, %v499
    %v660 = vpack.c.b16 %v508, %v500
    %v661 = vpack.c.b16 %v509, %v501
    %v662 = vpack.c.b16 %v518, %v510
    %v663 = vpack.c.b16 %v519, %v511
    %v664 = vpack.c.b16 %v520, %v512
    %v665 = vpack.c.b16 %v521, %v513
    %v666 = vpack.c.b16 %v522, %v514
    %v667 = vpack.c.b16 %v523, %v515
    %v668 = vpack.c.b16 %v524, %v516
    %v669 = vpack.c.b16 %v525, %v517
    %v670 = vpack.c.b16 %v534, %v526
    %v671 = vpack.c.b16 %v535, %v527
    %v672 = vpack.c.b16 %v536, %v528
    %v673 = vpack.c.b16 %v537, %v529
    %v674 = vpack.c.b16 %v538, %v530
    %v675 = vpack.c.b16 %v539, %v531
    %v676 = vpack.c.b16 %v540, %v532
    %v677 = vpack.c.b16 %v541, %v533
    %v678 = vpack.c.b16 %v550, %v542
    %v679 = vpack.c.b16 %v551, %v543
    %v680 = vpack.c.b16 %v552, %v544
    %v681 = vpack.c.b16 %v553, %v545
    %v682 = vpack.c.b16 %v554, %v546
    %v683 = vpack.c.b16 %v555, %v547
    %v684 = vpack.c.b16 %v556, %v548
    %v685 = vpack.c.b16 %v557, %v549
    %814 = vmatprep.subr.bf16.mxu0 %v559
    %815 = vmatpush1.bf16.msra.mxu0 %v558
    %816 = vmatprep.subr.bf16.mxu0 %v567
    %817 = vmatpush1.bf16.msra.mxu0 %v566
    %818 = vmatprep.subr.bf16.mxu0 %v575
    %819 = vmatpush1.bf16.msra.mxu0 %v574
    %820 = vmatprep.subr.bf16.mxu0 %v583
    %821 = vmatpush1.bf16.msra.mxu0 %v582
    %822 = vmatprep.subr.bf16.mxu0 %v591
    %823 = vmatpush1.bf16.msra.mxu0 %v590
    %824 = vmatprep.subr.bf16.mxu0 %v599
    %825 = vmatpush1.bf16.msra.mxu0 %v598
    %826 = vmatprep.subr.bf16.mxu0 %v607
    %827 = vmatpush1.bf16.msra.mxu0 %v606
    %828 = vmatprep.subr.bf16.mxu0 %v615
    %829 = vmatpush1.bf16.msra.mxu0 %v614
    %830 = vmatprep.subr.bf16.mxu0 %v623
    %831 = vmatpush1.bf16.msra.mxu0 %v622
    %832 = vmatprep.subr.bf16.mxu0 %v631
    %833 = vmatpush1.bf16.msra.mxu0 %v630
    %834 = vmatprep.subr.bf16.mxu0 %v639
    %835 = vmatpush1.bf16.msra.mxu0 %v638
    %836 = vmatprep.subr.bf16.mxu0 %v647
    %837 = vmatpush1.bf16.msra.mxu0 %v646
    %838 = vmatprep.subr.bf16.mxu0 %v655
    %839 = vmatpush1.bf16.msra.mxu0 %v654
    %840 = vmatprep.subr.bf16.mxu0 %v663
    %841 = vmatpush1.bf16.msra.mxu0 %v662
    %842 = vmatprep.subr.bf16.mxu0 %v671
    %843 = vmatpush1.bf16.msra.mxu0 %v670
    %844 = vmatprep.subr.bf16.mxu0 %v679
    %845 = vmatpush1.bf16.msra.mxu0 %v678
    %846 = vmatprep.mubr.bf16.mxu0 %v173
    %847 = vmatmul.mubr.bf16.gmra.mrb[0].mxu0 %v172
    %v848 = vpop.f32.mrb[0].mxu0
    %v849 = vadd.f32 0.0, %v848
    %v850 = vpop.f32.mrb[0].mxu0
    %v851 = vadd.f32 0.0, %v850
    %v852 = vpop.f32.mrb[0].mxu0
    %v853 = vpop.f32.mrb[0].mxu0
    %854 = vdwg.mxu0
    %855 = vmatprep.subr.bf16.mxu0 %v561
    %856 = vmatpush1.bf16.msra.mxu0 %v560
    %857 = vmatprep.subr.bf16.mxu0 %v569
    %858 = vmatpush1.bf16.msra.mxu0 %v568
    %859 = vmatprep.subr.bf16.mxu0 %v577
    %860 = vmatpush1.bf16.msra.mxu0 %v576
    %861 = vmatprep.subr.bf16.mxu0 %v585
    %862 = vmatpush1.bf16.msra.mxu0 %v584
    %863 = vmatprep.subr.bf16.mxu0 %v593
    %864 = vmatpush1.bf16.msra.mxu0 %v592
    %865 = vmatprep.subr.bf16.mxu0 %v601
    %866 = vmatpush1.bf16.msra.mxu0 %v600
    %867 = vmatprep.subr.bf16.mxu0 %v609
    %868 = vmatpush1.bf16.msra.mxu0 %v608
    %869 = vmatprep.subr.bf16.mxu0 %v617
    %870 = vmatpush1.bf16.msra.mxu0 %v616
    %871 = vmatprep.subr.bf16.mxu0 %v625
    %872 = vmatpush1.bf16.msra.mxu0 %v624
    %873 = vmatprep.subr.bf16.mxu0 %v633
    %874 = vmatpush1.bf16.msra.mxu0 %v632
    %875 = vmatprep.subr.bf16.mxu0 %v641
    %876 = vmatpush1.bf16.msra.mxu0 %v640
    %877 = vmatprep.subr.bf16.mxu0 %v649
    %878 = vmatpush1.bf16.msra.mxu0 %v648
    %879 = vmatprep.subr.bf16.mxu0 %v657
    %880 = vmatpush1.bf16.msra.mxu0 %v656
    %881 = vmatprep.subr.bf16.mxu0 %v665
    %882 = vmatpush1.bf16.msra.mxu0 %v664
    %883 = vmatprep.subr.bf16.mxu0 %v673
    %884 = vmatpush1.bf16.msra.mxu0 %v672
    %885 = vmatprep.subr.bf16.mxu0 %v681
    %886 = vmatpush1.bf16.msra.mxu0 %v680
    %887 = vmatprep.mubr.bf16.mxu0 %v173
    %888 = vmatmul.mubr.bf16.gmra.mrb[0].mxu0 %v172
    %v889 = vpop.f32.mrb[0].mxu0
    %v890 = vadd.f32 0.0, %v889
    %v891 = vpop.f32.mrb[0].mxu0
    %v892 = vadd.f32 0.0, %v891
    %v893 = vpop.f32.mrb[0].mxu0
    %v894 = vpop.f32.mrb[0].mxu0
    %895 = vdwg.mxu0
    %896 = vmatprep.subr.bf16.mxu0 %v563
    %897 = vmatpush1.bf16.msra.mxu0 %v562
    %898 = vmatprep.subr.bf16.mxu0 %v571
    %899 = vmatpush1.bf16.msra.mxu0 %v570
    %900 = vmatprep.subr.bf16.mxu0 %v579
    %901 = vmatpush1.bf16.msra.mxu0 %v578
    %902 = vmatprep.subr.bf16.mxu0 %v587
    %903 = vmatpush1.bf16.msra.mxu0 %v586
    %904 = vmatprep.subr.bf16.mxu0 %v595
    %905 = vmatpush1.bf16.msra.mxu0 %v594
    %906 = vmatprep.subr.bf16.mxu0 %v603
    %907 = vmatpush1.bf16.msra.mxu0 %v602
    %908 = vmatprep.subr.bf16.mxu0 %v611
    %909 = vmatpush1.bf16.msra.mxu0 %v610
    %910 = vmatprep.subr.bf16.mxu0 %v619
    %911 = vmatpush1.bf16.msra.mxu0 %v618
    %912 = vmatprep.subr.bf16.mxu0 %v627
    %913 = vmatpush1.bf16.msra.mxu0 %v626
    %914 = vmatprep.subr.bf16.mxu0 %v635
    %915 = vmatpush1.bf16.msra.mxu0 %v634
    %916 = vmatprep.subr.bf16.mxu0 %v643
    %917 = vmatpush1.bf16.msra.mxu0 %v642
    %918 = vmatprep.subr.bf16.mxu0 %v651
    %919 = vmatpush1.bf16.msra.mxu0 %v650
    %920 = vmatprep.subr.bf16.mxu0 %v659
    %921 = vmatpush1.bf16.msra.mxu0 %v658
    %922 = vmatprep.subr.bf16.mxu0 %v667
    %923 = vmatpush1.bf16.msra.mxu0 %v666
    %924 = vmatprep.subr.bf16.mxu0 %v675
    %925 = vmatpush1.bf16.msra.mxu0 %v674
    %926 = vmatprep.subr.bf16.mxu0 %v683
    %927 = vmatpush1.bf16.msra.mxu0 %v682
    %928 = vmatprep.mubr.bf16.mxu0 %v173
    %929 = vmatmul.mubr.bf16.gmra.mrb[0].mxu0 %v172
    %v930 = vpop.f32.mrb[0].mxu0
    %v931 = vadd.f32 0.0, %v930
    %v932 = vpop.f32.mrb[0].mxu0
    %v933 = vadd.f32 0.0, %v932
    %v934 = vpop.f32.mrb[0].mxu0
    %v935 = vpop.f32.mrb[0].mxu0
    %936 = vdwg.mxu0
    %937 = vmatprep.subr.bf16.mxu0 %v565
    %938 = vmatpush1.bf16.msra.mxu0 %v564
    %939 = vmatprep.subr.bf16.mxu0 %v573
    %940 = vmatpush1.bf16.msra.mxu0 %v572
    %941 = vmatprep.subr.bf16.mxu0 %v581
    %942 = vmatpush1.bf16.msra.mxu0 %v580
    %943 = vmatprep.subr.bf16.mxu0 %v589
    %944 = vmatpush1.bf16.msra.mxu0 %v588
    %945 = vmatprep.subr.bf16.mxu0 %v597
    %946 = vmatpush1.bf16.msra.mxu0 %v596
    %947 = vmatprep.subr.bf16.mxu0 %v605
    %948 = vmatpush1.bf16.msra.mxu0 %v604
    %949 = vmatprep.subr.bf16.mxu0 %v613
    %950 = vmatpush1.bf16.msra.mxu0 %v612
    %951 = vmatprep.subr.bf16.mxu0 %v621
    %952 = vmatpush1.bf16.msra.mxu0 %v620
    %953 = vmatprep.subr.bf16.mxu0 %v629
    %954 = vmatpush1.bf16.msra.mxu0 %v628
    %955 = vmatprep.subr.bf16.mxu0 %v637
    %956 = vmatpush1.bf16.msra.mxu0 %v636
    %957 = vmatprep.subr.bf16.mxu0 %v645
    %958 = vmatpush1.bf16.msra.mxu0 %v644
    %959 = vmatprep.subr.bf16.mxu0 %v653
    %960 = vmatpush1.bf16.msra.mxu0 %v652
    %961 = vmatprep.subr.bf16.mxu0 %v661
    %962 = vmatpush1.bf16.msra.mxu0 %v660
    %963 = vmatprep.subr.bf16.mxu0 %v669
    %964 = vmatpush1.bf16.msra.mxu0 %v668
    %965 = vmatprep.subr.bf16.mxu0 %v677
    %966 = vmatpush1.bf16.msra.mxu0 %v676
    %967 = vmatprep.subr.bf16.mxu0 %v685
    %968 = vmatpush1.bf16.msra.mxu0 %v684
    %969 = vmatprep.mubr.bf16.mxu0 %v173
    %970 = vmatmul.mubr.bf16.gmra.mrb[0].mxu0 %v172
    %v971 = vpop.f32.mrb[0].mxu0
    %v972 = vadd.f32 0.0, %v971
    %v973 = vpop.f32.mrb[0].mxu0
    %v974 = vadd.f32 0.0, %v973
    %v975 = vpop.f32.mrb[0].mxu0
    %v976 = vpop.f32.mrb[0].mxu0
    %977 = vdwg.mxu0
    %v986 = vcombine.low %v849, %v851
    %v987 = vcombine.low %v890, %v892
    %v988 = vcombine.low %v931, %v933
    %v989 = vcombine.low %v972, %v974
    %v991 = vunpack.c.l.s4 1966171168
    %v992 = vunpack.c.0.s8 %v991
    %v993 = vlaneseq
    %v994 = vshrl.u32 %v993, 7
    %v995 = vsub.s32 %v992, %v994
    %v996 = vrot.slane %v986, %v995
    %v998 = vunpack.c.l.s4 1966171168
    %v999 = vunpack.c.0.s8 %v998
    %v1000 = vlaneseq
    %v1001 = vshrl.u32 %v1000, 7
    %v1002 = vsub.s32 %v999, %v1001
    %v1003 = vrot.slane %v987, %v1002
    %v1005 = vunpack.c.l.s4 1966171168
    %v1006 = vunpack.c.0.s8 %v1005
    %v1007 = vlaneseq
    %v1008 = vshrl.u32 %v1007, 7
    %v1009 = vsub.s32 %v1006, %v1008
    %v1010 = vrot.slane %v988, %v1009
    %v1012 = vunpack.c.l.s4 1966171168
    %v1013 = vunpack.c.0.s8 %v1012
    %v1014 = vlaneseq
    %v1015 = vshrl.u32 %v1014, 7
    %v1016 = vsub.s32 %v1013, %v1015
    %v1017 = vrot.slane %v989, %v1016
    %v1018 = vcombine.low %v996, %v1003
    %v1019 = vcombine.high %v996, %v1003
    %v1020 = vcombine.low %v1010, %v1017
    %v1021 = vcombine.high %v1010, %v1017
    %v1023 = vunpack.c.l.s4 1966171168
    %v1024 = vunpack.c.0.s8 %v1023
    %v1025 = vlaneseq
    %v1026 = vshrl.u32 %v1025, 7
    %v1027 = vsub.s32 %v1024, %v1026
    %v1028 = vrot.slane %v1018, %v1027
    %v1030 = vunpack.c.l.s4 1966171168
    %v1031 = vunpack.c.0.s8 %v1030
    %v1032 = vlaneseq
    %v1033 = vshrl.u32 %v1032, 7
    %v1034 = vsub.s32 %v1031, %v1033
    %v1035 = vrot.slane %v1019, %v1034
    %v1037 = vunpack.c.l.s4 1966171168
    %v1038 = vunpack.c.0.s8 %v1037
    %v1039 = vlaneseq
    %v1040 = vshrl.u32 %v1039, 7
    %v1041 = vsub.s32 %v1038, %v1040
    %v1042 = vrot.slane %v1020, %v1041
    %v1044 = vunpack.c.l.s4 1966171168
    %v1045 = vunpack.c.0.s8 %v1044
    %v1046 = vlaneseq
    %v1047 = vshrl.u32 %v1046, 7
    %v1048 = vsub.s32 %v1045, %v1047
    %v1049 = vrot.slane %v1021, %v1048
    %v1050 = vcombine.low %v1028, %v1042
    %v1051 = vcombine.low %v1035, %v1049
    %v1054 = vadd.f32 %v156, %v1050
    %v1055 = vadd.f32 %v160, %v1051
    %v1056 = vxor.u32 %v1054, 2147483648
    %v1057 = vxor.u32 %v1055, 2147483648
    %v1058 = vmul.f32 %v1056, 1.442695
    %v1059 = vpow.pop %v1058
    %v1060 = vmul.f32 %v1057, 1.442695
    %v1061 = vpow.pop %v1060
    %v1062 = vadd.f32 %v1059, 1.0
    %v1063 = vadd.f32 %v1061, 1.0
    %v1064 = vrcp.pop %v1062
    %v1065 = vmul.f32 1.0, %v1064
    %v1066 = vrcp.pop %v1063
    %v1067 = vmul.f32 1.0, %v1066
    %v1070 = vrot.slane %v1054, 6
    %v1071 = vrot.slane %v1055, 6
    %v1074 = vtanh.pop %v1070
    %v1075 = vtanh.pop %v1071
    %v1078 = vrot.slane %v1065, 2
    %v1079 = vrot.slane %v1067, 2
    %v1084 = vunpack.c.l.s4 1966171168
    %v1085 = vunpack.c.0.s8 %v1084
    %v1086 = vlaneseq
    %v1087 = vshrl.u32 %v1086, 7
    %v1088 = vsub.s32 %v1085, %v1087
    %v1089 = vrot.slane %v25, %v1088
    %v1090 = vcombine.high %v1089, %v1089
    %v1093 = vmul.f32 %v1078, %v1089
    %v1094 = vmul.f32 %v1079, %v1090
    %v1095 = vmul.f32 %v1065, %v1074
    %v1096 = vmul.f32 %v1067, %v1075
    %v1097 = vadd.f32 %v1093, %v1095
    %v1098 = vadd.f32 %v1094, %v1096
    %v1099 = vtanh.pop %v1097
    %v1100 = vtanh.pop %v1098
    %v1101 = vrot.slane %v1065, 4
    %v1102 = vrot.slane %v1067, 4
    %v1105 = vmul.f32 %v1101, %v1099
    %v1106 = vmul.f32 %v1102, %v1100
    %s1107 = scalar_lea.vmem %s0, 1
    %v1108 = vld [vmem:[%s1107] ss:$8 sm:$0xf]
    %v1109 = vld [vmem:[%s1107] ss:$8 sm:$0xf0]
    %v1110 = vor.u32 %v1108, %v1109
    %s1111 = scalar_lea.vmem %s0, 65
    %v1112 = vld [vmem:[%s1111] ss:$8 sm:$0xf]
    %v1113 = vld [vmem:[%s1111] ss:$8 sm:$0xf0]
    %v1114 = vor.u32 %v1112, %v1113
    %v1117 = vlaneseq
    %v1118 = vshrl.u32 %v1117, 7
    %v1119 = vsub.s32 0, %v1118
    %v1120 = vrot.slane %v1105, %v1119
    %v1121 = vlaneseq
    %v1122 = vshrl.u32 %v1121, 7
    %v1123 = vsub.s32 1, %v1122
    %v1124 = vrot.slane %v1105, %v1123
    %v1125 = vlaneseq
    %v1126 = vshrl.u32 %v1125, 7
    %v1127 = vsub.s32 0, %v1126
    %v1128 = vrot.slane %v1106, %v1127
    %v1129 = vlaneseq
    %v1130 = vshrl.u32 %v1129, 7
    %v1131 = vsub.s32 1, %v1130
    %v1132 = vrot.slane %v1106, %v1131
    %v1137 = vpack.c.bf16 %v1120, %v1120
    %v1138 = vpack.c.bf16 %v1124, %v1124
    %v1139 = vpack.c.bf16 %v1128, %v1128
    %v1140 = vpack.c.bf16 %v1132, %v1132
    %v1145 = vunpack.c.l.b16 %v1137
    %v1146 = vunpack.c.l.b16 %v1138
    %v1147 = vunpack.c.l.b16 %v1139
    %v1148 = vunpack.c.l.b16 %v1140
    %v1149 = vrot.slane %v1147, 7
    %vm1150 = vcmask 1041409
    %v1151 = vsel %vm1150, %v1149, %v1145
    %v1152 = vrot.slane %v1148, 7
    %v1153 = vsel %vm1150, %v1152, %v1146
    %v1154 = vpack.c.b16 %v1151, %v1151
    %v1155 = vpack.c.b16 %v1153, %v1153
    %1158 = vmatprep.subr.bf16.mxu0 %v559
    %1159 = vmatpush1.bf16.msra.mxu0 %v558
    %1160 = vmatprep.subr.bf16.mxu0 %v567
    %1161 = vmatpush1.bf16.msra.mxu0 %v566
    %1162 = vmatprep.subr.bf16.mxu0 %v575
    %1163 = vmatpush1.bf16.msra.mxu0 %v574
    %1164 = vmatprep.subr.bf16.mxu0 %v583
    %1165 = vmatpush1.bf16.msra.mxu0 %v582
    %1166 = vmatprep.subr.bf16.mxu0 %v591
    %1167 = vmatpush1.bf16.msra.mxu0 %v590
    %1168 = vmatprep.subr.bf16.mxu0 %v599
    %1169 = vmatpush1.bf16.msra.mxu0 %v598
    %1170 = vmatprep.subr.bf16.mxu0 %v607
    %1171 = vmatpush1.bf16.msra.mxu0 %v606
    %1172 = vmatprep.subr.bf16.mxu0 %v615
    %1173 = vmatpush1.bf16.msra.mxu0 %v614
    %1174 = vmatprep.subr.bf16.mxu0 %v623
    %1175 = vmatpush1.bf16.msra.mxu0 %v622
    %1176 = vmatprep.subr.bf16.mxu0 %v631
    %1177 = vmatpush1.bf16.msra.mxu0 %v630
    %1178 = vmatprep.subr.bf16.mxu0 %v639
    %1179 = vmatpush1.bf16.msra.mxu0 %v638
    %1180 = vmatprep.subr.bf16.mxu0 %v647
    %1181 = vmatpush1.bf16.msra.mxu0 %v646
    %1182 = vmatprep.subr.bf16.mxu0 %v655
    %1183 = vmatpush1.bf16.msra.mxu0 %v654
    %1184 = vmatprep.subr.bf16.mxu0 %v663
    %1185 = vmatpush1.bf16.msra.mxu0 %v662
    %1186 = vmatprep.subr.bf16.mxu0 %v671
    %1187 = vmatpush1.bf16.msra.mxu0 %v670
    %1188 = vmatprep.subr.bf16.mxu0 %v679
    %1189 = vmatpush1.bf16.msra.mxu0 %v678
    %1190 = vmatprep.mubr.bf16.mxu0 %v1155
    %1191 = vmatmul.mubr.bf16.gmra.mrb[0].mxu0 %v1154
    %v1192 = vpop.f32.mrb[0].mxu0
    %v1193 = vadd.f32 0.0, %v1192
    %v1194 = vpop.f32.mrb[0].mxu0
    %v1195 = vadd.f32 0.0, %v1194
    %v1196 = vpop.f32.mrb[0].mxu0
    %v1197 = vpop.f32.mrb[0].mxu0
    %1198 = vdwg.mxu0
    %1199 = vmatprep.subr.bf16.mxu0 %v561
    %1200 = vmatpush1.bf16.msra.mxu0 %v560
    %1201 = vmatprep.subr.bf16.mxu0 %v569
    %1202 = vmatpush1.bf16.msra.mxu0 %v568
    %1203 = vmatprep.subr.bf16.mxu0 %v577
    %1204 = vmatpush1.bf16.msra.mxu0 %v576
    %1205 = vmatprep.subr.bf16.mxu0 %v585
    %1206 = vmatpush1.bf16.msra.mxu0 %v584
    %1207 = vmatprep.subr.bf16.mxu0 %v593
    %1208 = vmatpush1.bf16.msra.mxu0 %v592
    %1209 = vmatprep.subr.bf16.mxu0 %v601
    %1210 = vmatpush1.bf16.msra.mxu0 %v600
    %1211 = vmatprep.subr.bf16.mxu0 %v609
    %1212 = vmatpush1.bf16.msra.mxu0 %v608
    %1213 = vmatprep.subr.bf16.mxu0 %v617
    %1214 = vmatpush1.bf16.msra.mxu0 %v616
    %1215 = vmatprep.subr.bf16.mxu0 %v625
    %1216 = vmatpush1.bf16.msra.mxu0 %v624
    %1217 = vmatprep.subr.bf16.mxu0 %v633
    %1218 = vmatpush1.bf16.msra.mxu0 %v632
    %1219 = vmatprep.subr.bf16.mxu0 %v641
    %1220 = vmatpush1.bf16.msra.mxu0 %v640
    %1221 = vmatprep.subr.bf16.mxu0 %v649
    %1222 = vmatpush1.bf16.msra.mxu0 %v648
    %1223 = vmatprep.subr.bf16.mxu0 %v657
    %1224 = vmatpush1.bf16.msra.mxu0 %v656
    %1225 = vmatprep.subr.bf16.mxu0 %v665
    %1226 = vmatpush1.bf16.msra.mxu0 %v664
    %1227 = vmatprep.subr.bf16.mxu0 %v673
    %1228 = vmatpush1.bf16.msra.mxu0 %v672
    %1229 = vmatprep.subr.bf16.mxu0 %v681
    %1230 = vmatpush1.bf16.msra.mxu0 %v680
    %1231 = vmatprep.mubr.bf16.mxu0 %v1155
    %1232 = vmatmul.mubr.bf16.gmra.mrb[0].mxu0 %v1154
    %v1233 = vpop.f32.mrb[0].mxu0
    %v1234 = vadd.f32 0.0, %v1233
    %v1235 = vpop.f32.mrb[0].mxu0
    %v1236 = vadd.f32 0.0, %v1235
    %v1237 = vpop.f32.mrb[0].mxu0
    %v1238 = vpop.f32.mrb[0].mxu0
    %1239 = vdwg.mxu0
    %1240 = vmatprep.subr.bf16.mxu0 %v563
    %1241 = vmatpush1.bf16.msra.mxu0 %v562
    %1242 = vmatprep.subr.bf16.mxu0 %v571
    %1243 = vmatpush1.bf16.msra.mxu0 %v570
    %1244 = vmatprep.subr.bf16.mxu0 %v579
    %1245 = vmatpush1.bf16.msra.mxu0 %v578
    %1246 = vmatprep.subr.bf16.mxu0 %v587
    %1247 = vmatpush1.bf16.msra.mxu0 %v586
    %1248 = vmatprep.subr.bf16.mxu0 %v595
    %1249 = vmatpush1.bf16.msra.mxu0 %v594
    %1250 = vmatprep.subr.bf16.mxu0 %v603
    %1251 = vmatpush1.bf16.msra.mxu0 %v602
    %1252 = vmatprep.subr.bf16.mxu0 %v611
    %1253 = vmatpush1.bf16.msra.mxu0 %v610
    %1254 = vmatprep.subr.bf16.mxu0 %v619
    %1255 = vmatpush1.bf16.msra.mxu0 %v618
    %1256 = vmatprep.subr.bf16.mxu0 %v627
    %1257 = vmatpush1.bf16.msra.mxu0 %v626
    %1258 = vmatprep.subr.bf16.mxu0 %v635
    %1259 = vmatpush1.bf16.msra.mxu0 %v634
    %1260 = vmatprep.subr.bf16.mxu0 %v643
    %1261 = vmatpush1.bf16.msra.mxu0 %v642
    %1262 = vmatprep.subr.bf16.mxu0 %v651
    %1263 = vmatpush1.bf16.msra.mxu0 %v650
    %1264 = vmatprep.subr.bf16.mxu0 %v659
    %1265 = vmatpush1.bf16.msra.mxu0 %v658
    %1266 = vmatprep.subr.bf16.mxu0 %v667
    %1267 = vmatpush1.bf16.msra.mxu0 %v666
    %1268 = vmatprep.subr.bf16.mxu0 %v675
    %1269 = vmatpush1.bf16.msra.mxu0 %v674
    %1270 = vmatprep.subr.bf16.mxu0 %v683
    %1271 = vmatpush1.bf16.msra.mxu0 %v682
    %1272 = vmatprep.mubr.bf16.mxu0 %v1155
    %1273 = vmatmul.mubr.bf16.gmra.mrb[0].mxu0 %v1154
    %v1274 = vpop.f32.mrb[0].mxu0
    %v1275 = vadd.f32 0.0, %v1274
    %v1276 = vpop.f32.mrb[0].mxu0
    %v1277 = vadd.f32 0.0, %v1276
    %v1278 = vpop.f32.mrb[0].mxu0
    %v1279 = vpop.f32.mrb[0].mxu0
    %1280 = vdwg.mxu0
    %1281 = vmatprep.subr.bf16.mxu0 %v565
    %1282 = vmatpush1.bf16.msra.mxu0 %v564
    %1283 = vmatprep.subr.bf16.mxu0 %v573
    %1284 = vmatpush1.bf16.msra.mxu0 %v572
    %1285 = vmatprep.subr.bf16.mxu0 %v581
    %1286 = vmatpush1.bf16.msra.mxu0 %v580
    %1287 = vmatprep.subr.bf16.mxu0 %v589
    %1288 = vmatpush1.bf16.msra.mxu0 %v588
    %1289 = vmatprep.subr.bf16.mxu0 %v597
    %1290 = vmatpush1.bf16.msra.mxu0 %v596
    %1291 = vmatprep.subr.bf16.mxu0 %v605
    %1292 = vmatpush1.bf16.msra.mxu0 %v604
    %1293 = vmatprep.subr.bf16.mxu0 %v613
    %1294 = vmatpush1.bf16.msra.mxu0 %v612
    %1295 = vmatprep.subr.bf16.mxu0 %v621
    %1296 = vmatpush1.bf16.msra.mxu0 %v620
    %1297 = vmatprep.subr.bf16.mxu0 %v629
    %1298 = vmatpush1.bf16.msra.mxu0 %v628
    %1299 = vmatprep.subr.bf16.mxu0 %v637
    %1300 = vmatpush1.bf16.msra.mxu0 %v636
    %1301 = vmatprep.subr.bf16.mxu0 %v645
    %1302 = vmatpush1.bf16.msra.mxu0 %v644
    %1303 = vmatprep.subr.bf16.mxu0 %v653
    %1304 = vmatpush1.bf16.msra.mxu0 %v652
    %1305 = vmatprep.subr.bf16.mxu0 %v661
    %1306 = vmatpush1.bf16.msra.mxu0 %v660
    %1307 = vmatprep.subr.bf16.mxu0 %v669
    %1308 = vmatpush1.bf16.msra.mxu0 %v668
    %1309 = vmatprep.subr.bf16.mxu0 %v677
    %1310 = vmatpush1.bf16.msra.mxu0 %v676
    %1311 = vmatprep.subr.bf16.mxu0 %v685
    %1312 = vmatpush1.bf16.msra.mxu0 %v684
    %1313 = vmatprep.mubr.bf16.mxu0 %v1155
    %1314 = vmatmul.mubr.bf16.gmra.mrb[0].mxu0 %v1154
    %v1315 = vpop.f32.mrb[0].mxu0
    %v1316 = vadd.f32 0.0, %v1315
    %v1317 = vpop.f32.mrb[0].mxu0
    %v1318 = vadd.f32 0.0, %v1317
    %v1319 = vpop.f32.mrb[0].mxu0
    %v1320 = vpop.f32.mrb[0].mxu0
    %1321 = vdwg.mxu0
    %v1330 = vcombine.low %v1193, %v1195
    %v1331 = vcombine.low %v1234, %v1236
    %v1332 = vcombine.low %v1275, %v1277
    %v1333 = vcombine.low %v1316, %v1318
    %v1335 = vunpack.c.l.s4 1966171168
    %v1336 = vunpack.c.0.s8 %v1335
    %v1337 = vlaneseq
    %v1338 = vshrl.u32 %v1337, 7
    %v1339 = vsub.s32 %v1336, %v1338
    %v1340 = vrot.slane %v1330, %v1339
    %v1342 = vunpack.c.l.s4 1966171168
    %v1343 = vunpack.c.0.s8 %v1342
    %v1344 = vlaneseq
    %v1345 = vshrl.u32 %v1344, 7
    %v1346 = vsub.s32 %v1343, %v1345
    %v1347 = vrot.slane %v1331, %v1346
    %v1349 = vunpack.c.l.s4 1966171168
    %v1350 = vunpack.c.0.s8 %v1349
    %v1351 = vlaneseq
    %v1352 = vshrl.u32 %v1351, 7
    %v1353 = vsub.s32 %v1350, %v1352
    %v1354 = vrot.slane %v1332, %v1353
    %v1356 = vunpack.c.l.s4 1966171168
    %v1357 = vunpack.c.0.s8 %v1356
    %v1358 = vlaneseq
    %v1359 = vshrl.u32 %v1358, 7
    %v1360 = vsub.s32 %v1357, %v1359
    %v1361 = vrot.slane %v1333, %v1360
    %v1362 = vcombine.low %v1340, %v1347
    %v1363 = vcombine.high %v1340, %v1347
    %v1364 = vcombine.low %v1354, %v1361
    %v1365 = vcombine.high %v1354, %v1361
    %v1367 = vunpack.c.l.s4 1966171168
    %v1368 = vunpack.c.0.s8 %v1367
    %v1369 = vlaneseq
    %v1370 = vshrl.u32 %v1369, 7
    %v1371 = vsub.s32 %v1368, %v1370
    %v1372 = vrot.slane %v1362, %v1371
    %v1374 = vunpack.c.l.s4 1966171168
    %v1375 = vunpack.c.0.s8 %v1374
    %v1376 = vlaneseq
    %v1377 = vshrl.u32 %v1376, 7
    %v1378 = vsub.s32 %v1375, %v1377
    %v1379 = vrot.slane %v1363, %v1378
    %v1381 = vunpack.c.l.s4 1966171168
    %v1382 = vunpack.c.0.s8 %v1381
    %v1383 = vlaneseq
    %v1384 = vshrl.u32 %v1383, 7
    %v1385 = vsub.s32 %v1382, %v1384
    %v1386 = vrot.slane %v1364, %v1385
    %v1388 = vunpack.c.l.s4 1966171168
    %v1389 = vunpack.c.0.s8 %v1388
    %v1390 = vlaneseq
    %v1391 = vshrl.u32 %v1390, 7
    %v1392 = vsub.s32 %v1389, %v1391
    %v1393 = vrot.slane %v1365, %v1392
    %v1394 = vcombine.low %v1372, %v1386
    %v1395 = vcombine.low %v1379, %v1393
    %v1398 = vadd.f32 %v1110, %v1394
    %v1399 = vadd.f32 %v1114, %v1395
    %v1400 = vxor.u32 %v1398, 2147483648
    %v1401 = vxor.u32 %v1399, 2147483648
    %v1402 = vmul.f32 %v1400, 1.442695
    %v1403 = vpow.pop %v1402
    %v1404 = vmul.f32 %v1401, 1.442695
    %v1405 = vpow.pop %v1404
    %v1406 = vadd.f32 %v1403, 1.0
    %v1407 = vadd.f32 %v1405, 1.0
    %v1408 = vrcp.pop %v1406
    %v1409 = vmul.f32 1.0, %v1408
    %v1410 = vrcp.pop %v1407
    %v1411 = vmul.f32 1.0, %v1410
    %v1414 = vrot.slane %v1398, 6
    %v1415 = vrot.slane %v1399, 6
    %v1418 = vtanh.pop %v1414
    %v1419 = vtanh.pop %v1415
    %v1422 = vrot.slane %v1409, 2
    %v1423 = vrot.slane %v1411, 2
    %v1426 = vmul.f32 %v1422, %v1097
    %v1427 = vmul.f32 %v1423, %v1098
    %v1428 = vmul.f32 %v1409, %v1418
    %v1429 = vmul.f32 %v1411, %v1419
    %v1430 = vadd.f32 %v1426, %v1428
    %v1431 = vadd.f32 %v1427, %v1429
    %v1432 = vtanh.pop %v1430
    %v1433 = vtanh.pop %v1431
    %v1434 = vrot.slane %v1409, 4
    %v1435 = vrot.slane %v1411, 4
    %v1438 = vmul.f32 %v1434, %v1432
    %v1439 = vmul.f32 %v1435, %v1433
    %s1440 = scalar_lea.vmem %s0, 2
    %v1441 = vld [vmem:[%s1440] ss:$8 sm:$0xf]
    %v1442 = vld [vmem:[%s1440] ss:$8 sm:$0xf0]
    %v1443 = vor.u32 %v1441, %v1442
    %s1444 = scalar_lea.vmem %s0, 66
    %v1445 = vld [vmem:[%s1444] ss:$8 sm:$0xf]
    %v1446 = vld [vmem:[%s1444] ss:$8 sm:$0xf0]
    %v1447 = vor.u32 %v1445, %v1446
    %v1450 = vlaneseq
    %v1451 = vshrl.u32 %v1450, 7
    %v1452 = vsub.s32 0, %v1451
    %v1453 = vrot.slane %v1438, %v1452
    %v1454 = vlaneseq
    %v1455 = vshrl.u32 %v1454, 7
    %v1456 = vsub.s32 1, %v1455
    %v1457 = vrot.slane %v1438, %v1456
    %v1458 = vlaneseq
    %v1459 = vshrl.u32 %v1458, 7
    %v1460 = vsub.s32 0, %v1459
    %v1461 = vrot.slane %v1439, %v1460
    %v1462 = vlaneseq
    %v1463 = vshrl.u32 %v1462, 7
    %v1464 = vsub.s32 1, %v1463
    %v1465 = vrot.slane %v1439, %v1464
    %v1470 = vpack.c.bf16 %v1453, %v1453
    %v1471 = vpack.c.bf16 %v1457, %v1457
    %v1472 = vpack.c.bf16 %v1461, %v1461
    %v1473 = vpack.c.bf16 %v1465, %v1465
    %v1478 = vunpack.c.l.b16 %v1470
    %v1479 = vunpack.c.l.b16 %v1471
    %v1480 = vunpack.c.l.b16 %v1472
    %v1481 = vunpack.c.l.b16 %v1473
    %v1482 = vrot.slane %v1480, 7
    %v1483 = vsel %vm1150, %v1482, %v1478
    %v1484 = vrot.slane %v1481, 7
    %v1485 = vsel %vm1150, %v1484, %v1479
    %v1486 = vpack.c.b16 %v1483, %v1483
    %v1487 = vpack.c.b16 %v1485, %v1485
    %1490 = vmatprep.subr.bf16.mxu0 %v559
    %1491 = vmatpush1.bf16.msra.mxu0 %v558
    %1492 = vmatprep.subr.bf16.mxu0 %v567
    %1493 = vmatpush1.bf16.msra.mxu0 %v566
    %1494 = vmatprep.subr.bf16.mxu0 %v575
    %1495 = vmatpush1.bf16.msra.mxu0 %v574
    %1496 = vmatprep.subr.bf16.mxu0 %v583
    %1497 = vmatpush1.bf16.msra.mxu0 %v582
    %1498 = vmatprep.subr.bf16.mxu0 %v591
    %1499 = vmatpush1.bf16.msra.mxu0 %v590
    %1500 = vmatprep.subr.bf16.mxu0 %v599
    %1501 = vmatpush1.bf16.msra.mxu0 %v598
    %1502 = vmatprep.subr.bf16.mxu0 %v607
    %1503 = vmatpush1.bf16.msra.mxu0 %v606
    %1504 = vmatprep.subr.bf16.mxu0 %v615
    %1505 = vmatpush1.bf16.msra.mxu0 %v614
    %1506 = vmatprep.subr.bf16.mxu0 %v623
    %1507 = vmatpush1.bf16.msra.mxu0 %v622
    %1508 = vmatprep.subr.bf16.mxu0 %v631
    %1509 = vmatpush1.bf16.msra.mxu0 %v630
    %1510 = vmatprep.subr.bf16.mxu0 %v639
    %1511 = vmatpush1.bf16.msra.mxu0 %v638
    %1512 = vmatprep.subr.bf16.mxu0 %v647
    %1513 = vmatpush1.bf16.msra.mxu0 %v646
    %1514 = vmatprep.subr.bf16.mxu0 %v655
    %1515 = vmatpush1.bf16.msra.mxu0 %v654
    %1516 = vmatprep.subr.bf16.mxu0 %v663
    %1517 = vmatpush1.bf16.msra.mxu0 %v662
    %1518 = vmatprep.subr.bf16.mxu0 %v671
    %1519 = vmatpush1.bf16.msra.mxu0 %v670
    %1520 = vmatprep.subr.bf16.mxu0 %v679
    %1521 = vmatpush1.bf16.msra.mxu0 %v678
    %1522 = vmatprep.mubr.bf16.mxu0 %v1487
    %1523 = vmatmul.mubr.bf16.gmra.mrb[0].mxu0 %v1486
    %v1524 = vpop.f32.mrb[0].mxu0
    %v1525 = vadd.f32 0.0, %v1524
    %v1526 = vpop.f32.mrb[0].mxu0
    %v1527 = vadd.f32 0.0, %v1526
    %v1528 = vpop.f32.mrb[0].mxu0
    %v1529 = vpop.f32.mrb[0].mxu0
    %1530 = vdwg.mxu0
    %1531 = vmatprep.subr.bf16.mxu0 %v561
    %1532 = vmatpush1.bf16.msra.mxu0 %v560
    %1533 = vmatprep.subr.bf16.mxu0 %v569
    %1534 = vmatpush1.bf16.msra.mxu0 %v568
    %1535 = vmatprep.subr.bf16.mxu0 %v577
    %1536 = vmatpush1.bf16.msra.mxu0 %v576
    %1537 = vmatprep.subr.bf16.mxu0 %v585
    %1538 = vmatpush1.bf16.msra.mxu0 %v584
    %1539 = vmatprep.subr.bf16.mxu0 %v593
    %1540 = vmatpush1.bf16.msra.mxu0 %v592
    %1541 = vmatprep.subr.bf16.mxu0 %v601
    %1542 = vmatpush1.bf16.msra.mxu0 %v600
    %1543 = vmatprep.subr.bf16.mxu0 %v609
    %1544 = vmatpush1.bf16.msra.mxu0 %v608
    %1545 = vmatprep.subr.bf16.mxu0 %v617
    %1546 = vmatpush1.bf16.msra.mxu0 %v616
    %1547 = vmatprep.subr.bf16.mxu0 %v625
    %1548 = vmatpush1.bf16.msra.mxu0 %v624
    %1549 = vmatprep.subr.bf16.mxu0 %v633
    %1550 = vmatpush1.bf16.msra.mxu0 %v632
    %1551 = vmatprep.subr.bf16.mxu0 %v641
    %1552 = vmatpush1.bf16.msra.mxu0 %v640
    %1553 = vmatprep.subr.bf16.mxu0 %v649
    %1554 = vmatpush1.bf16.msra.mxu0 %v648
    %1555 = vmatprep.subr.bf16.mxu0 %v657
    %1556 = vmatpush1.bf16.msra.mxu0 %v656
    %1557 = vmatprep.subr.bf16.mxu0 %v665
    %1558 = vmatpush1.bf16.msra.mxu0 %v664
    %1559 = vmatprep.subr.bf16.mxu0 %v673
    %1560 = vmatpush1.bf16.msra.mxu0 %v672
    %1561 = vmatprep.subr.bf16.mxu0 %v681
    %1562 = vmatpush1.bf16.msra.mxu0 %v680
    %1563 = vmatprep.mubr.bf16.mxu0 %v1487
    %1564 = vmatmul.mubr.bf16.gmra.mrb[0].mxu0 %v1486
    %v1565 = vpop.f32.mrb[0].mxu0
    %v1566 = vadd.f32 0.0, %v1565
    %v1567 = vpop.f32.mrb[0].mxu0
    %v1568 = vadd.f32 0.0, %v1567
    %v1569 = vpop.f32.mrb[0].mxu0
    %v1570 = vpop.f32.mrb[0].mxu0
    %1571 = vdwg.mxu0
    %1572 = vmatprep.subr.bf16.mxu0 %v563
    %1573 = vmatpush1.bf16.msra.mxu0 %v562
    %1574 = vmatprep.subr.bf16.mxu0 %v571
    %1575 = vmatpush1.bf16.msra.mxu0 %v570
    %1576 = vmatprep.subr.bf16.mxu0 %v579
    %1577 = vmatpush1.bf16.msra.mxu0 %v578
    %1578 = vmatprep.subr.bf16.mxu0 %v587
    %1579 = vmatpush1.bf16.msra.mxu0 %v586
    %1580 = vmatprep.subr.bf16.mxu0 %v595
    %1581 = vmatpush1.bf16.msra.mxu0 %v594
    %1582 = vmatprep.subr.bf16.mxu0 %v603
    %1583 = vmatpush1.bf16.msra.mxu0 %v602
    %1584 = vmatprep.subr.bf16.mxu0 %v611
    %1585 = vmatpush1.bf16.msra.mxu0 %v610
    %1586 = vmatprep.subr.bf16.mxu0 %v619
    %1587 = vmatpush1.bf16.msra.mxu0 %v618
    %1588 = vmatprep.subr.bf16.mxu0 %v627
    %1589 = vmatpush1.bf16.msra.mxu0 %v626
    %1590 = vmatprep.subr.bf16.mxu0 %v635
    %1591 = vmatpush1.bf16.msra.mxu0 %v634
    %1592 = vmatprep.subr.bf16.mxu0 %v643
    %1593 = vmatpush1.bf16.msra.mxu0 %v642
    %1594 = vmatprep.subr.bf16.mxu0 %v651
    %1595 = vmatpush1.bf16.msra.mxu0 %v650
    %1596 = vmatprep.subr.bf16.mxu0 %v659
    %1597 = vmatpush1.bf16.msra.mxu0 %v658
    %1598 = vmatprep.subr.bf16.mxu0 %v667
    %1599 = vmatpush1.bf16.msra.mxu0 %v666
    %1600 = vmatprep.subr.bf16.mxu0 %v675
    %1601 = vmatpush1.bf16.msra.mxu0 %v674
    %1602 = vmatprep.subr.bf16.mxu0 %v683
    %1603 = vmatpush1.bf16.msra.mxu0 %v682
    %1604 = vmatprep.mubr.bf16.mxu0 %v1487
    %1605 = vmatmul.mubr.bf16.gmra.mrb[0].mxu0 %v1486
    %v1606 = vpop.f32.mrb[0].mxu0
    %v1607 = vadd.f32 0.0, %v1606
    %v1608 = vpop.f32.mrb[0].mxu0
    %v1609 = vadd.f32 0.0, %v1608
    %v1610 = vpop.f32.mrb[0].mxu0
    %v1611 = vpop.f32.mrb[0].mxu0
    %1612 = vdwg.mxu0
    %1613 = vmatprep.subr.bf16.mxu0 %v565
    %1614 = vmatpush1.bf16.msra.mxu0 %v564
    %1615 = vmatprep.subr.bf16.mxu0 %v573
    %1616 = vmatpush1.bf16.msra.mxu0 %v572
    %1617 = vmatprep.subr.bf16.mxu0 %v581
    %1618 = vmatpush1.bf16.msra.mxu0 %v580
    %1619 = vmatprep.subr.bf16.mxu0 %v589
    %1620 = vmatpush1.bf16.msra.mxu0 %v588
    %1621 = vmatprep.subr.bf16.mxu0 %v597
    %1622 = vmatpush1.bf16.msra.mxu0 %v596
    %1623 = vmatprep.subr.bf16.mxu0 %v605
    %1624 = vmatpush1.bf16.msra.mxu0 %v604
    %1625 = vmatprep.subr.bf16.mxu0 %v613
    %1626 = vmatpush1.bf16.msra.mxu0 %v612
    %1627 = vmatprep.subr.bf16.mxu0 %v621
    %1628 = vmatpush1.bf16.msra.mxu0 %v620
    %1629 = vmatprep.subr.bf16.mxu0 %v629
    %1630 = vmatpush1.bf16.msra.mxu0 %v628
    %1631 = vmatprep.subr.bf16.mxu0 %v637
    %1632 = vmatpush1.bf16.msra.mxu0 %v636
    %1633 = vmatprep.subr.bf16.mxu0 %v645
    %1634 = vmatpush1.bf16.msra.mxu0 %v644
    %1635 = vmatprep.subr.bf16.mxu0 %v653
    %1636 = vmatpush1.bf16.msra.mxu0 %v652
    %1637 = vmatprep.subr.bf16.mxu0 %v661
    %1638 = vmatpush1.bf16.msra.mxu0 %v660
    %1639 = vmatprep.subr.bf16.mxu0 %v669
    %1640 = vmatpush1.bf16.msra.mxu0 %v668
    %1641 = vmatprep.subr.bf16.mxu0 %v677
    %1642 = vmatpush1.bf16.msra.mxu0 %v676
    %1643 = vmatprep.subr.bf16.mxu0 %v685
    %1644 = vmatpush1.bf16.msra.mxu0 %v684
    %1645 = vmatprep.mubr.bf16.mxu0 %v1487
    %1646 = vmatmul.mubr.bf16.gmra.mrb[0].mxu0 %v1486
    %v1647 = vpop.f32.mrb[0].mxu0
    %v1648 = vadd.f32 0.0, %v1647
    %v1649 = vpop.f32.mrb[0].mxu0
    %v1650 = vadd.f32 0.0, %v1649
    %v1651 = vpop.f32.mrb[0].mxu0
    %v1652 = vpop.f32.mrb[0].mxu0
    %1653 = vdwg.mxu0
    %v1662 = vcombine.low %v1525, %v1527
    %v1663 = vcombine.low %v1566, %v1568
    %v1664 = vcombine.low %v1607, %v1609
    %v1665 = vcombine.low %v1648, %v1650
    %v1667 = vunpack.c.l.s4 1966171168
    %v1668 = vunpack.c.0.s8 %v1667
    %v1669 = vlaneseq
    %v1670 = vshrl.u32 %v1669, 7
    %v1671 = vsub.s32 %v1668, %v1670
    %v1672 = vrot.slane %v1662, %v1671
    %v1674 = vunpack.c.l.s4 1966171168
    %v1675 = vunpack.c.0.s8 %v1674
    %v1676 = vlaneseq
    %v1677 = vshrl.u32 %v1676, 7
    %v1678 = vsub.s32 %v1675, %v1677
    %v1679 = vrot.slane %v1663, %v1678
    %v1681 = vunpack.c.l.s4 1966171168
    %v1682 = vunpack.c.0.s8 %v1681
    %v1683 = vlaneseq
    %v1684 = vshrl.u32 %v1683, 7
    %v1685 = vsub.s32 %v1682, %v1684
    %v1686 = vrot.slane %v1664, %v1685
    %v1688 = vunpack.c.l.s4 1966171168
    %v1689 = vunpack.c.0.s8 %v1688
    %v1690 = vlaneseq
    %v1691 = vshrl.u32 %v1690, 7
    %v1692 = vsub.s32 %v1689, %v1691
    %v1693 = vrot.slane %v1665, %v1692
    %v1694 = vcombine.low %v1672, %v1679
    %v1695 = vcombine.high %v1672, %v1679
    %v1696 = vcombine.low %v1686, %v1693
    %v1697 = vcombine.high %v1686, %v1693
    %v1699 = vunpack.c.l.s4 1966171168
    %v1700 = vunpack.c.0.s8 %v1699
    %v1701 = vlaneseq
    %v1702 = vshrl.u32 %v1701, 7
    %v1703 = vsub.s32 %v1700, %v1702
    %v1704 = vrot.slane %v1694, %v1703
    %v1706 = vunpack.c.l.s4 1966171168
    %v1707 = vunpack.c.0.s8 %v1706
    %v1708 = vlaneseq
    %v1709 = vshrl.u32 %v1708, 7
    %v1710 = vsub.s32 %v1707, %v1709
    %v1711 = vrot.slane %v1695, %v1710
    %v1713 = vunpack.c.l.s4 1966171168
    %v1714 = vunpack.c.0.s8 %v1713
    %v1715 = vlaneseq
    %v1716 = vshrl.u32 %v1715, 7
    %v1717 = vsub.s32 %v1714, %v1716
    %v1718 = vrot.slane %v1696, %v1717
    %v1720 = vunpack.c.l.s4 1966171168
    %v1721 = vunpack.c.0.s8 %v1720
    %v1722 = vlaneseq
    %v1723 = vshrl.u32 %v1722, 7
    %v1724 = vsub.s32 %v1721, %v1723
    %v1725 = vrot.slane %v1697, %v1724
    %v1726 = vcombine.low %v1704, %v1718
    %v1727 = vcombine.low %v1711, %v1725
    %v1730 = vadd.f32 %v1443, %v1726
    %v1731 = vadd.f32 %v1447, %v1727
    %v1732 = vxor.u32 %v1730, 2147483648
    %v1733 = vxor.u32 %v1731, 2147483648
    %v1734 = vmul.f32 %v1732, 1.442695
    %v1735 = vpow.pop %v1734
    %v1736 = vmul.f32 %v1733, 1.442695
    %v1737 = vpow.pop %v1736
    %v1738 = vadd.f32 %v1735, 1.0
    %v1739 = vadd.f32 %v1737, 1.0
    %v1740 = vrcp.pop %v1738
    %v1741 = vmul.f32 1.0, %v1740
    %v1742 = vrcp.pop %v1739
    %v1743 = vmul.f32 1.0, %v1742
    %v1746 = vrot.slane %v1730, 6
    %v1747 = vrot.slane %v1731, 6
    %v1750 = vtanh.pop %v1746
    %v1751 = vtanh.pop %v1747
    %v1754 = vrot.slane %v1741, 2
    %v1755 = vrot.slane %v1743, 2
    %v1758 = vmul.f32 %v1754, %v1430
    %v1759 = vmul.f32 %v1755, %v1431
    %v1760 = vmul.f32 %v1741, %v1750
    %v1761 = vmul.f32 %v1743, %v1751
    %v1762 = vadd.f32 %v1758, %v1760
    %v1763 = vadd.f32 %v1759, %v1761
    %v1764 = vtanh.pop %v1762
    %v1765 = vtanh.pop %v1763
    %v1766 = vrot.slane %v1741, 4
    %v1767 = vrot.slane %v1743, 4
    %v1770 = vmul.f32 %v1766, %v1764
    %v1771 = vmul.f32 %v1767, %v1765
    %s1772 = scalar_lea.vmem %s0, 3
    %v1773 = vld [vmem:[%s1772] ss:$8 sm:$0xf]
    %v1774 = vld [vmem:[%s1772] ss:$8 sm:$0xf0]
    %v1775 = vor.u32 %v1773, %v1774
    %s1776 = scalar_lea.vmem %s0, 67
    %v1777 = vld [vmem:[%s1776] ss:$8 sm:$0xf]
    %v1778 = vld [vmem:[%s1776] ss:$8 sm:$0xf0]
    %v1779 = vor.u32 %v1777, %v1778
    %v1782 = vlaneseq
    %v1783 = vshrl.u32 %v1782, 7
    %v1784 = vsub.s32 0, %v1783
    %v1785 = vrot.slane %v1770, %v1784
    %v1786 = vlaneseq
    %v1787 = vshrl.u32 %v1786, 7
    %v1788 = vsub.s32 1, %v1787
    %v1789 = vrot.slane %v1770, %v1788
    %v1790 = vlaneseq
    %v1791 = vshrl.u32 %v1790, 7
    %v1792 = vsub.s32 0, %v1791
    %v1793 = vrot.slane %v1771, %v1792
    %v1794 = vlaneseq
    %v1795 = vshrl.u32 %v1794, 7
    %v1796 = vsub.s32 1, %v1795
    %v1797 = vrot.slane %v1771, %v1796
    %v1802 = vpack.c.bf16 %v1785, %v1785
    %v1803 = vpack.c.bf16 %v1789, %v1789
    %v1804 = vpack.c.bf16 %v1793, %v1793
    %v1805 = vpack.c.bf16 %v1797, %v1797
    %v1810 = vunpack.c.l.b16 %v1802
    %v1811 = vunpack.c.l.b16 %v1803
    %v1812 = vunpack.c.l.b16 %v1804
    %v1813 = vunpack.c.l.b16 %v1805
    %v1814 = vrot.slane %v1812, 7
    %v1815 = vsel %vm1150, %v1814, %v1810
    %v1816 = vrot.slane %v1813, 7
    %v1817 = vsel %vm1150, %v1816, %v1811
    %v1818 = vpack.c.b16 %v1815, %v1815
    %v1819 = vpack.c.b16 %v1817, %v1817
    %1822 = vmatprep.subr.bf16.mxu0 %v559
    %1823 = vmatpush1.bf16.msra.mxu0 %v558
    %1824 = vmatprep.subr.bf16.mxu0 %v567
    %1825 = vmatpush1.bf16.msra.mxu0 %v566
    %1826 = vmatprep.subr.bf16.mxu0 %v575
    %1827 = vmatpush1.bf16.msra.mxu0 %v574
    %1828 = vmatprep.subr.bf16.mxu0 %v583
    %1829 = vmatpush1.bf16.msra.mxu0 %v582
    %1830 = vmatprep.subr.bf16.mxu0 %v591
    %1831 = vmatpush1.bf16.msra.mxu0 %v590
    %1832 = vmatprep.subr.bf16.mxu0 %v599
    %1833 = vmatpush1.bf16.msra.mxu0 %v598
    %1834 = vmatprep.subr.bf16.mxu0 %v607
    %1835 = vmatpush1.bf16.msra.mxu0 %v606
    %1836 = vmatprep.subr.bf16.mxu0 %v615
    %1837 = vmatpush1.bf16.msra.mxu0 %v614
    %1838 = vmatprep.subr.bf16.mxu0 %v623
    %1839 = vmatpush1.bf16.msra.mxu0 %v622
    %1840 = vmatprep.subr.bf16.mxu0 %v631
    %1841 = vmatpush1.bf16.msra.mxu0 %v630
    %1842 = vmatprep.subr.bf16.mxu0 %v639
    %1843 = vmatpush1.bf16.msra.mxu0 %v638
    %1844 = vmatprep.subr.bf16.mxu0 %v647
    %1845 = vmatpush1.bf16.msra.mxu0 %v646
    %1846 = vmatprep.subr.bf16.mxu0 %v655
    %1847 = vmatpush1.bf16.msra.mxu0 %v654
    %1848 = vmatprep.subr.bf16.mxu0 %v663
    %1849 = vmatpush1.bf16.msra.mxu0 %v662
    %1850 = vmatprep.subr.bf16.mxu0 %v671
    %1851 = vmatpush1.bf16.msra.mxu0 %v670
    %1852 = vmatprep.subr.bf16.mxu0 %v679
    %1853 = vmatpush1.bf16.msra.mxu0 %v678
    %1854 = vmatprep.mubr.bf16.mxu0 %v1819
    %1855 = vmatmul.mubr.bf16.gmra.mrb[0].mxu0 %v1818
    %v1856 = vpop.f32.mrb[0].mxu0
    %v1857 = vadd.f32 0.0, %v1856
    %v1858 = vpop.f32.mrb[0].mxu0
    %v1859 = vadd.f32 0.0, %v1858
    %v1860 = vpop.f32.mrb[0].mxu0
    %v1861 = vpop.f32.mrb[0].mxu0
    %1862 = vdwg.mxu0
    %1863 = vmatprep.subr.bf16.mxu0 %v561
    %1864 = vmatpush1.bf16.msra.mxu0 %v560
    %1865 = vmatprep.subr.bf16.mxu0 %v569
    %1866 = vmatpush1.bf16.msra.mxu0 %v568
    %1867 = vmatprep.subr.bf16.mxu0 %v577
    %1868 = vmatpush1.bf16.msra.mxu0 %v576
    %1869 = vmatprep.subr.bf16.mxu0 %v585
    %1870 = vmatpush1.bf16.msra.mxu0 %v584
    %1871 = vmatprep.subr.bf16.mxu0 %v593
    %1872 = vmatpush1.bf16.msra.mxu0 %v592
    %1873 = vmatprep.subr.bf16.mxu0 %v601
    %1874 = vmatpush1.bf16.msra.mxu0 %v600
    %1875 = vmatprep.subr.bf16.mxu0 %v609
    %1876 = vmatpush1.bf16.msra.mxu0 %v608
    %1877 = vmatprep.subr.bf16.mxu0 %v617
    %1878 = vmatpush1.bf16.msra.mxu0 %v616
    %1879 = vmatprep.subr.bf16.mxu0 %v625
    %1880 = vmatpush1.bf16.msra.mxu0 %v624
    %1881 = vmatprep.subr.bf16.mxu0 %v633
    %1882 = vmatpush1.bf16.msra.mxu0 %v632
    %1883 = vmatprep.subr.bf16.mxu0 %v641
    %1884 = vmatpush1.bf16.msra.mxu0 %v640
    %1885 = vmatprep.subr.bf16.mxu0 %v649
    %1886 = vmatpush1.bf16.msra.mxu0 %v648
    %1887 = vmatprep.subr.bf16.mxu0 %v657
    %1888 = vmatpush1.bf16.msra.mxu0 %v656
    %1889 = vmatprep.subr.bf16.mxu0 %v665
    %1890 = vmatpush1.bf16.msra.mxu0 %v664
    %1891 = vmatprep.subr.bf16.mxu0 %v673
    %1892 = vmatpush1.bf16.msra.mxu0 %v672
    %1893 = vmatprep.subr.bf16.mxu0 %v681
    %1894 = vmatpush1.bf16.msra.mxu0 %v680
    %1895 = vmatprep.mubr.bf16.mxu0 %v1819
    %1896 = vmatmul.mubr.bf16.gmra.mrb[0].mxu0 %v1818
    %v1897 = vpop.f32.mrb[0].mxu0
    %v1898 = vadd.f32 0.0, %v1897
    %v1899 = vpop.f32.mrb[0].mxu0
    %v1900 = vadd.f32 0.0, %v1899
    %v1901 = vpop.f32.mrb[0].mxu0
    %v1902 = vpop.f32.mrb[0].mxu0
    %1903 = vdwg.mxu0
    %1904 = vmatprep.subr.bf16.mxu0 %v563
    %1905 = vmatpush1.bf16.msra.mxu0 %v562
    %1906 = vmatprep.subr.bf16.mxu0 %v571
    %1907 = vmatpush1.bf16.msra.mxu0 %v570
    %1908 = vmatprep.subr.bf16.mxu0 %v579
    %1909 = vmatpush1.bf16.msra.mxu0 %v578
    %1910 = vmatprep.subr.bf16.mxu0 %v587
    %1911 = vmatpush1.bf16.msra.mxu0 %v586
    %1912 = vmatprep.subr.bf16.mxu0 %v595
    %1913 = vmatpush1.bf16.msra.mxu0 %v594
    %1914 = vmatprep.subr.bf16.mxu0 %v603
    %1915 = vmatpush1.bf16.msra.mxu0 %v602
    %1916 = vmatprep.subr.bf16.mxu0 %v611
    %1917 = vmatpush1.bf16.msra.mxu0 %v610
    %1918 = vmatprep.subr.bf16.mxu0 %v619
    %1919 = vmatpush1.bf16.msra.mxu0 %v618
    %1920 = vmatprep.subr.bf16.mxu0 %v627
    %1921 = vmatpush1.bf16.msra.mxu0 %v626
    %1922 = vmatprep.subr.bf16.mxu0 %v635
    %1923 = vmatpush1.bf16.msra.mxu0 %v634
    %1924 = vmatprep.subr.bf16.mxu0 %v643
    %1925 = vmatpush1.bf16.msra.mxu0 %v642
    %1926 = vmatprep.subr.bf16.mxu0 %v651
    %1927 = vmatpush1.bf16.msra.mxu0 %v650
    %1928 = vmatprep.subr.bf16.mxu0 %v659
    %1929 = vmatpush1.bf16.msra.mxu0 %v658
    %1930 = vmatprep.subr.bf16.mxu0 %v667
    %1931 = vmatpush1.bf16.msra.mxu0 %v666
    %1932 = vmatprep.subr.bf16.mxu0 %v675
    %1933 = vmatpush1.bf16.msra.mxu0 %v674
    %1934 = vmatprep.subr.bf16.mxu0 %v683
    %1935 = vmatpush1.bf16.msra.mxu0 %v682
    %1936 = vmatprep.mubr.bf16.mxu0 %v1819
    %1937 = vmatmul.mubr.bf16.gmra.mrb[0].mxu0 %v1818
    %v1938 = vpop.f32.mrb[0].mxu0
    %v1939 = vadd.f32 0.0, %v1938
    %v1940 = vpop.f32.mrb[0].mxu0
    %v1941 = vadd.f32 0.0, %v1940
    %v1942 = vpop.f32.mrb[0].mxu0
    %v1943 = vpop.f32.mrb[0].mxu0
    %1944 = vdwg.mxu0
    %1945 = vmatprep.subr.bf16.mxu0 %v565
    %1946 = vmatpush1.bf16.msra.mxu0 %v564
    %1947 = vmatprep.subr.bf16.mxu0 %v573
    %1948 = vmatpush1.bf16.msra.mxu0 %v572
    %1949 = vmatprep.subr.bf16.mxu0 %v581
    %1950 = vmatpush1.bf16.msra.mxu0 %v580
    %1951 = vmatprep.subr.bf16.mxu0 %v589
    %1952 = vmatpush1.bf16.msra.mxu0 %v588
    %1953 = vmatprep.subr.bf16.mxu0 %v597
    %1954 = vmatpush1.bf16.msra.mxu0 %v596
    %1955 = vmatprep.subr.bf16.mxu0 %v605
    %1956 = vmatpush1.bf16.msra.mxu0 %v604
    %1957 = vmatprep.subr.bf16.mxu0 %v613
    %1958 = vmatpush1.bf16.msra.mxu0 %v612
    %1959 = vmatprep.subr.bf16.mxu0 %v621
    %1960 = vmatpush1.bf16.msra.mxu0 %v620
    %1961 = vmatprep.subr.bf16.mxu0 %v629
    %1962 = vmatpush1.bf16.msra.mxu0 %v628
    %1963 = vmatprep.subr.bf16.mxu0 %v637
    %1964 = vmatpush1.bf16.msra.mxu0 %v636
    %1965 = vmatprep.subr.bf16.mxu0 %v645
    %1966 = vmatpush1.bf16.msra.mxu0 %v644
    %1967 = vmatprep.subr.bf16.mxu0 %v653
    %1968 = vmatpush1.bf16.msra.mxu0 %v652
    %1969 = vmatprep.subr.bf16.mxu0 %v661
    %1970 = vmatpush1.bf16.msra.mxu0 %v660
    %1971 = vmatprep.subr.bf16.mxu0 %v669
    %1972 = vmatpush1.bf16.msra.mxu0 %v668
    %1973 = vmatprep.subr.bf16.mxu0 %v677
    %1974 = vmatpush1.bf16.msra.mxu0 %v676
    %1975 = vmatprep.subr.bf16.mxu0 %v685
    %1976 = vmatpush1.bf16.msra.mxu0 %v684
    %1977 = vmatprep.mubr.bf16.mxu0 %v1819
    %1978 = vmatmul.mubr.bf16.gmra.mrb[0].mxu0 %v1818
    %v1979 = vpop.f32.mrb[0].mxu0
    %v1980 = vadd.f32 0.0, %v1979
    %v1981 = vpop.f32.mrb[0].mxu0
    %v1982 = vadd.f32 0.0, %v1981
    %v1983 = vpop.f32.mrb[0].mxu0
    %v1984 = vpop.f32.mrb[0].mxu0
    %1985 = vdwg.mxu0
    %v1994 = vcombine.low %v1857, %v1859
    %v1995 = vcombine.low %v1898, %v1900
    %v1996 = vcombine.low %v1939, %v1941
    %v1997 = vcombine.low %v1980, %v1982
    %v1999 = vunpack.c.l.s4 1966171168
    %v2000 = vunpack.c.0.s8 %v1999
    %v2001 = vlaneseq
    %v2002 = vshrl.u32 %v2001, 7
    %v2003 = vsub.s32 %v2000, %v2002
    %v2004 = vrot.slane %v1994, %v2003
    %v2006 = vunpack.c.l.s4 1966171168
    %v2007 = vunpack.c.0.s8 %v2006
    %v2008 = vlaneseq
    %v2009 = vshrl.u32 %v2008, 7
    %v2010 = vsub.s32 %v2007, %v2009
    %v2011 = vrot.slane %v1995, %v2010
    %v2013 = vunpack.c.l.s4 1966171168
    %v2014 = vunpack.c.0.s8 %v2013
    %v2015 = vlaneseq
    %v2016 = vshrl.u32 %v2015, 7
    %v2017 = vsub.s32 %v2014, %v2016
    %v2018 = vrot.slane %v1996, %v2017
    %v2020 = vunpack.c.l.s4 1966171168
    %v2021 = vunpack.c.0.s8 %v2020
    %v2022 = vlaneseq
    %v2023 = vshrl.u32 %v2022, 7
    %v2024 = vsub.s32 %v2021, %v2023
    %v2025 = vrot.slane %v1997, %v2024
    %v2026 = vcombine.low %v2004, %v2011
    %v2027 = vcombine.high %v2004, %v2011
    %v2028 = vcombine.low %v2018, %v2025
    %v2029 = vcombine.high %v2018, %v2025
    %v2031 = vunpack.c.l.s4 1966171168
    %v2032 = vunpack.c.0.s8 %v2031
    %v2033 = vlaneseq
    %v2034 = vshrl.u32 %v2033, 7
    %v2035 = vsub.s32 %v2032, %v2034
    %v2036 = vrot.slane %v2026, %v2035
    %v2038 = vunpack.c.l.s4 1966171168
    %v2039 = vunpack.c.0.s8 %v2038
    %v2040 = vlaneseq
    %v2041 = vshrl.u32 %v2040, 7
    %v2042 = vsub.s32 %v2039, %v2041
    %v2043 = vrot.slane %v2027, %v2042
    %v2045 = vunpack.c.l.s4 1966171168
    %v2046 = vunpack.c.0.s8 %v2045
    %v2047 = vlaneseq
    %v2048 = vshrl.u32 %v2047, 7
    %v2049 = vsub.s32 %v2046, %v2048
    %v2050 = vrot.slane %v2028, %v2049
    %v2052 = vunpack.c.l.s4 1966171168
    %v2053 = vunpack.c.0.s8 %v2052
    %v2054 = vlaneseq
    %v2055 = vshrl.u32 %v2054, 7
    %v2056 = vsub.s32 %v2053, %v2055
    %v2057 = vrot.slane %v2029, %v2056
    %v2058 = vcombine.low %v2036, %v2050
    %v2059 = vcombine.low %v2043, %v2057
    %v2062 = vadd.f32 %v1775, %v2058
    %v2063 = vadd.f32 %v1779, %v2059
    %v2064 = vxor.u32 %v2062, 2147483648
    %v2065 = vxor.u32 %v2063, 2147483648
    %v2066 = vmul.f32 %v2064, 1.442695
    %v2067 = vpow.pop %v2066
    %v2068 = vmul.f32 %v2065, 1.442695
    %v2069 = vpow.pop %v2068
    %v2070 = vadd.f32 %v2067, 1.0
    %v2071 = vadd.f32 %v2069, 1.0
    %v2072 = vrcp.pop %v2070
    %v2073 = vmul.f32 1.0, %v2072
    %v2074 = vrcp.pop %v2071
    %v2075 = vmul.f32 1.0, %v2074
    %v2078 = vrot.slane %v2062, 6
    %v2079 = vrot.slane %v2063, 6
    %v2082 = vtanh.pop %v2078
    %v2083 = vtanh.pop %v2079
    %v2086 = vrot.slane %v2073, 2
    %v2087 = vrot.slane %v2075, 2
    %v2090 = vmul.f32 %v2086, %v1762
    %v2091 = vmul.f32 %v2087, %v1763
    %v2092 = vmul.f32 %v2073, %v2082
    %v2093 = vmul.f32 %v2075, %v2083
    %v2094 = vadd.f32 %v2090, %v2092
    %v2095 = vadd.f32 %v2091, %v2093
    %v2096 = vtanh.pop %v2094
    %v2097 = vtanh.pop %v2095
    %v2098 = vrot.slane %v2073, 4
    %v2099 = vrot.slane %v2075, 4
    %v2102 = vmul.f32 %v2098, %v2096
    %v2103 = vmul.f32 %v2099, %v2097
    %s2104 = scalar_lea.vmem %s0, 4
    %v2105 = vld [vmem:[%s2104] ss:$8 sm:$0xf]
    %v2106 = vld [vmem:[%s2104] ss:$8 sm:$0xf0]
    %v2107 = vor.u32 %v2105, %v2106
    %s2108 = scalar_lea.vmem %s0, 68
    %v2109 = vld [vmem:[%s2108] ss:$8 sm:$0xf]
    %v2110 = vld [vmem:[%s2108] ss:$8 sm:$0xf0]
    %v2111 = vor.u32 %v2109, %v2110
    %v2114 = vlaneseq
    %v2115 = vshrl.u32 %v2114, 7
    %v2116 = vsub.s32 0, %v2115
    %v2117 = vrot.slane %v2102, %v2116
    %v2118 = vlaneseq
    %v2119 = vshrl.u32 %v2118, 7
    %v2120 = vsub.s32 1, %v2119
    %v2121 = vrot.slane %v2102, %v2120
    %v2122 = vlaneseq
    %v2123 = vshrl.u32 %v2122, 7
    %v2124 = vsub.s32 0, %v2123
    %v2125 = vrot.slane %v2103, %v2124
    %v2126 = vlaneseq
    %v2127 = vshrl.u32 %v2126, 7
    %v2128 = vsub.s32 1, %v2127
    %v2129 = vrot.slane %v2103, %v2128
    %v2134 = vpack.c.bf16 %v2117, %v2117
    %v2135 = vpack.c.bf16 %v2121, %v2121
    %v2136 = vpack.c.bf16 %v2125, %v2125
    %v2137 = vpack.c.bf16 %v2129, %v2129
    %v2142 = vunpack.c.l.b16 %v2134
    %v2143 = vunpack.c.l.b16 %v2135
    %v2144 = vunpack.c.l.b16 %v2136
    %v2145 = vunpack.c.l.b16 %v2137
    %v2146 = vrot.slane %v2144, 7
    %v2147 = vsel %vm1150, %v2146, %v2142
    %v2148 = vrot.slane %v2145, 7
    %v2149 = vsel %vm1150, %v2148, %v2143
    %v2150 = vpack.c.b16 %v2147, %v2147
    %v2151 = vpack.c.b16 %v2149, %v2149
    %2154 = vmatprep.subr.bf16.mxu0 %v559
    %2155 = vmatpush1.bf16.msra.mxu0 %v558
    %2156 = vmatprep.subr.bf16.mxu0 %v567
    %2157 = vmatpush1.bf16.msra.mxu0 %v566
    %2158 = vmatprep.subr.bf16.mxu0 %v575
    %2159 = vmatpush1.bf16.msra.mxu0 %v574
    %2160 = vmatprep.subr.bf16.mxu0 %v583
    %2161 = vmatpush1.bf16.msra.mxu0 %v582
    %2162 = vmatprep.subr.bf16.mxu0 %v591
    %2163 = vmatpush1.bf16.msra.mxu0 %v590
    %2164 = vmatprep.subr.bf16.mxu0 %v599
    %2165 = vmatpush1.bf16.msra.mxu0 %v598
    %2166 = vmatprep.subr.bf16.mxu0 %v607
    %2167 = vmatpush1.bf16.msra.mxu0 %v606
    %2168 = vmatprep.subr.bf16.mxu0 %v615
    %2169 = vmatpush1.bf16.msra.mxu0 %v614
    %2170 = vmatprep.subr.bf16.mxu0 %v623
    %2171 = vmatpush1.bf16.msra.mxu0 %v622
    %2172 = vmatprep.subr.bf16.mxu0 %v631
    %2173 = vmatpush1.bf16.msra.mxu0 %v630
    %2174 = vmatprep.subr.bf16.mxu0 %v639
    %2175 = vmatpush1.bf16.msra.mxu0 %v638
    %2176 = vmatprep.subr.bf16.mxu0 %v647
    %2177 = vmatpush1.bf16.msra.mxu0 %v646
    %2178 = vmatprep.subr.bf16.mxu0 %v655
    %2179 = vmatpush1.bf16.msra.mxu0 %v654
    %2180 = vmatprep.subr.bf16.mxu0 %v663
    %2181 = vmatpush1.bf16.msra.mxu0 %v662
    %2182 = vmatprep.subr.bf16.mxu0 %v671
    %2183 = vmatpush1.bf16.msra.mxu0 %v670
    %2184 = vmatprep.subr.bf16.mxu0 %v679
    %2185 = vmatpush1.bf16.msra.mxu0 %v678
    %2186 = vmatprep.mubr.bf16.mxu0 %v2151
    %2187 = vmatmul.mubr.bf16.gmra.mrb[0].mxu0 %v2150
    %v2188 = vpop.f32.mrb[0].mxu0
    %v2189 = vadd.f32 0.0, %v2188
    %v2190 = vpop.f32.mrb[0].mxu0
    %v2191 = vadd.f32 0.0, %v2190
    %v2192 = vpop.f32.mrb[0].mxu0
    %v2193 = vpop.f32.mrb[0].mxu0
    %2194 = vdwg.mxu0
    %2195 = vmatprep.subr.bf16.mxu0 %v561
    %2196 = vmatpush1.bf16.msra.mxu0 %v560
    %2197 = vmatprep.subr.bf16.mxu0 %v569
    %2198 = vmatpush1.bf16.msra.mxu0 %v568
    %2199 = vmatprep.subr.bf16.mxu0 %v577
    %2200 = vmatpush1.bf16.msra.mxu0 %v576
    %2201 = vmatprep.subr.bf16.mxu0 %v585
    %2202 = vmatpush1.bf16.msra.mxu0 %v584
    %2203 = vmatprep.subr.bf16.mxu0 %v593
    %2204 = vmatpush1.bf16.msra.mxu0 %v592
    %2205 = vmatprep.subr.bf16.mxu0 %v601
    %2206 = vmatpush1.bf16.msra.mxu0 %v600
    %2207 = vmatprep.subr.bf16.mxu0 %v609
    %2208 = vmatpush1.bf16.msra.mxu0 %v608
    %2209 = vmatprep.subr.bf16.mxu0 %v617
    %2210 = vmatpush1.bf16.msra.mxu0 %v616
    %2211 = vmatprep.subr.bf16.mxu0 %v625
    %2212 = vmatpush1.bf16.msra.mxu0 %v624
    %2213 = vmatprep.subr.bf16.mxu0 %v633
    %2214 = vmatpush1.bf16.msra.mxu0 %v632
    %2215 = vmatprep.subr.bf16.mxu0 %v641
    %2216 = vmatpush1.bf16.msra.mxu0 %v640
    %2217 = vmatprep.subr.bf16.mxu0 %v649
    %2218 = vmatpush1.bf16.msra.mxu0 %v648
    %2219 = vmatprep.subr.bf16.mxu0 %v657
    %2220 = vmatpush1.bf16.msra.mxu0 %v656
    %2221 = vmatprep.subr.bf16.mxu0 %v665
    %2222 = vmatpush1.bf16.msra.mxu0 %v664
    %2223 = vmatprep.subr.bf16.mxu0 %v673
    %2224 = vmatpush1.bf16.msra.mxu0 %v672
    %2225 = vmatprep.subr.bf16.mxu0 %v681
    %2226 = vmatpush1.bf16.msra.mxu0 %v680
    %2227 = vmatprep.mubr.bf16.mxu0 %v2151
    %2228 = vmatmul.mubr.bf16.gmra.mrb[0].mxu0 %v2150
    %v2229 = vpop.f32.mrb[0].mxu0
    %v2230 = vadd.f32 0.0, %v2229
    %v2231 = vpop.f32.mrb[0].mxu0
    %v2232 = vadd.f32 0.0, %v2231
    %v2233 = vpop.f32.mrb[0].mxu0
    %v2234 = vpop.f32.mrb[0].mxu0
    %2235 = vdwg.mxu0
    %2236 = vmatprep.subr.bf16.mxu0 %v563
    %2237 = vmatpush1.bf16.msra.mxu0 %v562
    %2238 = vmatprep.subr.bf16.mxu0 %v571
    %2239 = vmatpush1.bf16.msra.mxu0 %v570
    %2240 = vmatprep.subr.bf16.mxu0 %v579
    %2241 = vmatpush1.bf16.msra.mxu0 %v578
    %2242 = vmatprep.subr.bf16.mxu0 %v587
    %2243 = vmatpush1.bf16.msra.mxu0 %v586
    %2244 = vmatprep.subr.bf16.mxu0 %v595
    %2245 = vmatpush1.bf16.msra.mxu0 %v594
    %2246 = vmatprep.subr.bf16.mxu0 %v603
    %2247 = vmatpush1.bf16.msra.mxu0 %v602
    %2248 = vmatprep.subr.bf16.mxu0 %v611
    %2249 = vmatpush1.bf16.msra.mxu0 %v610
    %2250 = vmatprep.subr.bf16.mxu0 %v619
    %2251 = vmatpush1.bf16.msra.mxu0 %v618
    %2252 = vmatprep.subr.bf16.mxu0 %v627
    %2253 = vmatpush1.bf16.msra.mxu0 %v626
    %2254 = vmatprep.subr.bf16.mxu0 %v635
    %2255 = vmatpush1.bf16.msra.mxu0 %v634
    %2256 = vmatprep.subr.bf16.mxu0 %v643
    %2257 = vmatpush1.bf16.msra.mxu0 %v642
    %2258 = vmatprep.subr.bf16.mxu0 %v651
    %2259 = vmatpush1.bf16.msra.mxu0 %v650
    %2260 = vmatprep.subr.bf16.mxu0 %v659
    %2261 = vmatpush1.bf16.msra.mxu0 %v658
    %2262 = vmatprep.subr.bf16.mxu0 %v667
    %2263 = vmatpush1.bf16.msra.mxu0 %v666
    %2264 = vmatprep.subr.bf16.mxu0 %v675
    %2265 = vmatpush1.bf16.msra.mxu0 %v674
    %2266 = vmatprep.subr.bf16.mxu0 %v683
    %2267 = vmatpush1.bf16.msra.mxu0 %v682
    %2268 = vmatprep.mubr.bf16.mxu0 %v2151
    %2269 = vmatmul.mubr.bf16.gmra.mrb[0].mxu0 %v2150
    %v2270 = vpop.f32.mrb[0].mxu0
    %v2271 = vadd.f32 0.0, %v2270
    %v2272 = vpop.f32.mrb[0].mxu0
    %v2273 = vadd.f32 0.0, %v2272
    %v2274 = vpop.f32.mrb[0].mxu0
    %v2275 = vpop.f32.mrb[0].mxu0
    %2276 = vdwg.mxu0
    %2277 = vmatprep.subr.bf16.mxu0 %v565
    %2278 = vmatpush1.bf16.msra.mxu0 %v564
    %2279 = vmatprep.subr.bf16.mxu0 %v573
    %2280 = vmatpush1.bf16.msra.mxu0 %v572
    %2281 = vmatprep.subr.bf16.mxu0 %v581
    %2282 = vmatpush1.bf16.msra.mxu0 %v580
    %2283 = vmatprep.subr.bf16.mxu0 %v589
    %2284 = vmatpush1.bf16.msra.mxu0 %v588
    %2285 = vmatprep.subr.bf16.mxu0 %v597
    %2286 = vmatpush1.bf16.msra.mxu0 %v596
    %2287 = vmatprep.subr.bf16.mxu0 %v605
    %2288 = vmatpush1.bf16.msra.mxu0 %v604
    %2289 = vmatprep.subr.bf16.mxu0 %v613
    %2290 = vmatpush1.bf16.msra.mxu0 %v612
    %2291 = vmatprep.subr.bf16.mxu0 %v621
    %2292 = vmatpush1.bf16.msra.mxu0 %v620
    %2293 = vmatprep.subr.bf16.mxu0 %v629
    %2294 = vmatpush1.bf16.msra.mxu0 %v628
    %2295 = vmatprep.subr.bf16.mxu0 %v637
    %2296 = vmatpush1.bf16.msra.mxu0 %v636
    %2297 = vmatprep.subr.bf16.mxu0 %v645
    %2298 = vmatpush1.bf16.msra.mxu0 %v644
    %2299 = vmatprep.subr.bf16.mxu0 %v653
    %2300 = vmatpush1.bf16.msra.mxu0 %v652
    %2301 = vmatprep.subr.bf16.mxu0 %v661
    %2302 = vmatpush1.bf16.msra.mxu0 %v660
    %2303 = vmatprep.subr.bf16.mxu0 %v669
    %2304 = vmatpush1.bf16.msra.mxu0 %v668
    %2305 = vmatprep.subr.bf16.mxu0 %v677
    %2306 = vmatpush1.bf16.msra.mxu0 %v676
    %2307 = vmatprep.subr.bf16.mxu0 %v685
    %2308 = vmatpush1.bf16.msra.mxu0 %v684
    %2309 = vmatprep.mubr.bf16.mxu0 %v2151
    %2310 = vmatmul.mubr.bf16.gmra.mrb[0].mxu0 %v2150
    %v2311 = vpop.f32.mrb[0].mxu0
    %v2312 = vadd.f32 0.0, %v2311
    %v2313 = vpop.f32.mrb[0].mxu0
    %v2314 = vadd.f32 0.0, %v2313
    %v2315 = vpop.f32.mrb[0].mxu0
    %v2316 = vpop.f32.mrb[0].mxu0
    %2317 = vdwg.mxu0
    %v2326 = vcombine.low %v2189, %v2191
    %v2327 = vcombine.low %v2230, %v2232
    %v2328 = vcombine.low %v2271, %v2273
    %v2329 = vcombine.low %v2312, %v2314
    %v2331 = vunpack.c.l.s4 1966171168
    %v2332 = vunpack.c.0.s8 %v2331
    %v2333 = vlaneseq
    %v2334 = vshrl.u32 %v2333, 7
    %v2335 = vsub.s32 %v2332, %v2334
    %v2336 = vrot.slane %v2326, %v2335
    %v2338 = vunpack.c.l.s4 1966171168
    %v2339 = vunpack.c.0.s8 %v2338
    %v2340 = vlaneseq
    %v2341 = vshrl.u32 %v2340, 7
    %v2342 = vsub.s32 %v2339, %v2341
    %v2343 = vrot.slane %v2327, %v2342
    %v2345 = vunpack.c.l.s4 1966171168
    %v2346 = vunpack.c.0.s8 %v2345
    %v2347 = vlaneseq
    %v2348 = vshrl.u32 %v2347, 7
    %v2349 = vsub.s32 %v2346, %v2348
    %v2350 = vrot.slane %v2328, %v2349
    %v2352 = vunpack.c.l.s4 1966171168
    %v2353 = vunpack.c.0.s8 %v2352
    %v2354 = vlaneseq
    %v2355 = vshrl.u32 %v2354, 7
    %v2356 = vsub.s32 %v2353, %v2355
    %v2357 = vrot.slane %v2329, %v2356
    %v2358 = vcombine.low %v2336, %v2343
    %v2359 = vcombine.high %v2336, %v2343
    %v2360 = vcombine.low %v2350, %v2357
    %v2361 = vcombine.high %v2350, %v2357
    %v2363 = vunpack.c.l.s4 1966171168
    %v2364 = vunpack.c.0.s8 %v2363
    %v2365 = vlaneseq
    %v2366 = vshrl.u32 %v2365, 7
    %v2367 = vsub.s32 %v2364, %v2366
    %v2368 = vrot.slane %v2358, %v2367
    %v2370 = vunpack.c.l.s4 1966171168
    %v2371 = vunpack.c.0.s8 %v2370
    %v2372 = vlaneseq
    %v2373 = vshrl.u32 %v2372, 7
    %v2374 = vsub.s32 %v2371, %v2373
    %v2375 = vrot.slane %v2359, %v2374
    %v2377 = vunpack.c.l.s4 1966171168
    %v2378 = vunpack.c.0.s8 %v2377
    %v2379 = vlaneseq
    %v2380 = vshrl.u32 %v2379, 7
    %v2381 = vsub.s32 %v2378, %v2380
    %v2382 = vrot.slane %v2360, %v2381
    %v2384 = vunpack.c.l.s4 1966171168
    %v2385 = vunpack.c.0.s8 %v2384
    %v2386 = vlaneseq
    %v2387 = vshrl.u32 %v2386, 7
    %v2388 = vsub.s32 %v2385, %v2387
    %v2389 = vrot.slane %v2361, %v2388
    %v2390 = vcombine.low %v2368, %v2382
    %v2391 = vcombine.low %v2375, %v2389
    %v2394 = vadd.f32 %v2107, %v2390
    %v2395 = vadd.f32 %v2111, %v2391
    %v2396 = vxor.u32 %v2394, 2147483648
    %v2397 = vxor.u32 %v2395, 2147483648
    %v2398 = vmul.f32 %v2396, 1.442695
    %v2399 = vpow.pop %v2398
    %v2400 = vmul.f32 %v2397, 1.442695
    %v2401 = vpow.pop %v2400
    %v2402 = vadd.f32 %v2399, 1.0
    %v2403 = vadd.f32 %v2401, 1.0
    %v2404 = vrcp.pop %v2402
    %v2405 = vmul.f32 1.0, %v2404
    %v2406 = vrcp.pop %v2403
    %v2407 = vmul.f32 1.0, %v2406
    %v2410 = vrot.slane %v2394, 6
    %v2411 = vrot.slane %v2395, 6
    %v2414 = vtanh.pop %v2410
    %v2415 = vtanh.pop %v2411
    %v2418 = vrot.slane %v2405, 2
    %v2419 = vrot.slane %v2407, 2
    %v2422 = vmul.f32 %v2418, %v2094
    %v2423 = vmul.f32 %v2419, %v2095
    %v2424 = vmul.f32 %v2405, %v2414
    %v2425 = vmul.f32 %v2407, %v2415
    %v2426 = vadd.f32 %v2422, %v2424
    %v2427 = vadd.f32 %v2423, %v2425
    %v2428 = vtanh.pop %v2426
    %v2429 = vtanh.pop %v2427
    %v2430 = vrot.slane %v2405, 4
    %v2431 = vrot.slane %v2407, 4
    %v2434 = vmul.f32 %v2430, %v2428
    %v2435 = vmul.f32 %v2431, %v2429
    %s2436 = scalar_lea.vmem %s0, 5
    %v2437 = vld [vmem:[%s2436] ss:$8 sm:$0xf]
    %v2438 = vld [vmem:[%s2436] ss:$8 sm:$0xf0]
    %v2439 = vor.u32 %v2437, %v2438
    %s2440 = scalar_lea.vmem %s0, 69
    %v2441 = vld [vmem:[%s2440] ss:$8 sm:$0xf]
    %v2442 = vld [vmem:[%s2440] ss:$8 sm:$0xf0]
    %v2443 = vor.u32 %v2441, %v2442
    %v2446 = vlaneseq
    %v2447 = vshrl.u32 %v2446, 7
    %v2448 = vsub.s32 0, %v2447
    %v2449 = vrot.slane %v2434, %v2448
    %v2450 = vlaneseq
    %v2451 = vshrl.u32 %v2450, 7
    %v2452 = vsub.s32 1, %v2451
    %v2453 = vrot.slane %v2434, %v2452
    %v2454 = vlaneseq
    %v2455 = vshrl.u32 %v2454, 7
    %v2456 = vsub.s32 0, %v2455
    %v2457 = vrot.slane %v2435, %v2456
    %v2458 = vlaneseq
    %v2459 = vshrl.u32 %v2458, 7
    %v2460 = vsub.s32 1, %v2459
    %v2461 = vrot.slane %v2435, %v2460
    %v2466 = vpack.c.bf16 %v2449, %v2449
    %v2467 = vpack.c.bf16 %v2453, %v2453
    %v2468 = vpack.c.bf16 %v2457, %v2457
    %v2469 = vpack.c.bf16 %v2461, %v2461
    %v2474 = vunpack.c.l.b16 %v2466
    %v2475 = vunpack.c.l.b16 %v2467
    %v2476 = vunpack.c.l.b16 %v2468
    %v2477 = vunpack.c.l.b16 %v2469
    %v2478 = vrot.slane %v2476, 7
    %v2479 = vsel %vm1150, %v2478, %v2474
    %v2480 = vrot.slane %v2477, 7
    %v2481 = vsel %vm1150, %v2480, %v2475
    %v2482 = vpack.c.b16 %v2479, %v2479
    %v2483 = vpack.c.b16 %v2481, %v2481
    %2486 = vmatprep.subr.bf16.mxu0 %v559
    %2487 = vmatpush1.bf16.msra.mxu0 %v558
    %2488 = vmatprep.subr.bf16.mxu0 %v567
    %2489 = vmatpush1.bf16.msra.mxu0 %v566
    %2490 = vmatprep.subr.bf16.mxu0 %v575
    %2491 = vmatpush1.bf16.msra.mxu0 %v574
    %2492 = vmatprep.subr.bf16.mxu0 %v583
    %2493 = vmatpush1.bf16.msra.mxu0 %v582
    %2494 = vmatprep.subr.bf16.mxu0 %v591
    %2495 = vmatpush1.bf16.msra.mxu0 %v590
    %2496 = vmatprep.subr.bf16.mxu0 %v599
    %2497 = vmatpush1.bf16.msra.mxu0 %v598
    %2498 = vmatprep.subr.bf16.mxu0 %v607
    %2499 = vmatpush1.bf16.msra.mxu0 %v606
    %2500 = vmatprep.subr.bf16.mxu0 %v615
    %2501 = vmatpush1.bf16.msra.mxu0 %v614
    %2502 = vmatprep.subr.bf16.mxu0 %v623
    %2503 = vmatpush1.bf16.msra.mxu0 %v622
    %2504 = vmatprep.subr.bf16.mxu0 %v631
    %2505 = vmatpush1.bf16.msra.mxu0 %v630
    %2506 = vmatprep.subr.bf16.mxu0 %v639
    %2507 = vmatpush1.bf16.msra.mxu0 %v638
    %2508 = vmatprep.subr.bf16.mxu0 %v647
    %2509 = vmatpush1.bf16.msra.mxu0 %v646
    %2510 = vmatprep.subr.bf16.mxu0 %v655
    %2511 = vmatpush1.bf16.msra.mxu0 %v654
    %2512 = vmatprep.subr.bf16.mxu0 %v663
    %2513 = vmatpush1.bf16.msra.mxu0 %v662
    %2514 = vmatprep.subr.bf16.mxu0 %v671
    %2515 = vmatpush1.bf16.msra.mxu0 %v670
    %2516 = vmatprep.subr.bf16.mxu0 %v679
    %2517 = vmatpush1.bf16.msra.mxu0 %v678
    %2518 = vmatprep.mubr.bf16.mxu0 %v2483
    %2519 = vmatmul.mubr.bf16.gmra.mrb[0].mxu0 %v2482
    %v2520 = vpop.f32.mrb[0].mxu0
    %v2521 = vadd.f32 0.0, %v2520
    %v2522 = vpop.f32.mrb[0].mxu0
    %v2523 = vadd.f32 0.0, %v2522
    %v2524 = vpop.f32.mrb[0].mxu0
    %v2525 = vpop.f32.mrb[0].mxu0
    %2526 = vdwg.mxu0
    %2527 = vmatprep.subr.bf16.mxu0 %v561
    %2528 = vmatpush1.bf16.msra.mxu0 %v560
    %2529 = vmatprep.subr.bf16.mxu0 %v569
    %2530 = vmatpush1.bf16.msra.mxu0 %v568
    %2531 = vmatprep.subr.bf16.mxu0 %v577
    %2532 = vmatpush1.bf16.msra.mxu0 %v576
    %2533 = vmatprep.subr.bf16.mxu0 %v585
    %2534 = vmatpush1.bf16.msra.mxu0 %v584
    %2535 = vmatprep.subr.bf16.mxu0 %v593
    %2536 = vmatpush1.bf16.msra.mxu0 %v592
    %2537 = vmatprep.subr.bf16.mxu0 %v601
    %2538 = vmatpush1.bf16.msra.mxu0 %v600
    %2539 = vmatprep.subr.bf16.mxu0 %v609
    %2540 = vmatpush1.bf16.msra.mxu0 %v608
    %2541 = vmatprep.subr.bf16.mxu0 %v617
    %2542 = vmatpush1.bf16.msra.mxu0 %v616
    %2543 = vmatprep.subr.bf16.mxu0 %v625
    %2544 = vmatpush1.bf16.msra.mxu0 %v624
    %2545 = vmatprep.subr.bf16.mxu0 %v633
    %2546 = vmatpush1.bf16.msra.mxu0 %v632
    %2547 = vmatprep.subr.bf16.mxu0 %v641
    %2548 = vmatpush1.bf16.msra.mxu0 %v640
    %2549 = vmatprep.subr.bf16.mxu0 %v649
    %2550 = vmatpush1.bf16.msra.mxu0 %v648
    %2551 = vmatprep.subr.bf16.mxu0 %v657
    %2552 = vmatpush1.bf16.msra.mxu0 %v656
    %2553 = vmatprep.subr.bf16.mxu0 %v665
    %2554 = vmatpush1.bf16.msra.mxu0 %v664
    %2555 = vmatprep.subr.bf16.mxu0 %v673
    %2556 = vmatpush1.bf16.msra.mxu0 %v672
    %2557 = vmatprep.subr.bf16.mxu0 %v681
    %2558 = vmatpush1.bf16.msra.mxu0 %v680
    %2559 = vmatprep.mubr.bf16.mxu0 %v2483
    %2560 = vmatmul.mubr.bf16.gmra.mrb[0].mxu0 %v2482
    %v2561 = vpop.f32.mrb[0].mxu0
    %v2562 = vadd.f32 0.0, %v2561
    %v2563 = vpop.f32.mrb[0].mxu0
    %v2564 = vadd.f32 0.0, %v2563
    %v2565 = vpop.f32.mrb[0].mxu0
    %v2566 = vpop.f32.mrb[0].mxu0
    %2567 = vdwg.mxu0
    %2568 = vmatprep.subr.bf16.mxu0 %v563
    %2569 = vmatpush1.bf16.msra.mxu0 %v562
    %2570 = vmatprep.subr.bf16.mxu0 %v571
    %2571 = vmatpush1.bf16.msra.mxu0 %v570
    %2572 = vmatprep.subr.bf16.mxu0 %v579
    %2573 = vmatpush1.bf16.msra.mxu0 %v578
    %2574 = vmatprep.subr.bf16.mxu0 %v587
    %2575 = vmatpush1.bf16.msra.mxu0 %v586
    %2576 = vmatprep.subr.bf16.mxu0 %v595
    %2577 = vmatpush1.bf16.msra.mxu0 %v594
    %2578 = vmatprep.subr.bf16.mxu0 %v603
    %2579 = vmatpush1.bf16.msra.mxu0 %v602
    %2580 = vmatprep.subr.bf16.mxu0 %v611
    %2581 = vmatpush1.bf16.msra.mxu0 %v610
    %2582 = vmatprep.subr.bf16.mxu0 %v619
    %2583 = vmatpush1.bf16.msra.mxu0 %v618
    %2584 = vmatprep.subr.bf16.mxu0 %v627
    %2585 = vmatpush1.bf16.msra.mxu0 %v626
    %2586 = vmatprep.subr.bf16.mxu0 %v635
    %2587 = vmatpush1.bf16.msra.mxu0 %v634
    %2588 = vmatprep.subr.bf16.mxu0 %v643
    %2589 = vmatpush1.bf16.msra.mxu0 %v642
    %2590 = vmatprep.subr.bf16.mxu0 %v651
    %2591 = vmatpush1.bf16.msra.mxu0 %v650
    %2592 = vmatprep.subr.bf16.mxu0 %v659
    %2593 = vmatpush1.bf16.msra.mxu0 %v658
    %2594 = vmatprep.subr.bf16.mxu0 %v667
    %2595 = vmatpush1.bf16.msra.mxu0 %v666
    %2596 = vmatprep.subr.bf16.mxu0 %v675
    %2597 = vmatpush1.bf16.msra.mxu0 %v674
    %2598 = vmatprep.subr.bf16.mxu0 %v683
    %2599 = vmatpush1.bf16.msra.mxu0 %v682
    %2600 = vmatprep.mubr.bf16.mxu0 %v2483
    %2601 = vmatmul.mubr.bf16.gmra.mrb[0].mxu0 %v2482
    %v2602 = vpop.f32.mrb[0].mxu0
    %v2603 = vadd.f32 0.0, %v2602
    %v2604 = vpop.f32.mrb[0].mxu0
    %v2605 = vadd.f32 0.0, %v2604
    %v2606 = vpop.f32.mrb[0].mxu0
    %v2607 = vpop.f32.mrb[0].mxu0
    %2608 = vdwg.mxu0
    %2609 = vmatprep.subr.bf16.mxu0 %v565
    %2610 = vmatpush1.bf16.msra.mxu0 %v564
    %2611 = vmatprep.subr.bf16.mxu0 %v573
    %2612 = vmatpush1.bf16.msra.mxu0 %v572
    %2613 = vmatprep.subr.bf16.mxu0 %v581
    %2614 = vmatpush1.bf16.msra.mxu0 %v580
    %2615 = vmatprep.subr.bf16.mxu0 %v589
    %2616 = vmatpush1.bf16.msra.mxu0 %v588
    %2617 = vmatprep.subr.bf16.mxu0 %v597
    %2618 = vmatpush1.bf16.msra.mxu0 %v596
    %2619 = vmatprep.subr.bf16.mxu0 %v605
    %2620 = vmatpush1.bf16.msra.mxu0 %v604
    %2621 = vmatprep.subr.bf16.mxu0 %v613
    %2622 = vmatpush1.bf16.msra.mxu0 %v612
    %2623 = vmatprep.subr.bf16.mxu0 %v621
    %2624 = vmatpush1.bf16.msra.mxu0 %v620
    %2625 = vmatprep.subr.bf16.mxu0 %v629
    %2626 = vmatpush1.bf16.msra.mxu0 %v628
    %2627 = vmatprep.subr.bf16.mxu0 %v637
    %2628 = vmatpush1.bf16.msra.mxu0 %v636
    %2629 = vmatprep.subr.bf16.mxu0 %v645
    %2630 = vmatpush1.bf16.msra.mxu0 %v644
    %2631 = vmatprep.subr.bf16.mxu0 %v653
    %2632 = vmatpush1.bf16.msra.mxu0 %v652
    %2633 = vmatprep.subr.bf16.mxu0 %v661
    %2634 = vmatpush1.bf16.msra.mxu0 %v660
    %2635 = vmatprep.subr.bf16.mxu0 %v669
    %2636 = vmatpush1.bf16.msra.mxu0 %v668
    %2637 = vmatprep.subr.bf16.mxu0 %v677
    %2638 = vmatpush1.bf16.msra.mxu0 %v676
    %2639 = vmatprep.subr.bf16.mxu0 %v685
    %2640 = vmatpush1.bf16.msra.mxu0 %v684
    %2641 = vmatprep.mubr.bf16.mxu0 %v2483
    %2642 = vmatmul.mubr.bf16.gmra.mrb[0].mxu0 %v2482
    %v2643 = vpop.f32.mrb[0].mxu0
    %v2644 = vadd.f32 0.0, %v2643
    %v2645 = vpop.f32.mrb[0].mxu0
    %v2646 = vadd.f32 0.0, %v2645
    %v2647 = vpop.f32.mrb[0].mxu0
    %v2648 = vpop.f32.mrb[0].mxu0
    %2649 = vdwg.mxu0
    %v2658 = vcombine.low %v2521, %v2523
    %v2659 = vcombine.low %v2562, %v2564
    %v2660 = vcombine.low %v2603, %v2605
    %v2661 = vcombine.low %v2644, %v2646
    %v2663 = vunpack.c.l.s4 1966171168
    %v2664 = vunpack.c.0.s8 %v2663
    %v2665 = vlaneseq
    %v2666 = vshrl.u32 %v2665, 7
    %v2667 = vsub.s32 %v2664, %v2666
    %v2668 = vrot.slane %v2658, %v2667
    %v2670 = vunpack.c.l.s4 1966171168
    %v2671 = vunpack.c.0.s8 %v2670
    %v2672 = vlaneseq
    %v2673 = vshrl.u32 %v2672, 7
    %v2674 = vsub.s32 %v2671, %v2673
    %v2675 = vrot.slane %v2659, %v2674
    %v2677 = vunpack.c.l.s4 1966171168
    %v2678 = vunpack.c.0.s8 %v2677
    %v2679 = vlaneseq
    %v2680 = vshrl.u32 %v2679, 7
    %v2681 = vsub.s32 %v2678, %v2680
    %v2682 = vrot.slane %v2660, %v2681
    %v2684 = vunpack.c.l.s4 1966171168
    %v2685 = vunpack.c.0.s8 %v2684
    %v2686 = vlaneseq
    %v2687 = vshrl.u32 %v2686, 7
    %v2688 = vsub.s32 %v2685, %v2687
    %v2689 = vrot.slane %v2661, %v2688
    %v2690 = vcombine.low %v2668, %v2675
    %v2691 = vcombine.high %v2668, %v2675
    %v2692 = vcombine.low %v2682, %v2689
    %v2693 = vcombine.high %v2682, %v2689
    %v2695 = vunpack.c.l.s4 1966171168
    %v2696 = vunpack.c.0.s8 %v2695
    %v2697 = vlaneseq
    %v2698 = vshrl.u32 %v2697, 7
    %v2699 = vsub.s32 %v2696, %v2698
    %v2700 = vrot.slane %v2690, %v2699
    %v2702 = vunpack.c.l.s4 1966171168
    %v2703 = vunpack.c.0.s8 %v2702
    %v2704 = vlaneseq
    %v2705 = vshrl.u32 %v2704, 7
    %v2706 = vsub.s32 %v2703, %v2705
    %v2707 = vrot.slane %v2691, %v2706
    %v2709 = vunpack.c.l.s4 1966171168
    %v2710 = vunpack.c.0.s8 %v2709
    %v2711 = vlaneseq
    %v2712 = vshrl.u32 %v2711, 7
    %v2713 = vsub.s32 %v2710, %v2712
    %v2714 = vrot.slane %v2692, %v2713
    %v2716 = vunpack.c.l.s4 1966171168
    %v2717 = vunpack.c.0.s8 %v2716
    %v2718 = vlaneseq
    %v2719 = vshrl.u32 %v2718, 7
    %v2720 = vsub.s32 %v2717, %v2719
    %v2721 = vrot.slane %v2693, %v2720
    %v2722 = vcombine.low %v2700, %v2714
    %v2723 = vcombine.low %v2707, %v2721
    %v2726 = vadd.f32 %v2439, %v2722
    %v2727 = vadd.f32 %v2443, %v2723
    %v2728 = vxor.u32 %v2726, 2147483648
    %v2729 = vxor.u32 %v2727, 2147483648
    %v2730 = vmul.f32 %v2728, 1.442695
    %v2731 = vpow.pop %v2730
    %v2732 = vmul.f32 %v2729, 1.442695
    %v2733 = vpow.pop %v2732
    %v2734 = vadd.f32 %v2731, 1.0
    %v2735 = vadd.f32 %v2733, 1.0
    %v2736 = vrcp.pop %v2734
    %v2737 = vmul.f32 1.0, %v2736
    %v2738 = vrcp.pop %v2735
    %v2739 = vmul.f32 1.0, %v2738
    %v2742 = vrot.slane %v2726, 6
    %v2743 = vrot.slane %v2727, 6
    %v2746 = vtanh.pop %v2742
    %v2747 = vtanh.pop %v2743
    %v2750 = vrot.slane %v2737, 2
    %v2751 = vrot.slane %v2739, 2
    %v2754 = vmul.f32 %v2750, %v2426
    %v2755 = vmul.f32 %v2751, %v2427
    %v2756 = vmul.f32 %v2737, %v2746
    %v2757 = vmul.f32 %v2739, %v2747
    %v2758 = vadd.f32 %v2754, %v2756
    %v2759 = vadd.f32 %v2755, %v2757
    %v2760 = vtanh.pop %v2758
    %v2761 = vtanh.pop %v2759
    %v2762 = vrot.slane %v2737, 4
    %v2763 = vrot.slane %v2739, 4
    %v2766 = vmul.f32 %v2762, %v2760
    %v2767 = vmul.f32 %v2763, %v2761
    %s2768 = scalar_lea.vmem %s0, 6
    %v2769 = vld [vmem:[%s2768] ss:$8 sm:$0xf]
    %v2770 = vld [vmem:[%s2768] ss:$8 sm:$0xf0]
    %v2771 = vor.u32 %v2769, %v2770
    %s2772 = scalar_lea.vmem %s0, 70
    %v2773 = vld [vmem:[%s2772] ss:$8 sm:$0xf]
    %v2774 = vld [vmem:[%s2772] ss:$8 sm:$0xf0]
    %v2775 = vor.u32 %v2773, %v2774
    %v2778 = vlaneseq
    %v2779 = vshrl.u32 %v2778, 7
    %v2780 = vsub.s32 0, %v2779
    %v2781 = vrot.slane %v2766, %v2780
    %v2782 = vlaneseq
    %v2783 = vshrl.u32 %v2782, 7
    %v2784 = vsub.s32 1, %v2783
    %v2785 = vrot.slane %v2766, %v2784
    %v2786 = vlaneseq
    %v2787 = vshrl.u32 %v2786, 7
    %v2788 = vsub.s32 0, %v2787
    %v2789 = vrot.slane %v2767, %v2788
    %v2790 = vlaneseq
    %v2791 = vshrl.u32 %v2790, 7
    %v2792 = vsub.s32 1, %v2791
    %v2793 = vrot.slane %v2767, %v2792
    %v2798 = vpack.c.bf16 %v2781, %v2781
    %v2799 = vpack.c.bf16 %v2785, %v2785
    %v2800 = vpack.c.bf16 %v2789, %v2789
    %v2801 = vpack.c.bf16 %v2793, %v2793
    %v2806 = vunpack.c.l.b16 %v2798
    %v2807 = vunpack.c.l.b16 %v2799
    %v2808 = vunpack.c.l.b16 %v2800
    %v2809 = vunpack.c.l.b16 %v2801
    %v2810 = vrot.slane %v2808, 7
    %v2811 = vsel %vm1150, %v2810, %v2806
    %v2812 = vrot.slane %v2809, 7
    %v2813 = vsel %vm1150, %v2812, %v2807
    %v2814 = vpack.c.b16 %v2811, %v2811
    %v2815 = vpack.c.b16 %v2813, %v2813
    %2818 = vmatprep.subr.bf16.mxu0 %v559
    %2819 = vmatpush1.bf16.msra.mxu0 %v558
    %2820 = vmatprep.subr.bf16.mxu0 %v567
    %2821 = vmatpush1.bf16.msra.mxu0 %v566
    %2822 = vmatprep.subr.bf16.mxu0 %v575
    %2823 = vmatpush1.bf16.msra.mxu0 %v574
    %2824 = vmatprep.subr.bf16.mxu0 %v583
    %2825 = vmatpush1.bf16.msra.mxu0 %v582
    %2826 = vmatprep.subr.bf16.mxu0 %v591
    %2827 = vmatpush1.bf16.msra.mxu0 %v590
    %2828 = vmatprep.subr.bf16.mxu0 %v599
    %2829 = vmatpush1.bf16.msra.mxu0 %v598
    %2830 = vmatprep.subr.bf16.mxu0 %v607
    %2831 = vmatpush1.bf16.msra.mxu0 %v606
    %2832 = vmatprep.subr.bf16.mxu0 %v615
    %2833 = vmatpush1.bf16.msra.mxu0 %v614
    %2834 = vmatprep.subr.bf16.mxu0 %v623
    %2835 = vmatpush1.bf16.msra.mxu0 %v622
    %2836 = vmatprep.subr.bf16.mxu0 %v631
    %2837 = vmatpush1.bf16.msra.mxu0 %v630
    %2838 = vmatprep.subr.bf16.mxu0 %v639
    %2839 = vmatpush1.bf16.msra.mxu0 %v638
    %2840 = vmatprep.subr.bf16.mxu0 %v647
    %2841 = vmatpush1.bf16.msra.mxu0 %v646
    %2842 = vmatprep.subr.bf16.mxu0 %v655
    %2843 = vmatpush1.bf16.msra.mxu0 %v654
    %2844 = vmatprep.subr.bf16.mxu0 %v663
    %2845 = vmatpush1.bf16.msra.mxu0 %v662
    %2846 = vmatprep.subr.bf16.mxu0 %v671
    %2847 = vmatpush1.bf16.msra.mxu0 %v670
    %2848 = vmatprep.subr.bf16.mxu0 %v679
    %2849 = vmatpush1.bf16.msra.mxu0 %v678
    %2850 = vmatprep.mubr.bf16.mxu0 %v2815
    %2851 = vmatmul.mubr.bf16.gmra.mrb[0].mxu0 %v2814
    %v2852 = vpop.f32.mrb[0].mxu0
    %v2853 = vadd.f32 0.0, %v2852
    %v2854 = vpop.f32.mrb[0].mxu0
    %v2855 = vadd.f32 0.0, %v2854
    %v2856 = vpop.f32.mrb[0].mxu0
    %v2857 = vpop.f32.mrb[0].mxu0
    %2858 = vdwg.mxu0
    %2859 = vmatprep.subr.bf16.mxu0 %v561
    %2860 = vmatpush1.bf16.msra.mxu0 %v560
    %2861 = vmatprep.subr.bf16.mxu0 %v569
    %2862 = vmatpush1.bf16.msra.mxu0 %v568
    %2863 = vmatprep.subr.bf16.mxu0 %v577
    %2864 = vmatpush1.bf16.msra.mxu0 %v576
    %2865 = vmatprep.subr.bf16.mxu0 %v585
    %2866 = vmatpush1.bf16.msra.mxu0 %v584
    %2867 = vmatprep.subr.bf16.mxu0 %v593
    %2868 = vmatpush1.bf16.msra.mxu0 %v592
    %2869 = vmatprep.subr.bf16.mxu0 %v601
    %2870 = vmatpush1.bf16.msra.mxu0 %v600
    %2871 = vmatprep.subr.bf16.mxu0 %v609
    %2872 = vmatpush1.bf16.msra.mxu0 %v608
    %2873 = vmatprep.subr.bf16.mxu0 %v617
    %2874 = vmatpush1.bf16.msra.mxu0 %v616
    %2875 = vmatprep.subr.bf16.mxu0 %v625
    %2876 = vmatpush1.bf16.msra.mxu0 %v624
    %2877 = vmatprep.subr.bf16.mxu0 %v633
    %2878 = vmatpush1.bf16.msra.mxu0 %v632
    %2879 = vmatprep.subr.bf16.mxu0 %v641
    %2880 = vmatpush1.bf16.msra.mxu0 %v640
    %2881 = vmatprep.subr.bf16.mxu0 %v649
    %2882 = vmatpush1.bf16.msra.mxu0 %v648
    %2883 = vmatprep.subr.bf16.mxu0 %v657
    %2884 = vmatpush1.bf16.msra.mxu0 %v656
    %2885 = vmatprep.subr.bf16.mxu0 %v665
    %2886 = vmatpush1.bf16.msra.mxu0 %v664
    %2887 = vmatprep.subr.bf16.mxu0 %v673
    %2888 = vmatpush1.bf16.msra.mxu0 %v672
    %2889 = vmatprep.subr.bf16.mxu0 %v681
    %2890 = vmatpush1.bf16.msra.mxu0 %v680
    %2891 = vmatprep.mubr.bf16.mxu0 %v2815
    %2892 = vmatmul.mubr.bf16.gmra.mrb[0].mxu0 %v2814
    %v2893 = vpop.f32.mrb[0].mxu0
    %v2894 = vadd.f32 0.0, %v2893
    %v2895 = vpop.f32.mrb[0].mxu0
    %v2896 = vadd.f32 0.0, %v2895
    %v2897 = vpop.f32.mrb[0].mxu0
    %v2898 = vpop.f32.mrb[0].mxu0
    %2899 = vdwg.mxu0
    %2900 = vmatprep.subr.bf16.mxu0 %v563
    %2901 = vmatpush1.bf16.msra.mxu0 %v562
    %2902 = vmatprep.subr.bf16.mxu0 %v571
    %2903 = vmatpush1.bf16.msra.mxu0 %v570
    %2904 = vmatprep.subr.bf16.mxu0 %v579
    %2905 = vmatpush1.bf16.msra.mxu0 %v578
    %2906 = vmatprep.subr.bf16.mxu0 %v587
    %2907 = vmatpush1.bf16.msra.mxu0 %v586
    %2908 = vmatprep.subr.bf16.mxu0 %v595
    %2909 = vmatpush1.bf16.msra.mxu0 %v594
    %2910 = vmatprep.subr.bf16.mxu0 %v603
    %2911 = vmatpush1.bf16.msra.mxu0 %v602
    %2912 = vmatprep.subr.bf16.mxu0 %v611
    %2913 = vmatpush1.bf16.msra.mxu0 %v610
    %2914 = vmatprep.subr.bf16.mxu0 %v619
    %2915 = vmatpush1.bf16.msra.mxu0 %v618
    %2916 = vmatprep.subr.bf16.mxu0 %v627
    %2917 = vmatpush1.bf16.msra.mxu0 %v626
    %2918 = vmatprep.subr.bf16.mxu0 %v635
    %2919 = vmatpush1.bf16.msra.mxu0 %v634
    %2920 = vmatprep.subr.bf16.mxu0 %v643
    %2921 = vmatpush1.bf16.msra.mxu0 %v642
    %2922 = vmatprep.subr.bf16.mxu0 %v651
    %2923 = vmatpush1.bf16.msra.mxu0 %v650
    %2924 = vmatprep.subr.bf16.mxu0 %v659
    %2925 = vmatpush1.bf16.msra.mxu0 %v658
    %2926 = vmatprep.subr.bf16.mxu0 %v667
    %2927 = vmatpush1.bf16.msra.mxu0 %v666
    %2928 = vmatprep.subr.bf16.mxu0 %v675
    %2929 = vmatpush1.bf16.msra.mxu0 %v674
    %2930 = vmatprep.subr.bf16.mxu0 %v683
    %2931 = vmatpush1.bf16.msra.mxu0 %v682
    %2932 = vmatprep.mubr.bf16.mxu0 %v2815
    %2933 = vmatmul.mubr.bf16.gmra.mrb[0].mxu0 %v2814
    %v2934 = vpop.f32.mrb[0].mxu0
    %v2935 = vadd.f32 0.0, %v2934
    %v2936 = vpop.f32.mrb[0].mxu0
    %v2937 = vadd.f32 0.0, %v2936
    %v2938 = vpop.f32.mrb[0].mxu0
    %v2939 = vpop.f32.mrb[0].mxu0
    %2940 = vdwg.mxu0
    %2941 = vmatprep.subr.bf16.mxu0 %v565
    %2942 = vmatpush1.bf16.msra.mxu0 %v564
    %2943 = vmatprep.subr.bf16.mxu0 %v573
    %2944 = vmatpush1.bf16.msra.mxu0 %v572
    %2945 = vmatprep.subr.bf16.mxu0 %v581
    %2946 = vmatpush1.bf16.msra.mxu0 %v580
    %2947 = vmatprep.subr.bf16.mxu0 %v589
    %2948 = vmatpush1.bf16.msra.mxu0 %v588
    %2949 = vmatprep.subr.bf16.mxu0 %v597
    %2950 = vmatpush1.bf16.msra.mxu0 %v596
    %2951 = vmatprep.subr.bf16.mxu0 %v605
    %2952 = vmatpush1.bf16.msra.mxu0 %v604
    %2953 = vmatprep.subr.bf16.mxu0 %v613
    %2954 = vmatpush1.bf16.msra.mxu0 %v612
    %2955 = vmatprep.subr.bf16.mxu0 %v621
    %2956 = vmatpush1.bf16.msra.mxu0 %v620
    %2957 = vmatprep.subr.bf16.mxu0 %v629
    %2958 = vmatpush1.bf16.msra.mxu0 %v628
    %2959 = vmatprep.subr.bf16.mxu0 %v637
    %2960 = vmatpush1.bf16.msra.mxu0 %v636
    %2961 = vmatprep.subr.bf16.mxu0 %v645
    %2962 = vmatpush1.bf16.msra.mxu0 %v644
    %2963 = vmatprep.subr.bf16.mxu0 %v653
    %2964 = vmatpush1.bf16.msra.mxu0 %v652
    %2965 = vmatprep.subr.bf16.mxu0 %v661
    %2966 = vmatpush1.bf16.msra.mxu0 %v660
    %2967 = vmatprep.subr.bf16.mxu0 %v669
    %2968 = vmatpush1.bf16.msra.mxu0 %v668
    %2969 = vmatprep.subr.bf16.mxu0 %v677
    %2970 = vmatpush1.bf16.msra.mxu0 %v676
    %2971 = vmatprep.subr.bf16.mxu0 %v685
    %2972 = vmatpush1.bf16.msra.mxu0 %v684
    %2973 = vmatprep.mubr.bf16.mxu0 %v2815
    %2974 = vmatmul.mubr.bf16.gmra.mrb[0].mxu0 %v2814
    %v2975 = vpop.f32.mrb[0].mxu0
    %v2976 = vadd.f32 0.0, %v2975
    %v2977 = vpop.f32.mrb[0].mxu0
    %v2978 = vadd.f32 0.0, %v2977
    %v2979 = vpop.f32.mrb[0].mxu0
    %v2980 = vpop.f32.mrb[0].mxu0
    %2981 = vdwg.mxu0
    %v2990 = vcombine.low %v2853, %v2855
    %v2991 = vcombine.low %v2894, %v2896
    %v2992 = vcombine.low %v2935, %v2937
    %v2993 = vcombine.low %v2976, %v2978
    %v2995 = vunpack.c.l.s4 1966171168
    %v2996 = vunpack.c.0.s8 %v2995
    %v2997 = vlaneseq
    %v2998 = vshrl.u32 %v2997, 7
    %v2999 = vsub.s32 %v2996, %v2998
    %v3000 = vrot.slane %v2990, %v2999
    %v3002 = vunpack.c.l.s4 1966171168
    %v3003 = vunpack.c.0.s8 %v3002
    %v3004 = vlaneseq
    %v3005 = vshrl.u32 %v3004, 7
    %v3006 = vsub.s32 %v3003, %v3005
    %v3007 = vrot.slane %v2991, %v3006
    %v3009 = vunpack.c.l.s4 1966171168
    %v3010 = vunpack.c.0.s8 %v3009
    %v3011 = vlaneseq
    %v3012 = vshrl.u32 %v3011, 7
    %v3013 = vsub.s32 %v3010, %v3012
    %v3014 = vrot.slane %v2992, %v3013
    %v3016 = vunpack.c.l.s4 1966171168
    %v3017 = vunpack.c.0.s8 %v3016
    %v3018 = vlaneseq
    %v3019 = vshrl.u32 %v3018, 7
    %v3020 = vsub.s32 %v3017, %v3019
    %v3021 = vrot.slane %v2993, %v3020
    %v3022 = vcombine.low %v3000, %v3007
    %v3023 = vcombine.high %v3000, %v3007
    %v3024 = vcombine.low %v3014, %v3021
    %v3025 = vcombine.high %v3014, %v3021
    %v3027 = vunpack.c.l.s4 1966171168
    %v3028 = vunpack.c.0.s8 %v3027
    %v3029 = vlaneseq
    %v3030 = vshrl.u32 %v3029, 7
    %v3031 = vsub.s32 %v3028, %v3030
    %v3032 = vrot.slane %v3022, %v3031
    %v3034 = vunpack.c.l.s4 1966171168
    %v3035 = vunpack.c.0.s8 %v3034
    %v3036 = vlaneseq
    %v3037 = vshrl.u32 %v3036, 7
    %v3038 = vsub.s32 %v3035, %v3037
    %v3039 = vrot.slane %v3023, %v3038
    %v3041 = vunpack.c.l.s4 1966171168
    %v3042 = vunpack.c.0.s8 %v3041
    %v3043 = vlaneseq
    %v3044 = vshrl.u32 %v3043, 7
    %v3045 = vsub.s32 %v3042, %v3044
    %v3046 = vrot.slane %v3024, %v3045
    %v3048 = vunpack.c.l.s4 1966171168
    %v3049 = vunpack.c.0.s8 %v3048
    %v3050 = vlaneseq
    %v3051 = vshrl.u32 %v3050, 7
    %v3052 = vsub.s32 %v3049, %v3051
    %v3053 = vrot.slane %v3025, %v3052
    %v3054 = vcombine.low %v3032, %v3046
    %v3055 = vcombine.low %v3039, %v3053
    %v3058 = vadd.f32 %v2771, %v3054
    %v3059 = vadd.f32 %v2775, %v3055
    %v3060 = vxor.u32 %v3058, 2147483648
    %v3061 = vxor.u32 %v3059, 2147483648
    %v3062 = vmul.f32 %v3060, 1.442695
    %v3063 = vpow.pop %v3062
    %v3064 = vmul.f32 %v3061, 1.442695
    %v3065 = vpow.pop %v3064
    %v3066 = vadd.f32 %v3063, 1.0
    %v3067 = vadd.f32 %v3065, 1.0
    %v3068 = vrcp.pop %v3066
    %v3069 = vmul.f32 1.0, %v3068
    %v3070 = vrcp.pop %v3067
    %v3071 = vmul.f32 1.0, %v3070
    %v3074 = vrot.slane %v3058, 6
    %v3075 = vrot.slane %v3059, 6
    %v3078 = vtanh.pop %v3074
    %v3079 = vtanh.pop %v3075
    %v3082 = vrot.slane %v3069, 2
    %v3083 = vrot.slane %v3071, 2
    %v3086 = vmul.f32 %v3082, %v2758
    %v3087 = vmul.f32 %v3083, %v2759
    %v3088 = vmul.f32 %v3069, %v3078
    %v3089 = vmul.f32 %v3071, %v3079
    %v3090 = vadd.f32 %v3086, %v3088
    %v3091 = vadd.f32 %v3087, %v3089
    %v3092 = vtanh.pop %v3090
    %v3093 = vtanh.pop %v3091
    %v3094 = vrot.slane %v3069, 4
    %v3095 = vrot.slane %v3071, 4
    %v3098 = vmul.f32 %v3094, %v3092
    %v3099 = vmul.f32 %v3095, %v3093
    %s3100 = scalar_lea.vmem %s0, 7
    %v3101 = vld [vmem:[%s3100] ss:$8 sm:$0xf]
    %v3102 = vld [vmem:[%s3100] ss:$8 sm:$0xf0]
    %v3103 = vor.u32 %v3101, %v3102
    %s3104 = scalar_lea.vmem %s0, 71
    %v3105 = vld [vmem:[%s3104] ss:$8 sm:$0xf]
    %v3106 = vld [vmem:[%s3104] ss:$8 sm:$0xf0]
    %v3107 = vor.u32 %v3105, %v3106
    %v3110 = vlaneseq
    %v3111 = vshrl.u32 %v3110, 7
    %v3112 = vsub.s32 0, %v3111
    %v3113 = vrot.slane %v3098, %v3112
    %v3114 = vlaneseq
    %v3115 = vshrl.u32 %v3114, 7
    %v3116 = vsub.s32 1, %v3115
    %v3117 = vrot.slane %v3098, %v3116
    %v3118 = vlaneseq
    %v3119 = vshrl.u32 %v3118, 7
    %v3120 = vsub.s32 0, %v3119
    %v3121 = vrot.slane %v3099, %v3120
    %v3122 = vlaneseq
    %v3123 = vshrl.u32 %v3122, 7
    %v3124 = vsub.s32 1, %v3123
    %v3125 = vrot.slane %v3099, %v3124
    %v3130 = vpack.c.bf16 %v3113, %v3113
    %v3131 = vpack.c.bf16 %v3117, %v3117
    %v3132 = vpack.c.bf16 %v3121, %v3121
    %v3133 = vpack.c.bf16 %v3125, %v3125
    %v3138 = vunpack.c.l.b16 %v3130
    %v3139 = vunpack.c.l.b16 %v3131
    %v3140 = vunpack.c.l.b16 %v3132
    %v3141 = vunpack.c.l.b16 %v3133
    %v3142 = vrot.slane %v3140, 7
    %v3143 = vsel %vm1150, %v3142, %v3138
    %v3144 = vrot.slane %v3141, 7
    %v3145 = vsel %vm1150, %v3144, %v3139
    %v3146 = vpack.c.b16 %v3143, %v3143
    %v3147 = vpack.c.b16 %v3145, %v3145
    %3150 = vmatprep.subr.bf16.mxu0 %v559
    %3151 = vmatpush1.bf16.msra.mxu0 %v558
    %3152 = vmatprep.subr.bf16.mxu0 %v567
    %3153 = vmatpush1.bf16.msra.mxu0 %v566
    %3154 = vmatprep.subr.bf16.mxu0 %v575
    %3155 = vmatpush1.bf16.msra.mxu0 %v574
    %3156 = vmatprep.subr.bf16.mxu0 %v583
    %3157 = vmatpush1.bf16.msra.mxu0 %v582
    %3158 = vmatprep.subr.bf16.mxu0 %v591
    %3159 = vmatpush1.bf16.msra.mxu0 %v590
    %3160 = vmatprep.subr.bf16.mxu0 %v599
    %3161 = vmatpush1.bf16.msra.mxu0 %v598
    %3162 = vmatprep.subr.bf16.mxu0 %v607
    %3163 = vmatpush1.bf16.msra.mxu0 %v606
    %3164 = vmatprep.subr.bf16.mxu0 %v615
    %3165 = vmatpush1.bf16.msra.mxu0 %v614
    %3166 = vmatprep.subr.bf16.mxu0 %v623
    %3167 = vmatpush1.bf16.msra.mxu0 %v622
    %3168 = vmatprep.subr.bf16.mxu0 %v631
    %3169 = vmatpush1.bf16.msra.mxu0 %v630
    %3170 = vmatprep.subr.bf16.mxu0 %v639
    %3171 = vmatpush1.bf16.msra.mxu0 %v638
    %3172 = vmatprep.subr.bf16.mxu0 %v647
    %3173 = vmatpush1.bf16.msra.mxu0 %v646
    %3174 = vmatprep.subr.bf16.mxu0 %v655
    %3175 = vmatpush1.bf16.msra.mxu0 %v654
    %3176 = vmatprep.subr.bf16.mxu0 %v663
    %3177 = vmatpush1.bf16.msra.mxu0 %v662
    %3178 = vmatprep.subr.bf16.mxu0 %v671
    %3179 = vmatpush1.bf16.msra.mxu0 %v670
    %3180 = vmatprep.subr.bf16.mxu0 %v679
    %3181 = vmatpush1.bf16.msra.mxu0 %v678
    %3182 = vmatprep.mubr.bf16.mxu0 %v3147
    %3183 = vmatmul.mubr.bf16.gmra.mrb[0].mxu0 %v3146
    %v3184 = vpop.f32.mrb[0].mxu0
    %v3185 = vadd.f32 0.0, %v3184
    %v3186 = vpop.f32.mrb[0].mxu0
    %v3187 = vadd.f32 0.0, %v3186
    %v3188 = vpop.f32.mrb[0].mxu0
    %v3189 = vpop.f32.mrb[0].mxu0
    %3190 = vdwg.mxu0
    %3191 = vmatprep.subr.bf16.mxu0 %v561
    %3192 = vmatpush1.bf16.msra.mxu0 %v560
    %3193 = vmatprep.subr.bf16.mxu0 %v569
    %3194 = vmatpush1.bf16.msra.mxu0 %v568
    %3195 = vmatprep.subr.bf16.mxu0 %v577
    %3196 = vmatpush1.bf16.msra.mxu0 %v576
    %3197 = vmatprep.subr.bf16.mxu0 %v585
    %3198 = vmatpush1.bf16.msra.mxu0 %v584
    %3199 = vmatprep.subr.bf16.mxu0 %v593
    %3200 = vmatpush1.bf16.msra.mxu0 %v592
    %3201 = vmatprep.subr.bf16.mxu0 %v601
    %3202 = vmatpush1.bf16.msra.mxu0 %v600
    %3203 = vmatprep.subr.bf16.mxu0 %v609
    %3204 = vmatpush1.bf16.msra.mxu0 %v608
    %3205 = vmatprep.subr.bf16.mxu0 %v617
    %3206 = vmatpush1.bf16.msra.mxu0 %v616
    %3207 = vmatprep.subr.bf16.mxu0 %v625
    %3208 = vmatpush1.bf16.msra.mxu0 %v624
    %3209 = vmatprep.subr.bf16.mxu0 %v633
    %3210 = vmatpush1.bf16.msra.mxu0 %v632
    %3211 = vmatprep.subr.bf16.mxu0 %v641
    %3212 = vmatpush1.bf16.msra.mxu0 %v640
    %3213 = vmatprep.subr.bf16.mxu0 %v649
    %3214 = vmatpush1.bf16.msra.mxu0 %v648
    %3215 = vmatprep.subr.bf16.mxu0 %v657
    %3216 = vmatpush1.bf16.msra.mxu0 %v656
    %3217 = vmatprep.subr.bf16.mxu0 %v665
    %3218 = vmatpush1.bf16.msra.mxu0 %v664
    %3219 = vmatprep.subr.bf16.mxu0 %v673
    %3220 = vmatpush1.bf16.msra.mxu0 %v672
    %3221 = vmatprep.subr.bf16.mxu0 %v681
    %3222 = vmatpush1.bf16.msra.mxu0 %v680
    %3223 = vmatprep.mubr.bf16.mxu0 %v3147
    %3224 = vmatmul.mubr.bf16.gmra.mrb[0].mxu0 %v3146
    %v3225 = vpop.f32.mrb[0].mxu0
    %v3226 = vadd.f32 0.0, %v3225
    %v3227 = vpop.f32.mrb[0].mxu0
    %v3228 = vadd.f32 0.0, %v3227
    %v3229 = vpop.f32.mrb[0].mxu0
    %v3230 = vpop.f32.mrb[0].mxu0
    %3231 = vdwg.mxu0
    %3232 = vmatprep.subr.bf16.mxu0 %v563
    %3233 = vmatpush1.bf16.msra.mxu0 %v562
    %3234 = vmatprep.subr.bf16.mxu0 %v571
    %3235 = vmatpush1.bf16.msra.mxu0 %v570
    %3236 = vmatprep.subr.bf16.mxu0 %v579
    %3237 = vmatpush1.bf16.msra.mxu0 %v578
    %3238 = vmatprep.subr.bf16.mxu0 %v587
    %3239 = vmatpush1.bf16.msra.mxu0 %v586
    %3240 = vmatprep.subr.bf16.mxu0 %v595
    %3241 = vmatpush1.bf16.msra.mxu0 %v594
    %3242 = vmatprep.subr.bf16.mxu0 %v603
    %3243 = vmatpush1.bf16.msra.mxu0 %v602
    %3244 = vmatprep.subr.bf16.mxu0 %v611
    %3245 = vmatpush1.bf16.msra.mxu0 %v610
    %3246 = vmatprep.subr.bf16.mxu0 %v619
    %3247 = vmatpush1.bf16.msra.mxu0 %v618
    %3248 = vmatprep.subr.bf16.mxu0 %v627
    %3249 = vmatpush1.bf16.msra.mxu0 %v626
    %3250 = vmatprep.subr.bf16.mxu0 %v635
    %3251 = vmatpush1.bf16.msra.mxu0 %v634
    %3252 = vmatprep.subr.bf16.mxu0 %v643
    %3253 = vmatpush1.bf16.msra.mxu0 %v642
    %3254 = vmatprep.subr.bf16.mxu0 %v651
    %3255 = vmatpush1.bf16.msra.mxu0 %v650
    %3256 = vmatprep.subr.bf16.mxu0 %v659
    %3257 = vmatpush1.bf16.msra.mxu0 %v658
    %3258 = vmatprep.subr.bf16.mxu0 %v667
    %3259 = vmatpush1.bf16.msra.mxu0 %v666
    %3260 = vmatprep.subr.bf16.mxu0 %v675
    %3261 = vmatpush1.bf16.msra.mxu0 %v674
    %3262 = vmatprep.subr.bf16.mxu0 %v683
    %3263 = vmatpush1.bf16.msra.mxu0 %v682
    %3264 = vmatprep.mubr.bf16.mxu0 %v3147
    %3265 = vmatmul.mubr.bf16.gmra.mrb[0].mxu0 %v3146
    %v3266 = vpop.f32.mrb[0].mxu0
    %v3267 = vadd.f32 0.0, %v3266
    %v3268 = vpop.f32.mrb[0].mxu0
    %v3269 = vadd.f32 0.0, %v3268
    %v3270 = vpop.f32.mrb[0].mxu0
    %v3271 = vpop.f32.mrb[0].mxu0
    %3272 = vdwg.mxu0
    %3273 = vmatprep.subr.bf16.mxu0 %v565
    %3274 = vmatpush1.bf16.msra.mxu0 %v564
    %3275 = vmatprep.subr.bf16.mxu0 %v573
    %3276 = vmatpush1.bf16.msra.mxu0 %v572
    %3277 = vmatprep.subr.bf16.mxu0 %v581
    %3278 = vmatpush1.bf16.msra.mxu0 %v580
    %3279 = vmatprep.subr.bf16.mxu0 %v589
    %3280 = vmatpush1.bf16.msra.mxu0 %v588
    %3281 = vmatprep.subr.bf16.mxu0 %v597
    %3282 = vmatpush1.bf16.msra.mxu0 %v596
    %3283 = vmatprep.subr.bf16.mxu0 %v605
    %3284 = vmatpush1.bf16.msra.mxu0 %v604
    %3285 = vmatprep.subr.bf16.mxu0 %v613
    %3286 = vmatpush1.bf16.msra.mxu0 %v612
    %3287 = vmatprep.subr.bf16.mxu0 %v621
    %3288 = vmatpush1.bf16.msra.mxu0 %v620
    %3289 = vmatprep.subr.bf16.mxu0 %v629
    %3290 = vmatpush1.bf16.msra.mxu0 %v628
    %3291 = vmatprep.subr.bf16.mxu0 %v637
    %3292 = vmatpush1.bf16.msra.mxu0 %v636
    %3293 = vmatprep.subr.bf16.mxu0 %v645
    %3294 = vmatpush1.bf16.msra.mxu0 %v644
    %3295 = vmatprep.subr.bf16.mxu0 %v653
    %3296 = vmatpush1.bf16.msra.mxu0 %v652
    %3297 = vmatprep.subr.bf16.mxu0 %v661
    %3298 = vmatpush1.bf16.msra.mxu0 %v660
    %3299 = vmatprep.subr.bf16.mxu0 %v669
    %3300 = vmatpush1.bf16.msra.mxu0 %v668
    %3301 = vmatprep.subr.bf16.mxu0 %v677
    %3302 = vmatpush1.bf16.msra.mxu0 %v676
    %3303 = vmatprep.subr.bf16.mxu0 %v685
    %3304 = vmatpush1.bf16.msra.mxu0 %v684
    %3305 = vmatprep.mubr.bf16.mxu0 %v3147
    %3306 = vmatmul.mubr.bf16.gmra.mrb[0].mxu0 %v3146
    %v3307 = vpop.f32.mrb[0].mxu0
    %v3308 = vadd.f32 0.0, %v3307
    %v3309 = vpop.f32.mrb[0].mxu0
    %v3310 = vadd.f32 0.0, %v3309
    %v3311 = vpop.f32.mrb[0].mxu0
    %v3312 = vpop.f32.mrb[0].mxu0
    %3313 = vdwg.mxu0
    %v3322 = vcombine.low %v3185, %v3187
    %v3323 = vcombine.low %v3226, %v3228
    %v3324 = vcombine.low %v3267, %v3269
    %v3325 = vcombine.low %v3308, %v3310
    %v3327 = vunpack.c.l.s4 1966171168
    %v3328 = vunpack.c.0.s8 %v3327
    %v3329 = vlaneseq
    %v3330 = vshrl.u32 %v3329, 7
    %v3331 = vsub.s32 %v3328, %v3330
    %v3332 = vrot.slane %v3322, %v3331
    %v3334 = vunpack.c.l.s4 1966171168
    %v3335 = vunpack.c.0.s8 %v3334
    %v3336 = vlaneseq
    %v3337 = vshrl.u32 %v3336, 7
    %v3338 = vsub.s32 %v3335, %v3337
    %v3339 = vrot.slane %v3323, %v3338
    %v3341 = vunpack.c.l.s4 1966171168
    %v3342 = vunpack.c.0.s8 %v3341
    %v3343 = vlaneseq
    %v3344 = vshrl.u32 %v3343, 7
    %v3345 = vsub.s32 %v3342, %v3344
    %v3346 = vrot.slane %v3324, %v3345
    %v3348 = vunpack.c.l.s4 1966171168
    %v3349 = vunpack.c.0.s8 %v3348
    %v3350 = vlaneseq
    %v3351 = vshrl.u32 %v3350, 7
    %v3352 = vsub.s32 %v3349, %v3351
    %v3353 = vrot.slane %v3325, %v3352
    %v3354 = vcombine.low %v3332, %v3339
    %v3355 = vcombine.high %v3332, %v3339
    %v3356 = vcombine.low %v3346, %v3353
    %v3357 = vcombine.high %v3346, %v3353
    %v3359 = vunpack.c.l.s4 1966171168
    %v3360 = vunpack.c.0.s8 %v3359
    %v3361 = vlaneseq
    %v3362 = vshrl.u32 %v3361, 7
    %v3363 = vsub.s32 %v3360, %v3362
    %v3364 = vrot.slane %v3354, %v3363
    %v3366 = vunpack.c.l.s4 1966171168
    %v3367 = vunpack.c.0.s8 %v3366
    %v3368 = vlaneseq
    %v3369 = vshrl.u32 %v3368, 7
    %v3370 = vsub.s32 %v3367, %v3369
    %v3371 = vrot.slane %v3355, %v3370
    %v3373 = vunpack.c.l.s4 1966171168
    %v3374 = vunpack.c.0.s8 %v3373
    %v3375 = vlaneseq
    %v3376 = vshrl.u32 %v3375, 7
    %v3377 = vsub.s32 %v3374, %v3376
    %v3378 = vrot.slane %v3356, %v3377
    %v3380 = vunpack.c.l.s4 1966171168
    %v3381 = vunpack.c.0.s8 %v3380
    %v3382 = vlaneseq
    %v3383 = vshrl.u32 %v3382, 7
    %v3384 = vsub.s32 %v3381, %v3383
    %v3385 = vrot.slane %v3357, %v3384
    %v3386 = vcombine.low %v3364, %v3378
    %v3387 = vcombine.low %v3371, %v3385
    %v3390 = vadd.f32 %v3103, %v3386
    %v3391 = vadd.f32 %v3107, %v3387
    %v3392 = vxor.u32 %v3390, 2147483648
    %v3393 = vxor.u32 %v3391, 2147483648
    %v3394 = vmul.f32 %v3392, 1.442695
    %v3395 = vpow.pop %v3394
    %v3396 = vmul.f32 %v3393, 1.442695
    %v3397 = vpow.pop %v3396
    %v3398 = vadd.f32 %v3395, 1.0
    %v3399 = vadd.f32 %v3397, 1.0
    %v3400 = vrcp.pop %v3398
    %v3401 = vmul.f32 1.0, %v3400
    %v3402 = vrcp.pop %v3399
    %v3403 = vmul.f32 1.0, %v3402
    %v3406 = vrot.slane %v3390, 6
    %v3407 = vrot.slane %v3391, 6
    %v3410 = vtanh.pop %v3406
    %v3411 = vtanh.pop %v3407
    %v3414 = vrot.slane %v3401, 2
    %v3415 = vrot.slane %v3403, 2
    %v3418 = vmul.f32 %v3414, %v3090
    %v3419 = vmul.f32 %v3415, %v3091
    %v3420 = vmul.f32 %v3401, %v3410
    %v3421 = vmul.f32 %v3403, %v3411
    %v3422 = vadd.f32 %v3418, %v3420
    %v3423 = vadd.f32 %v3419, %v3421
    %v3424 = vtanh.pop %v3422
    %v3425 = vtanh.pop %v3423
    %v3426 = vrot.slane %v3401, 4
    %v3427 = vrot.slane %v3403, 4
    %v3430 = vmul.f32 %v3426, %v3424
    %v3431 = vmul.f32 %v3427, %v3425
    %v3434 = vcombine.low %v3430, %v3431
    %v3436 = vunpack.c.l.s4 1935823168
    %v3437 = vunpack.c.0.s8 %v3436
    %v3438 = vlaneseq
    %v3439 = vshrl.u32 %v3438, 7
    %v3440 = vsub.s32 %v3437, %v3439
    %v3441 = vrot.slane %v3434, %v3440
    %3443 = vst [vmem:[#allocation2] sm:$0xf] %v3441
    %v3446 = vcombine.low %v3422, %v3423
    %v3448 = vunpack.c.l.s4 1935823168
    %v3449 = vunpack.c.0.s8 %v3448
    %v3450 = vlaneseq
    %v3451 = vshrl.u32 %v3450, 7
    %v3452 = vsub.s32 %v3449, %v3451
    %v3453 = vrot.slane %v3446, %v3452
    %3455 = vst [vmem:[#allocation3] sm:$0xf] %v3453
    // Predicated region
    $region22: #{lstm_classifier_forward.3} parent=1 // pred_check
      %p3456 = pneg %p18
    $region23: #{lstm_classifier_forward.3} parent=1 // pred_check_branch
      %3458 = sbr.rel (%p3456) target = $region25
    $region24: #{lstm_classifier_forward.3} parent=1 // pred_region
      %v3459 = vld [vmem:[%s2] sm:$0xff]
      %v3460 = vld [vmem:[%s2 + $0x8] sm:$0xff]
      %v3461 = vld [vmem:[%s2 + $0x10] sm:$0xff]
      %v3462 = vld [vmem:[%s2 + $0x18] sm:$0xff]
      %v3463 = vld [vmem:[%s2 + $0x20] sm:$0xff]
      %v3464 = vld [vmem:[%s2 + $0x28] sm:$0xff]
      %v3465 = vld [vmem:[%s2 + $0x30] sm:$0xff]
      %v3466 = vld [vmem:[%s2 + $0x38] sm:$0xff]
      %v3467 = vld [vmem:[%s2 + $0x40] sm:$0xff]
      %v3468 = vld [vmem:[%s2 + $0x48] sm:$0xff]
      %v3469 = vld [vmem:[%s2 + $0x50] sm:$0xff]
      %v3470 = vld [vmem:[%s2 + $0x58] sm:$0xff]
      %v3471 = vld [vmem:[%s2 + $0x60] sm:$0xff]
      %v3472 = vld [vmem:[%s2 + $0x68] sm:$0xff]
      %v3473 = vld [vmem:[%s2 + $0x70] sm:$0xff]
      %v3474 = vld [vmem:[%s2 + $0x78] sm:$0xff]
      %v3475 = vld [vmem:[%s2 + $0x80] sm:$0xff]
      %v3476 = vld [vmem:[%s2 + $0x88] sm:$0xff]
      %v3477 = vld [vmem:[%s2 + $0x90] sm:$0xff]
      %v3478 = vld [vmem:[%s2 + $0x98] sm:$0xff]
      %v3479 = vld [vmem:[%s2 + $0xa0] sm:$0xff]
      %v3480 = vld [vmem:[%s2 + $0xa8] sm:$0xff]
      %v3481 = vld [vmem:[%s2 + $0xb0] sm:$0xff]
      %v3482 = vld [vmem:[%s2 + $0xb8] sm:$0xff]
      %v3483 = vld [vmem:[%s2 + $0xc0] sm:$0xff]
      %v3484 = vld [vmem:[%s2 + $0xc8] sm:$0xff]
      %v3485 = vld [vmem:[%s2 + $0xd0] sm:$0xff]
      %v3486 = vld [vmem:[%s2 + $0xd8] sm:$0xff]
      %v3487 = vld [vmem:[%s2 + $0xe0] sm:$0xff]
      %v3488 = vld [vmem:[%s2 + $0xe8] sm:$0xff]
      %v3489 = vld [vmem:[%s2 + $0xf0] sm:$0xff]
      %v3490 = vld [vmem:[%s2 + $0xf8] sm:$0xff]
      %v3491 = vld [vmem:[%s3] sm:$0x1]
      %v3493 = vlaneseq
      %v3494 = vshrl.u32 %v3493, 7
      %v3495 = vsub.s32 0, %v3494
      %v3496 = vrot.slane %v3491, %v3495
      %v3499 = vunpack.c.l.s4 1966171168
      %v3500 = vunpack.c.0.s8 %v3499
      %v3501 = vlaneseq
      %v3502 = vshrl.u32 %v3501, 7
      %v3503 = vsub.s32 %v3500, %v3502
      %v3504 = vrot.slane %v3434, %v3503
      %v3505 = vcombine.high %v3504, %v3504
      %v3507 = vunpack.c.l.s4 1966171168
      %v3508 = vunpack.c.0.s8 %v3507
      %v3509 = vlaneseq
      %v3510 = vshrl.u32 %v3509, 7
      %v3511 = vsub.s32 %v3508, %v3510
      %v3512 = vrot.slane %v3504, %v3511
      %v3514 = vunpack.c.l.s4 1966171168
      %v3515 = vunpack.c.0.s8 %v3514
      %v3516 = vlaneseq
      %v3517 = vshrl.u32 %v3516, 7
      %v3518 = vsub.s32 %v3515, %v3517
      %v3519 = vrot.slane %v3505, %v3518
      %3522 = vmatprep.subr.mxu0 0.0
      %3523 = vmatpush1.msra.mxu0 %v3459
      %3524 = vmatprep.subr.mxu0 0.0
      %3525 = vmatpush1.msra.mxu0 %v3460
      %3526 = vmatprep.subr.mxu0 0.0
      %3527 = vmatpush1.msra.mxu0 %v3461
      %3528 = vmatprep.subr.mxu0 0.0
      %3529 = vmatpush1.msra.mxu0 %v3462
      %3530 = vmatprep.subr.mxu0 0.0
      %3531 = vmatpush1.msra.mxu0 %v3463
      %3532 = vmatprep.subr.mxu0 0.0
      %3533 = vmatpush1.msra.mxu0 %v3464
      %3534 = vmatprep.subr.mxu0 0.0
      %3535 = vmatpush1.msra.mxu0 %v3465
      %3536 = vmatprep.subr.mxu0 0.0
      %3537 = vmatpush1.msra.mxu0 %v3466
      %3538 = vmatprep.subr.mxu0 0.0
      %3539 = vmatpush1.msra.mxu0 %v3467
      %3540 = vmatprep.subr.mxu0 0.0
      %3541 = vmatpush1.msra.mxu0 %v3468
      %3542 = vmatprep.subr.mxu0 0.0
      %3543 = vmatpush1.msra.mxu0 %v3469
      %3544 = vmatprep.subr.mxu0 0.0
      %3545 = vmatpush1.msra.mxu0 %v3470
      %3546 = vmatprep.subr.mxu0 0.0
      %3547 = vmatpush1.msra.mxu0 %v3471
      %3548 = vmatprep.subr.mxu0 0.0
      %3549 = vmatpush1.msra.mxu0 %v3472
      %3550 = vmatprep.subr.mxu0 0.0
      %3551 = vmatpush1.msra.mxu0 %v3473
      %3552 = vmatprep.subr.mxu0 0.0
      %3553 = vmatpush1.msra.mxu0 %v3474
      %3554 = vmatprep.subr.mxu0 0.0
      %3555 = vmatpush1.msra.mxu0 %v3475
      %3556 = vmatprep.subr.mxu0 0.0
      %3557 = vmatpush1.msra.mxu0 %v3476
      %3558 = vmatprep.subr.mxu0 0.0
      %3559 = vmatpush1.msra.mxu0 %v3477
      %3560 = vmatprep.subr.mxu0 0.0
      %3561 = vmatpush1.msra.mxu0 %v3478
      %3562 = vmatprep.subr.mxu0 0.0
      %3563 = vmatpush1.msra.mxu0 %v3479
      %3564 = vmatprep.subr.mxu0 0.0
      %3565 = vmatpush1.msra.mxu0 %v3480
      %3566 = vmatprep.subr.mxu0 0.0
      %3567 = vmatpush1.msra.mxu0 %v3481
      %3568 = vmatprep.subr.mxu0 0.0
      %3569 = vmatpush1.msra.mxu0 %v3482
      %3570 = vmatprep.subr.mxu0 0.0
      %3571 = vmatpush1.msra.mxu0 %v3483
      %3572 = vmatprep.subr.mxu0 0.0
      %3573 = vmatpush1.msra.mxu0 %v3484
      %3574 = vmatprep.subr.mxu0 0.0
      %3575 = vmatpush1.msra.mxu0 %v3485
      %3576 = vmatprep.subr.mxu0 0.0
      %3577 = vmatpush1.msra.mxu0 %v3486
      %3578 = vmatprep.subr.mxu0 0.0
      %3579 = vmatpush1.msra.mxu0 %v3487
      %3580 = vmatprep.subr.mxu0 0.0
      %3581 = vmatpush1.msra.mxu0 %v3488
      %3582 = vmatprep.subr.mxu0 0.0
      %3583 = vmatpush1.msra.mxu0 %v3489
      %3584 = vmatprep.subr.mxu0 0.0
      %3585 = vmatpush1.msra.mxu0 %v3490
      %3586 = vmatprep.mubr.f32.mxu0 %v3519
      %3587 = vmatmul.mubr.f32.gmra.mrb[0].mxu0 %v3512
      %v3588 = vpop.f32.mrb[0].mxu0
      %v3589 = vadd.f32 %v3496, %v3588
      %v3590 = vpop.f32.mrb[0].mxu0
      %3591 = vdwg.mxu0
      %3592 = vst [vmem:[#allocation4] sm:$0x3] %v3589
    $region25: #{lstm_classifier_forward.3} parent=1 // pred_fallthru
      _
    // Predicated region
    $region26: #{lstm_classifier_forward.3} parent=1 // pred_check
      _
    $region27: #{lstm_classifier_forward.3} parent=1 // pred_check_branch
      %3594 = sbr.rel (0) target = $region29
    $region28: #{lstm_classifier_forward.3} parent=1 // pred_region
      %s3596 = ssub.s32 32, 32
      %3597 = vsyncadd [#allocation5], %s3596
      %s3599 = sshll.u32 [#allocation4], 4
      %s3600 = int_to_ptr.vmem [resolvable:$true] %s3599
      %3602 = dma.vmem_to_hbm [thread:$0]  %s3600, 32, %s4, [#allocation5]
    $region29: #{lstm_classifier_forward.3} parent=1 // pred_fallthru
      _
    // Predicated region
    $region30: #{lstm_classifier_forward.3} parent=1 // pred_check
      _
    $region31: #{lstm_classifier_forward.3} parent=1 // pred_check_branch
      %3604 = sbr.rel (0) target = $region33
    $region32: #{lstm_classifier_forward.3} parent=1 // pred_region
      %3605 = dma.done [#allocation5], 32
    $region33: #{lstm_classifier_forward.3} parent=1 // pred_fallthru
      _
    %3606 = vsyncpa [#allocation5], 1

</llo_original>
